<compile_context>
chip_gen: v5e
topology: v5e:2x2
jax: 0.10.0
libtpu: 0.0.40
codegen_flags: <defaults>
</compile_context>

<pallas_src>
import functools
import math

import numpy as np
import jax
import jax.numpy as jnp
from jax import lax
from jax.experimental import pallas as pl
from jax.experimental.pallas import tpu as pltpu  # noqa: F401  (imported per spec)


# ---------------------------------------------------------------------------
# fused kernel: whole batch in one invocation
# ---------------------------------------------------------------------------
def _net_fwd_kernel(tok_ref, h0_ref, wslab_ref, fslab_ref, out_ref, *,
                    B, L0, L1, dm, D, n_heads, num_words, U0, U1,
                    woffs, foffs):
    f32, bf16 = jnp.float32, jnp.bfloat16
    wcache, fcache = {}, {}

    def W(name):                       # bf16 matmul weight (loaded once)
        if name not in wcache:
            off, r, c = woffs[name]
            wcache[name] = wslab_ref[off:off + r, 0:c]
        return wcache[name]

    def F(name):                       # f32 bias / norm / count table
        if name not in fcache:
            off, r, c = foffs[name]
            fcache[name] = fslab_ref[off:off + r, 0:c]
        return fcache[name]

    def mm(a, b):                      # bf16 MXU matmul, f32 accumulate
        return jnp.dot(a.astype(bf16), b.astype(bf16),
                       preferred_element_type=f32)

    def mm_nt(a, b):                   # a @ b.T  (flash-attention pattern)
        return lax.dot_general(a.astype(bf16), b.astype(bf16),
                               (((1,), (1,)), ((), ())),
                               preferred_element_type=f32)

    def layer_norm(v, g, beta):
        mu = jnp.mean(v, axis=-1, keepdims=True)
        var = jnp.mean(jnp.square(v - mu), axis=-1, keepdims=True)
        return (v - mu) * lax.rsqrt(var + 1e-5) * g + beta

    def gelu(v):
        # tanh-approx GELU (EUP tanh); exact-erf F.gelu differs by <~1e-3.
        return 0.5 * v * (1.0 + jnp.tanh(0.7978845608028654 *
                                         (v + 0.044715 * v * v * v)))

    def elu(v):
        return jnp.where(v > 0.0, v, jnp.exp(jnp.minimum(v, 0.0)) - 1.0)

    def roll_rows(v, shift):
        # circular row shift as slice+concat on a value (no VMEM staging)
        n = v.shape[0]
        s = shift % n
        if s == 0:
            return v
        return jnp.concatenate([v[n - s:n, :], v[0:n - s, :]], axis=0)

    # -- one Informer EncoderLayer (ProbAttention + gelu FFN), x: (L, dm) ----
    def encoder_layer(x, L, U, pre):
        Lh = L // 2
        scale = 1.0 / math.sqrt(D)
        qkv = mm(x, W(pre + "wqkv")) + F(pre + "bqkv")           # (L, 3*dm)
        cnt = F(pre + "cnt")          # sampling multiplicities, (L, L)
        eye = (lax.broadcasted_iota(jnp.int32, (L, L), 0)
               == lax.broadcasted_iota(jnp.int32, (L, L), 1)).astype(f32)
        q_idx = lax.broadcasted_iota(jnp.int32, (L, L), 0)
        p_idx = lax.broadcasted_iota(jnp.int32, (L, L), 1)

        head_blocks = []
        for h in range(n_heads):      # n_heads == 2, statically unrolled
            # raw .view(B,H,L,-1) reinterpretation: head h <-> rows h*Lh..,
            # even positions in the left column half, odd ones in the right.
            chunk = qkv[h * Lh:(h + 1) * Lh, :]                  # (Lh, 3*dm)
            Qc = jnp.concatenate([chunk[:, 0:D], chunk[:, D:dm]], axis=0)
            Kc = jnp.concatenate([chunk[:, dm:dm + D],
                                  chunk[:, dm + D:2 * dm]], axis=0)
            Vc = jnp.concatenate([chunk[:, 2 * dm:2 * dm + D],
                                  chunk[:, 2 * dm + D:3 * dm]], axis=0)
            # queries / keys / values all in even-then-odd position order
            s = mm_nt(Qc, Kc)                                    # (L, L)

            # ProbSparse measure M = max(sampled QK) - sum(sampled QK)/L
            ssum = jnp.sum(s * cnt, axis=1, keepdims=True)
            smax = jnp.max(jnp.where(cnt > 0.0, s, -jnp.inf),
                           axis=1, keepdims=True)
            m_col = smax - ssum * (1.0 / float(L))               # (L, 1)
            # exact (L,1)->(1,L) transpose: one multiply + sublane reduce
            m_row = jnp.sum(eye * m_col, axis=0, keepdims=True)  # (1, L)
            # top-U queries by rank (index tie-break, self-comparison excluded)
            beats = ((m_row > m_col) & (p_idx != q_idx)) | \
                    ((m_row == m_col) & (p_idx < q_idx))
            rank = jnp.sum(beats.astype(f32), axis=1, keepdims=True)
            sel = rank < float(U)                                # (L, 1)

            # softmax over all keys; non-selected queries get V.sum(dim=-2)
            v_sum = jnp.sum(Vc, axis=0, keepdims=True)           # (1, D)
            sc = s * scale
            mx = jnp.max(sc, axis=1, keepdims=True)
            e = jnp.exp(sc - mx)
            attn = e / jnp.sum(e, axis=1, keepdims=True)
            ctx = jnp.where(sel, mm(attn, Vc), v_sum)            # (L, D)
            # inverse of the raw .view(B, L, -1): [even | odd] along lanes
            head_blocks.append(
                jnp.concatenate([ctx[0:Lh, :], ctx[Lh:L, :]], axis=1))

        attn_out = jnp.concatenate(head_blocks, axis=0)          # (L, dm)
        x = x + mm(attn_out, W(pre + "wo")) + F(pre + "bo")      # out proj+res
        x = layer_norm(x, F(pre + "ln1g"), F(pre + "ln1b"))      # norm1
        y = gelu(mm(x, W(pre + "w1")) + F(pre + "b1"))           # conv1 (k=1)
        y = mm(y, W(pre + "w2")) + F(pre + "b2")                 # conv2 (k=1)
        return layer_norm(x + y, F(pre + "ln2g"), F(pre + "ln2b"))

    # -- ConvLayer: circular Conv1d(k=3,p=2) + BN(eval) + ELU + MaxPool(3,2,1)
    def conv_layer(x, L):
        lc, pp = L + 2, L // 2 + 1
        y = (mm(roll_rows(x, 2), W("cw0")) + mm(roll_rows(x, 1), W("cw1"))
             + mm(x, W("cw2")) + F("cb"))
        y = elu(y * F("bns") + F("bnb"))
        # circular-pad conv rows L, L+1 duplicate rows 0, 1
        z = jnp.concatenate([y, y[0:2, :]], axis=0)              # (lc, dm)
        m3 = jnp.maximum(z, jnp.maximum(roll_rows(z, 1), roll_rows(z, -1)))
        # pooled[j] = m3[2j]; wrap-around rows already equal the -inf-padded
        # edge values because z[lc-1]==z[1] and z[0]==z[lc-2].
        gsel = (lax.broadcasted_iota(jnp.int32, (pp, lc), 1)
                == 2 * lax.broadcasted_iota(jnp.int32, (pp, lc), 0)).astype(f32)
        return jnp.dot(gsel, m3, preferred_element_type=f32)     # (pp, dm)

    # ---- per-sample embedding + encoder stack (B small, unrolled) ----------
    xs = []
    for b in range(B):
        tok = tok_ref[b]                                         # (L0, 1) i32
        onehot = (lax.broadcasted_iota(jnp.int32, (L0, num_words), 1)
                  == tok).astype(f32)
        x = mm(onehot, W("emb"))                                 # (L0, dm)
        x = encoder_layer(x, L0, U0, "l0_")
        x = conv_layer(x, L0)                                    # (L1, dm)
        x = encoder_layer(x, L1, U1, "l1_")
        x = layer_norm(x, F("norm_g"), F("norm_b"))              # Encoder.norm
        xs.append(x)

    # ---- batched tanh-RNN (input projection hoisted out of the recurrence) -
    whh = W("rnn_whh")
    xw = [mm(xs[b], W("rnn_wih")) + F("rnn_b") for b in range(B)]  # (L1, hid)
    h = h0_ref[...]                                              # (B, hidden)
    # TODO(synk): Whh could be latched in the MXU via pltpu.matmul_push_rhs /
    # matmul_acc_lhs; kept as plain jnp.dot for portability.
    for t in range(L1):
        x_t = jnp.concatenate([xw[b][t:t + 1, :] for b in range(B)], axis=0)
        h = jnp.tanh(x_t + mm(h, whh))

    # ---- Linear + LogSoftmax epilogue ---------------------------------------
    logits = mm(h, W("fc_w")) + F("fc_b")                        # (B, out_dim)
    mx = jnp.max(logits, axis=-1, keepdims=True)
    lse = mx + jnp.log(jnp.sum(jnp.exp(logits - mx), axis=-1, keepdims=True))
    out_ref[...] = logits - lse


# ---------------------------------------------------------------------------
# host-side helpers: sampling counts + weight-slab packing
# ---------------------------------------------------------------------------
def _sample_counts(seed, L, u):
    # cnt[q, k] = how often key k was sampled for query q, so the ProbSparse
    # sampled max/mean become masked reductions over the full Q @ K^T.
    # TODO(synk): torch.randint sampling stream replaced by deterministic
    # jax.random; selections will not bit-match the PyTorch model.
    idx = jax.random.randint(jax.random.PRNGKey(seed), (L, u), 0, L)
    cnt = jnp.sum((idx[:, :, None] == jnp.arange(L)[None, None, :])
                  .astype(jnp.float32), axis=1)                  # (L, L)
    perm = np.concatenate([np.arange(0, L, 2), np.arange(1, L, 2)])
    return np.asarray(cnt)[perm][:, perm]                        # even-then-odd


def _pack_slab(entries, dtype, row_align, width=128):
    """Pack small 1/2-D arrays into one (rows, width) slab; returns offsets."""
    offs, blocks, rows = {}, [], 0
    for name, arr in entries:
        a = np.asarray(arr, dtype=np.float32)
        if a.ndim == 1:
            a = a.reshape(1, -1)
        r, c = a.shape
        assert c <= width, name
        offs[name] = (rows, r, c)
        blocks.append((rows, a))
        rows += ((r + row_align - 1) // row_align) * row_align
    slab = np.zeros((max(rows, row_align), width), np.float32)
    for off, a in blocks:
        slab[off:off + a.shape[0], :a.shape[1]] = a
    return jnp.asarray(slab, dtype=dtype), offs


# ---------------------------------------------------------------------------
# wrapper: parameter packing + single pallas_call
# ---------------------------------------------------------------------------
def net_forward(token_ids, h0, params, *, factor, n_heads):
    assert n_heads == 2, "kernel specializes the raw .view() head split to n_heads=2"
    B, L0 = token_ids.shape
    num_words, dm = params["embedding"].shape
    hidden = params["rnn_whh_t"].shape[0]
    out_dim = params["fc_w_t"].shape[1]
    assert dm % n_heads == 0
    D = dm // n_heads
    assert L0 % 2 == 0, "even lengths keep the .view head split on row chunks"
    L1 = L0 // 2 + 1                      # length after ConvLayer (pool 3/2/1)
    assert L1 % 2 == 0
    U0 = factor * int(math.ceil(math.log(L0)))   # n_top == sample_k (L_Q==L_K)
    U1 = factor * int(math.ceil(math.log(L1)))
    assert U0 <= L0 and U1 <= L1
    assert len(params["layers"]) == 2 and len(params["convs"]) == 1

    cnt0 = _sample_counts(100, L0, U0)
    cnt1 = _sample_counts(101, L1, U1)

    # bf16 slab: every matmul weight; f32 slab: biases / norms / count tables.
    w_entries = [("emb", params["embedding"])]
    f_entries = []
    for li, lp in enumerate(params["layers"]):
        a = lp["attn"]
        pre = f"l{li}_"
        w_entries += [
            (pre + "wqkv", jnp.concatenate([a["wq"], a["wk"], a["wv"]], axis=1)),
            (pre + "wo", a["wo"]),
            (pre + "w1", lp["w1"]),
            (pre + "w2", lp["w2"])]
        f_entries += [
            (pre + "bqkv", jnp.concatenate([a["bq"], a["bk"], a["bv"]])),
            (pre + "bo", a["bo"]),
            (pre + "ln1g", lp["ln1_g"]), (pre + "ln1b", lp["ln1_b"]),
            (pre + "b1", lp["b1"]), (pre + "b2", lp["b2"]),
            (pre + "ln2g", lp["ln2_g"]), (pre + "ln2b", lp["ln2_b"]),
            (pre + "cnt", cnt0 if li == 0 else cnt1)]

    cp = params["convs"][0]
    bn_scale = cp["bn_gamma"] / jnp.sqrt(cp["bn_var"] + 1e-5)
    bn_shift = cp["bn_beta"] - cp["bn_mean"] * bn_scale
    w_entries += [("cw0", cp["conv_w"][:, :, 0].T),
                  ("cw1", cp["conv_w"][:, :, 1].T),
                  ("cw2", cp["conv_w"][:, :, 2].T),
                  ("rnn_wih", params["rnn_wih_t"]),
                  ("rnn_whh", params["rnn_whh_t"]),
                  ("fc_w", params["fc_w_t"])]
    f_entries += [("cb", cp["conv_b"]), ("bns", bn_scale), ("bnb", bn_shift),
                  ("norm_g", params["norm_g"]), ("norm_b", params["norm_b"]),
                  ("rnn_b", params["rnn_b"]), ("fc_b", params["fc_b"])]

    wslab, woffs = _pack_slab(w_entries, jnp.bfloat16, 16)   # bf16 tile = 16 rows
    fslab, foffs = _pack_slab(f_entries, jnp.float32, 8)     # f32 tile  = 8 rows

    tokens3 = token_ids.reshape(B, L0, 1).astype(jnp.int32)
    h0_2d = h0[0].astype(jnp.float32)                        # (B, hidden)

    kernel = functools.partial(
        _net_fwd_kernel, B=B, L0=L0, L1=L1, dm=dm, D=D, n_heads=n_heads,
        num_words=num_words, U0=U0, U1=U1, woffs=woffs, foffs=foffs)

    out = pl.pallas_call(
        kernel,
        out_shape=jax.ShapeDtypeStruct((B, out_dim), jnp.float32),
    )(tokens3, h0_2d, wslab, fslab)
    return out


# ---------------------------------------------------------------------------
# deterministic synthetic parameters (weights stored as (in, out))
# ---------------------------------------------------------------------------
def init_params(key, num_words, d_model, n_heads, d_ff, e_layers, hidden, out_dim):
    keys = iter(jax.random.split(key, 64))

    def w(shape, scale=0.1):
        return jax.random.normal(next(keys), shape, jnp.float32) * scale

    params = {"embedding": w((num_words, d_model), 1.0)}
    layers = []
    for _ in range(e_layers):
        layers.append({
            "attn": {
                "wq": w((d_model, d_model)), "bq": w((d_model,)),
                "wk": w((d_model, d_model)), "bk": w((d_model,)),
                "wv": w((d_model, d_model)), "bv": w((d_model,)),
                "wo": w((d_model, d_model)), "bo": w((d_model,)),
            },
            "ln1_g": jnp.ones((d_model,), jnp.float32),
            "ln1_b": jnp.zeros((d_model,), jnp.float32),
            "ln2_g": jnp.ones((d_model,), jnp.float32),
            "ln2_b": jnp.zeros((d_model,), jnp.float32),
            "w1": w((d_model, d_ff)), "b1": w((d_ff,)),
            "w2": w((d_ff, d_model)), "b2": w((d_model,)),
        })
    params["layers"] = layers
    convs = []
    for _ in range(e_layers - 1):
        convs.append({
            "conv_w": w((d_model, d_model, 3)),
            "conv_b": w((d_model,)),
            "bn_gamma": jnp.ones((d_model,), jnp.float32),
            "bn_beta": jnp.zeros((d_model,), jnp.float32),
            "bn_mean": jnp.zeros((d_model,), jnp.float32),
            "bn_var": jnp.ones((d_model,), jnp.float32),
        })
    params["convs"] = convs
    params["norm_g"] = jnp.ones((d_model,), jnp.float32)
    params["norm_b"] = jnp.zeros((d_model,), jnp.float32)
    params["rnn_wih_t"] = w((d_model, hidden))
    params["rnn_whh_t"] = w((hidden, hidden))
    params["rnn_b"] = w((hidden,))                 # b_ih + b_hh combined
    params["fc_w_t"] = w((hidden, out_dim))
    params["fc_b"] = w((out_dim,))
    return params


# ---------------------------------------------------------------------------
if __name__ == "__main__":
    B, L = 2, 18        # L=18 -> Conv/Pool output length 10 (both even, so the
                        # raw .view() head split stays on whole row chunks)
    num_words = 100
    d_model = 16        # input_size
    n_heads = 2
    d_ff = 32
    e_layers = 2
    factor = 2          # factor*ceil(ln(L)) <= L at both encoder stages
    hidden = 32
    out_dim = 2

    key = jax.random.PRNGKey(0)
    kp, kx = jax.random.split(key)
    params = init_params(kp, num_words, d_model, n_heads, d_ff, e_layers,
                         hidden, out_dim)
    token_ids = jax.random.randint(kx, (B, L), 0, num_words, dtype=jnp.int32)
    h0 = jnp.zeros((1, B, hidden), jnp.float32)    # Net.initHidden()

    out = net_forward(token_ids, h0, params, factor=factor, n_heads=n_heads)
    out = jax.block_until_ready(out)

    assert out.shape == (B, out_dim)
    assert bool(jnp.all(jnp.isfinite(out)))
    print("KERNEL_OK")
</pallas_src>

<mosaic_0001>
module attributes {stable_mosaic.version = 11 : i64} {
  func.func @_net_fwd_kernel(%arg0: memref<2x18x1xi32, #tpu.memory_space<vmem>>, %arg1: memref<2x32xf32, #tpu.memory_space<vmem>>, %arg2: memref<400x128xbf16, #tpu.memory_space<vmem>>, %arg3: memref<224x128xf32, #tpu.memory_space<vmem>>, %arg4: memref<2x2xf32, #tpu.memory_space<vmem>>) attributes {dimension_semantics = [], scalar_prefetch = 0 : i64, scratch_operands = 0 : i64, tpu.core_type = #tpu.core_type<tc>} {
    %c0 = arith.constant 0 : index
    %c0_0 = arith.constant 0 : index
    %c0_1 = arith.constant 0 : index
    %0 = vector.load %arg0[%c0, %c0_0, %c0_1] : memref<2x18x1xi32, #tpu.memory_space<vmem>>, vector<1x18x1xi32>
    %1 = vector.shape_cast %0 : vector<1x18x1xi32> to vector<18x1xi32>
    %2 = tpu.iota {dimensions = array<i32: 1>} : vector<18x100xi32>
    %3 = vector.broadcast %1 : vector<18x1xi32> to vector<18x100xi32>
    %4 = arith.cmpi eq, %2, %3 : vector<18x100xi32>
    %5 = arith.extui %4 : vector<18x100xi1> to vector<18x100xi32>
    %6 = arith.sitofp %5 : vector<18x100xi32> to vector<18x100xf32>
    %c0_2 = arith.constant 0 : index
    %c0_3 = arith.constant 0 : index
    %7 = vector.load %arg2[%c0_2, %c0_3] : memref<400x128xbf16, #tpu.memory_space<vmem>>, vector<100x16xbf16>
    %8 = arith.truncf %6 : vector<18x100xf32> to vector<18x100xbf16>
    %cst = arith.constant dense<0.000000e+00> : vector<18x16xf32>
    %9 = tpu.matmul %8, %7, %cst {dimension_numbers = #tpu.dot_dimension_numbers<[1], [0], [0], [1], [0, 0, 1, 1], [], []>} : vector<18x100xbf16>, vector<100x16xbf16>, vector<18x16xf32> -> vector<18x16xf32>
    %c112 = arith.constant 112 : index
    %c0_4 = arith.constant 0 : index
    %10 = vector.load %arg2[%c112, %c0_4] : memref<400x128xbf16, #tpu.memory_space<vmem>>, vector<16x48xbf16>
    %11 = arith.truncf %9 : vector<18x16xf32> to vector<18x16xbf16>
    %cst_5 = arith.constant dense<0.000000e+00> : vector<18x48xf32>
    %12 = tpu.matmul %11, %10, %cst_5 {dimension_numbers = #tpu.dot_dimension_numbers<[1], [0], [0], [1], [0, 0, 1, 1], [], []>} : vector<18x16xbf16>, vector<16x48xbf16>, vector<18x48xf32> -> vector<18x48xf32>
    %c0_6 = arith.constant 0 : index
    %c0_7 = arith.constant 0 : index
    %13 = vector.load %arg3[%c0_6, %c0_7] : memref<224x128xf32, #tpu.memory_space<vmem>>, vector<1x48xf32>
    %14 = vector.broadcast %13 : vector<1x48xf32> to vector<18x48xf32>
    %15 = arith.addf %12, %14 : vector<18x48xf32>
    %c64 = arith.constant 64 : index
    %c0_8 = arith.constant 0 : index
    %16 = vector.load %arg3[%c64, %c0_8] : memref<224x128xf32, #tpu.memory_space<vmem>>, vector<18x18xf32>
    %17 = tpu.iota {dimensions = array<i32: 0>} : vector<18x18xi32>
    %18 = tpu.iota {dimensions = array<i32: 1>} : vector<18x18xi32>
    %19 = arith.cmpi eq, %17, %18 : vector<18x18xi32>
    %20 = arith.extui %19 : vector<18x18xi1> to vector<18x18xi32>
    %21 = arith.sitofp %20 : vector<18x18xi32> to vector<18x18xf32>
    %22 = tpu.iota {dimensions = array<i32: 0>} : vector<18x18xi32>
    %23 = tpu.iota {dimensions = array<i32: 1>} : vector<18x18xi32>
    %24 = vector.extract_strided_slice %15 {offsets = [0, 0], sizes = [9, 48], strides = [1, 1]} : vector<18x48xf32> to vector<9x48xf32>
    %25 = vector.extract_strided_slice %24 {offsets = [0, 0], sizes = [9, 8], strides = [1, 1]} : vector<9x48xf32> to vector<9x8xf32>
    %26 = vector.extract_strided_slice %24 {offsets = [0, 8], sizes = [9, 8], strides = [1, 1]} : vector<9x48xf32> to vector<9x8xf32>
    %27 = tpu.concatenate %25, %26 in 0 : vector<9x8xf32>, vector<9x8xf32> -> vector<18x8xf32>
    %28 = vector.extract_strided_slice %24 {offsets = [0, 16], sizes = [9, 8], strides = [1, 1]} : vector<9x48xf32> to vector<9x8xf32>
    %29 = vector.extract_strided_slice %24 {offsets = [0, 24], sizes = [9, 8], strides = [1, 1]} : vector<9x48xf32> to vector<9x8xf32>
    %30 = tpu.concatenate %28, %29 in 0 : vector<9x8xf32>, vector<9x8xf32> -> vector<18x8xf32>
    %31 = vector.extract_strided_slice %24 {offsets = [0, 32], sizes = [9, 8], strides = [1, 1]} : vector<9x48xf32> to vector<9x8xf32>
    %32 = vector.extract_strided_slice %24 {offsets = [0, 40], sizes = [9, 8], strides = [1, 1]} : vector<9x48xf32> to vector<9x8xf32>
    %33 = tpu.concatenate %31, %32 in 0 : vector<9x8xf32>, vector<9x8xf32> -> vector<18x8xf32>
    %34 = arith.truncf %27 : vector<18x8xf32> to vector<18x8xbf16>
    %35 = arith.truncf %30 : vector<18x8xf32> to vector<18x8xbf16>
    %cst_9 = arith.constant dense<0.000000e+00> : vector<18x18xf32>
    %36 = tpu.matmul %34, %35, %cst_9 {dimension_numbers = #tpu.dot_dimension_numbers<[1], [1], [0], [0], [0, 0, 1, 0], [], []>} : vector<18x8xbf16>, vector<18x8xbf16>, vector<18x18xf32> -> vector<18x18xf32>
    %37 = arith.mulf %36, %16 : vector<18x18xf32>
    %cst_10 = arith.constant dense<0.000000e+00> : vector<18xf32>
    %38 = vector.multi_reduction <add>, %37, %cst_10 [1] : vector<18x18xf32> to vector<18xf32>
    %39 = vector.shape_cast %38 : vector<18xf32> to vector<18x1xf32>
    %cst_11 = arith.constant 0.000000e+00 : f32
    %40 = vector.broadcast %cst_11 : f32 to vector<18x18xf32>
    %41 = arith.cmpf ogt, %16, %40 : vector<18x18xf32>
    %cst_12 = arith.constant 0xFF800000 : f32
    %42 = vector.broadcast %cst_12 : f32 to vector<18x18xf32>
    %43 = arith.select %41, %36, %42 : vector<18x18xi1>, vector<18x18xf32>
    %cst_13 = arith.constant dense<0xFF800000> : vector<18xf32>
    %44 = vector.multi_reduction <maximumf>, %43, %cst_13 [1] : vector<18x18xf32> to vector<18xf32>
    %45 = vector.shape_cast %44 : vector<18xf32> to vector<18x1xf32>
    %cst_14 = arith.constant 0.055555556 : f32
    %46 = vector.broadcast %cst_14 : f32 to vector<18x1xf32>
    %47 = arith.mulf %39, %46 : vector<18x1xf32>
    %48 = arith.subf %45, %47 : vector<18x1xf32>
    %49 = vector.broadcast %48 : vector<18x1xf32> to vector<18x18xf32>
    %50 = arith.mulf %21, %49 : vector<18x18xf32>
    %cst_15 = arith.constant dense<0.000000e+00> : vector<18xf32>
    %51 = vector.multi_reduction <add>, %50, %cst_15 [0] : vector<18x18xf32> to vector<18xf32>
    %52 = vector.shape_cast %51 : vector<18xf32> to vector<1x18xf32>
    %53 = vector.broadcast %52 : vector<1x18xf32> to vector<18x18xf32>
    %54 = vector.broadcast %48 : vector<18x1xf32> to vector<18x18xf32>
    %55 = arith.cmpf ogt, %53, %54 : vector<18x18xf32>
    %56 = arith.cmpi ne, %23, %22 : vector<18x18xi32>
    %57 = arith.andi %55, %56 : vector<18x18xi1>
    %58 = vector.broadcast %52 : vector<1x18xf32> to vector<18x18xf32>
    %59 = vector.broadcast %48 : vector<18x1xf32> to vector<18x18xf32>
    %60 = arith.cmpf oeq, %58, %59 : vector<18x18xf32>
    %61 = arith.cmpi slt, %23, %22 : vector<18x18xi32>
    %62 = arith.andi %60, %61 : vector<18x18xi1>
    %63 = arith.ori %57, %62 : vector<18x18xi1>
    %64 = arith.extui %63 : vector<18x18xi1> to vector<18x18xi32>
    %65 = arith.sitofp %64 : vector<18x18xi32> to vector<18x18xf32>
    %cst_16 = arith.constant dense<0.000000e+00> : vector<18xf32>
    %66 = vector.multi_reduction <add>, %65, %cst_16 [1] : vector<18x18xf32> to vector<18xf32>
    %67 = vector.shape_cast %66 : vector<18xf32> to vector<18x1xf32>
    %cst_17 = arith.constant 6.000000e+00 : f32
    %68 = vector.broadcast %cst_17 : f32 to vector<18x1xf32>
    %69 = arith.cmpf olt, %67, %68 : vector<18x1xf32>
    %cst_18 = arith.constant dense<0.000000e+00> : vector<8xf32>
    %70 = vector.multi_reduction <add>, %33, %cst_18 [0] : vector<18x8xf32> to vector<8xf32>
    %71 = vector.shape_cast %70 : vector<8xf32> to vector<1x8xf32>
    %cst_19 = arith.constant 0.353553385 : f32
    %72 = vector.broadcast %cst_19 : f32 to vector<18x18xf32>
    %73 = arith.mulf %36, %72 : vector<18x18xf32>
    %cst_20 = arith.constant dense<0xFF800000> : vector<18xf32>
    %74 = vector.multi_reduction <maximumf>, %73, %cst_20 [1] : vector<18x18xf32> to vector<18xf32>
    %75 = vector.shape_cast %74 : vector<18xf32> to vector<18x1xf32>
    %76 = vector.broadcast %75 : vector<18x1xf32> to vector<18x18xf32>
    %77 = arith.subf %73, %76 : vector<18x18xf32>
    %78 = math.exp %77 : vector<18x18xf32>
    %cst_21 = arith.constant dense<0.000000e+00> : vector<18xf32>
    %79 = vector.multi_reduction <add>, %78, %cst_21 [1] : vector<18x18xf32> to vector<18xf32>
    %80 = vector.shape_cast %79 : vector<18xf32> to vector<18x1xf32>
    %81 = vector.broadcast %80 : vector<18x1xf32> to vector<18x18xf32>
    %82 = arith.divf %78, %81 : vector<18x18xf32>
    %83 = arith.truncf %82 : vector<18x18xf32> to vector<18x18xbf16>
    %84 = arith.truncf %33 : vector<18x8xf32> to vector<18x8xbf16>
    %cst_22 = arith.constant dense<0.000000e+00> : vector<18x8xf32>
    %85 = tpu.matmul %83, %84, %cst_22 {dimension_numbers = #tpu.dot_dimension_numbers<[1], [0], [0], [1], [0, 0, 1, 1], [], []>} : vector<18x18xbf16>, vector<18x8xbf16>, vector<18x8xf32> -> vector<18x8xf32>
    %86 = vector.shape_cast %69 : vector<18x1xi1> to vector<18x1xi1>
    %87 = vector.broadcast %86 : vector<18x1xi1> to vector<18x8xi1>
    %88 = vector.shape_cast %71 : vector<1x8xf32> to vector<1x8xf32>
    %89 = vector.broadcast %88 : vector<1x8xf32> to vector<18x8xf32>
    %90 = arith.select %87, %85, %89 : vector<18x8xi1>, vector<18x8xf32>
    %91 = vector.extract_strided_slice %90 {offsets = [0, 0], sizes = [9, 8], strides = [1, 1]} : vector<18x8xf32> to vector<9x8xf32>
    %92 = vector.extract_strided_slice %90 {offsets = [9, 0], sizes = [9, 8], strides = [1, 1]} : vector<18x8xf32> to vector<9x8xf32>
    %93 = tpu.concatenate %91, %92 in 1 : vector<9x8xf32>, vector<9x8xf32> -> vector<9x16xf32>
    %94 = vector.extract_strided_slice %15 {offsets = [9, 0], sizes = [9, 48], strides = [1, 1]} : vector<18x48xf32> to vector<9x48xf32>
    %95 = vector.extract_strided_slice %94 {offsets = [0, 0], sizes = [9, 8], strides = [1, 1]} : vector<9x48xf32> to vector<9x8xf32>
    %96 = vector.extract_strided_slice %94 {offsets = [0, 8], sizes = [9, 8], strides = [1, 1]} : vector<9x48xf32> to vector<9x8xf32>
    %97 = tpu.concatenate %95, %96 in 0 : vector<9x8xf32>, vector<9x8xf32> -> vector<18x8xf32>
    %98 = vector.extract_strided_slice %94 {offsets = [0, 16], sizes = [9, 8], strides = [1, 1]} : vector<9x48xf32> to vector<9x8xf32>
    %99 = vector.extract_strided_slice %94 {offsets = [0, 24], sizes = [9, 8], strides = [1, 1]} : vector<9x48xf32> to vector<9x8xf32>
    %100 = tpu.concatenate %98, %99 in 0 : vector<9x8xf32>, vector<9x8xf32> -> vector<18x8xf32>
    %101 = vector.extract_strided_slice %94 {offsets = [0, 32], sizes = [9, 8], strides = [1, 1]} : vector<9x48xf32> to vector<9x8xf32>
    %102 = vector.extract_strided_slice %94 {offsets = [0, 40], sizes = [9, 8], strides = [1, 1]} : vector<9x48xf32> to vector<9x8xf32>
    %103 = tpu.concatenate %101, %102 in 0 : vector<9x8xf32>, vector<9x8xf32> -> vector<18x8xf32>
    %104 = arith.truncf %97 : vector<18x8xf32> to vector<18x8xbf16>
    %105 = arith.truncf %100 : vector<18x8xf32> to vector<18x8xbf16>
    %cst_23 = arith.constant dense<0.000000e+00> : vector<18x18xf32>
    %106 = tpu.matmul %104, %105, %cst_23 {dimension_numbers = #tpu.dot_dimension_numbers<[1], [1], [0], [0], [0, 0, 1, 0], [], []>} : vector<18x8xbf16>, vector<18x8xbf16>, vector<18x18xf32> -> vector<18x18xf32>
    %107 = arith.mulf %106, %16 : vector<18x18xf32>
    %cst_24 = arith.constant dense<0.000000e+00> : vector<18xf32>
    %108 = vector.multi_reduction <add>, %107, %cst_24 [1] : vector<18x18xf32> to vector<18xf32>
    %109 = vector.shape_cast %108 : vector<18xf32> to vector<18x1xf32>
    %cst_25 = arith.constant 0.000000e+00 : f32
    %110 = vector.broadcast %cst_25 : f32 to vector<18x18xf32>
    %111 = arith.cmpf ogt, %16, %110 : vector<18x18xf32>
    %cst_26 = arith.constant 0xFF800000 : f32
    %112 = vector.broadcast %cst_26 : f32 to vector<18x18xf32>
    %113 = arith.select %111, %106, %112 : vector<18x18xi1>, vector<18x18xf32>
    %cst_27 = arith.constant dense<0xFF800000> : vector<18xf32>
    %114 = vector.multi_reduction <maximumf>, %113, %cst_27 [1] : vector<18x18xf32> to vector<18xf32>
    %115 = vector.shape_cast %114 : vector<18xf32> to vector<18x1xf32>
    %cst_28 = arith.constant 0.055555556 : f32
    %116 = vector.broadcast %cst_28 : f32 to vector<18x1xf32>
    %117 = arith.mulf %109, %116 : vector<18x1xf32>
    %118 = arith.subf %115, %117 : vector<18x1xf32>
    %119 = vector.broadcast %118 : vector<18x1xf32> to vector<18x18xf32>
    %120 = arith.mulf %21, %119 : vector<18x18xf32>
    %cst_29 = arith.constant dense<0.000000e+00> : vector<18xf32>
    %121 = vector.multi_reduction <add>, %120, %cst_29 [0] : vector<18x18xf32> to vector<18xf32>
    %122 = vector.shape_cast %121 : vector<18xf32> to vector<1x18xf32>
    %123 = vector.broadcast %122 : vector<1x18xf32> to vector<18x18xf32>
    %124 = vector.broadcast %118 : vector<18x1xf32> to vector<18x18xf32>
    %125 = arith.cmpf ogt, %123, %124 : vector<18x18xf32>
    %126 = arith.cmpi ne, %23, %22 : vector<18x18xi32>
    %127 = arith.andi %125, %126 : vector<18x18xi1>
    %128 = vector.broadcast %122 : vector<1x18xf32> to vector<18x18xf32>
    %129 = vector.broadcast %118 : vector<18x1xf32> to vector<18x18xf32>
    %130 = arith.cmpf oeq, %128, %129 : vector<18x18xf32>
    %131 = arith.cmpi slt, %23, %22 : vector<18x18xi32>
    %132 = arith.andi %130, %131 : vector<18x18xi1>
    %133 = arith.ori %127, %132 : vector<18x18xi1>
    %134 = arith.extui %133 : vector<18x18xi1> to vector<18x18xi32>
    %135 = arith.sitofp %134 : vector<18x18xi32> to vector<18x18xf32>
    %cst_30 = arith.constant dense<0.000000e+00> : vector<18xf32>
    %136 = vector.multi_reduction <add>, %135, %cst_30 [1] : vector<18x18xf32> to vector<18xf32>
    %137 = vector.shape_cast %136 : vector<18xf32> to vector<18x1xf32>
    %cst_31 = arith.constant 6.000000e+00 : f32
    %138 = vector.broadcast %cst_31 : f32 to vector<18x1xf32>
    %139 = arith.cmpf olt, %137, %138 : vector<18x1xf32>
    %cst_32 = arith.constant dense<0.000000e+00> : vector<8xf32>
    %140 = vector.multi_reduction <add>, %103, %cst_32 [0] : vector<18x8xf32> to vector<8xf32>
    %141 = vector.shape_cast %140 : vector<8xf32> to vector<1x8xf32>
    %cst_33 = arith.constant 0.353553385 : f32
    %142 = vector.broadcast %cst_33 : f32 to vector<18x18xf32>
    %143 = arith.mulf %106, %142 : vector<18x18xf32>
    %cst_34 = arith.constant dense<0xFF800000> : vector<18xf32>
    %144 = vector.multi_reduction <maximumf>, %143, %cst_34 [1] : vector<18x18xf32> to vector<18xf32>
    %145 = vector.shape_cast %144 : vector<18xf32> to vector<18x1xf32>
    %146 = vector.broadcast %145 : vector<18x1xf32> to vector<18x18xf32>
    %147 = arith.subf %143, %146 : vector<18x18xf32>
    %148 = math.exp %147 : vector<18x18xf32>
    %cst_35 = arith.constant dense<0.000000e+00> : vector<18xf32>
    %149 = vector.multi_reduction <add>, %148, %cst_35 [1] : vector<18x18xf32> to vector<18xf32>
    %150 = vector.shape_cast %149 : vector<18xf32> to vector<18x1xf32>
    %151 = vector.broadcast %150 : vector<18x1xf32> to vector<18x18xf32>
    %152 = arith.divf %148, %151 : vector<18x18xf32>
    %153 = arith.truncf %152 : vector<18x18xf32> to vector<18x18xbf16>
    %154 = arith.truncf %103 : vector<18x8xf32> to vector<18x8xbf16>
    %cst_36 = arith.constant dense<0.000000e+00> : vector<18x8xf32>
    %155 = tpu.matmul %153, %154, %cst_36 {dimension_numbers = #tpu.dot_dimension_numbers<[1], [0], [0], [1], [0, 0, 1, 1], [], []>} : vector<18x18xbf16>, vector<18x8xbf16>, vector<18x8xf32> -> vector<18x8xf32>
    %156 = vector.shape_cast %139 : vector<18x1xi1> to vector<18x1xi1>
    %157 = vector.broadcast %156 : vector<18x1xi1> to vector<18x8xi1>
    %158 = vector.shape_cast %141 : vector<1x8xf32> to vector<1x8xf32>
    %159 = vector.broadcast %158 : vector<1x8xf32> to vector<18x8xf32>
    %160 = arith.select %157, %155, %159 : vector<18x8xi1>, vector<18x8xf32>
    %161 = vector.extract_strided_slice %160 {offsets = [0, 0], sizes = [9, 8], strides = [1, 1]} : vector<18x8xf32> to vector<9x8xf32>
    %162 = vector.extract_strided_slice %160 {offsets = [9, 0], sizes = [9, 8], strides = [1, 1]} : vector<18x8xf32> to vector<9x8xf32>
    %163 = tpu.concatenate %161, %162 in 1 : vector<9x8xf32>, vector<9x8xf32> -> vector<9x16xf32>
    %164 = tpu.concatenate %93, %163 in 0 : vector<9x16xf32>, vector<9x16xf32> -> vector<18x16xf32>
    %c128 = arith.constant 128 : index
    %c0_37 = arith.constant 0 : index
    %165 = vector.load %arg2[%c128, %c0_37] : memref<400x128xbf16, #tpu.memory_space<vmem>>, vector<16x16xbf16>
    %166 = arith.truncf %164 : vector<18x16xf32> to vector<18x16xbf16>
    %cst_38 = arith.constant dense<0.000000e+00> : vector<18x16xf32>
    %167 = tpu.matmul %166, %165, %cst_38 {dimension_numbers = #tpu.dot_dimension_numbers<[1], [0], [0], [1], [0, 0, 1, 1], [], []>} : vector<18x16xbf16>, vector<16x16xbf16>, vector<18x16xf32> -> vector<18x16xf32>
    %168 = arith.addf %9, %167 : vector<18x16xf32>
    %c8 = arith.constant 8 : index
    %c0_39 = arith.constant 0 : index
    %169 = vector.load %arg3[%c8, %c0_39] : memref<224x128xf32, #tpu.memory_space<vmem>>, vector<1x16xf32>
    %170 = vector.broadcast %169 : vector<1x16xf32> to vector<18x16xf32>
    %171 = arith.addf %168, %170 : vector<18x16xf32>
    %c16 = arith.constant 16 : index
    %c0_40 = arith.constant 0 : index
    %172 = vector.load %arg3[%c16, %c0_40] : memref<224x128xf32, #tpu.memory_space<vmem>>, vector<1x16xf32>
    %c24 = arith.constant 24 : index
    %c0_41 = arith.constant 0 : index
    %173 = vector.load %arg3[%c24, %c0_41] : memref<224x128xf32, #tpu.memory_space<vmem>>, vector<1x16xf32>
    %cst_42 = arith.constant dense<0.000000e+00> : vector<18xf32>
    %174 = vector.multi_reduction <add>, %171, %cst_42 [1] : vector<18x16xf32> to vector<18xf32>
    %175 = vector.shape_cast %174 : vector<18xf32> to vector<18x1xf32>
    %cst_43 = arith.constant 1.600000e+01 : f32
    %176 = vector.broadcast %cst_43 : f32 to vector<18x1xf32>
    %177 = arith.divf %175, %176 : vector<18x1xf32>
    %178 = vector.broadcast %177 : vector<18x1xf32> to vector<18x16xf32>
    %179 = arith.subf %171, %178 : vector<18x16xf32>
    %180 = arith.mulf %179, %179 : vector<18x16xf32>
    %cst_44 = arith.constant dense<0.000000e+00> : vector<18xf32>
    %181 = vector.multi_reduction <add>, %180, %cst_44 [1] : vector<18x16xf32> to vector<18xf32>
    %182 = vector.shape_cast %181 : vector<18xf32> to vector<18x1xf32>
    %cst_45 = arith.constant 1.600000e+01 : f32
    %183 = vector.broadcast %cst_45 : f32 to vector<18x1xf32>
    %184 = arith.divf %182, %183 : vector<18x1xf32>
    %185 = vector.broadcast %177 : vector<18x1xf32> to vector<18x16xf32>
    %186 = arith.subf %171, %185 : vector<18x16xf32>
    %cst_46 = arith.constant 9.99999974E-6 : f32
    %187 = vector.broadcast %cst_46 : f32 to vector<18x1xf32>
    %188 = arith.addf %184, %187 : vector<18x1xf32>
    %189 = math.rsqrt %188 : vector<18x1xf32>
    %190 = vector.broadcast %189 : vector<18x1xf32> to vector<18x16xf32>
    %191 = arith.mulf %186, %190 : vector<18x16xf32>
    %192 = vector.broadcast %172 : vector<1x16xf32> to vector<18x16xf32>
    %193 = arith.mulf %191, %192 : vector<18x16xf32>
    %194 = vector.broadcast %173 : vector<1x16xf32> to vector<18x16xf32>
    %195 = arith.addf %193, %194 : vector<18x16xf32>
    %c144 = arith.constant 144 : index
    %c0_47 = arith.constant 0 : index
    %196 = vector.load %arg2[%c144, %c0_47] : memref<400x128xbf16, #tpu.memory_space<vmem>>, vector<16x32xbf16>
    %197 = arith.truncf %195 : vector<18x16xf32> to vector<18x16xbf16>
    %cst_48 = arith.constant dense<0.000000e+00> : vector<18x32xf32>
    %198 = tpu.matmul %197, %196, %cst_48 {dimension_numbers = #tpu.dot_dimension_numbers<[1], [0], [0], [1], [0, 0, 1, 1], [], []>} : vector<18x16xbf16>, vector<16x32xbf16>, vector<18x32xf32> -> vector<18x32xf32>
    %c32 = arith.constant 32 : index
    %c0_49 = arith.constant 0 : index
    %199 = vector.load %arg3[%c32, %c0_49] : memref<224x128xf32, #tpu.memory_space<vmem>>, vector<1x32xf32>
    %200 = vector.broadcast %199 : vector<1x32xf32> to vector<18x32xf32>
    %201 = arith.addf %198, %200 : vector<18x32xf32>
    %cst_50 = arith.constant 5.000000e-01 : f32
    %202 = vector.broadcast %cst_50 : f32 to vector<18x32xf32>
    %203 = arith.mulf %202, %201 : vector<18x32xf32>
    %cst_51 = arith.constant 4.471500e-02 : f32
    %204 = vector.broadcast %cst_51 : f32 to vector<18x32xf32>
    %205 = arith.mulf %204, %201 : vector<18x32xf32>
    %206 = arith.mulf %205, %201 : vector<18x32xf32>
    %207 = arith.mulf %206, %201 : vector<18x32xf32>
    %208 = arith.addf %201, %207 : vector<18x32xf32>
    %cst_52 = arith.constant 0.797884583 : f32
    %209 = vector.broadcast %cst_52 : f32 to vector<18x32xf32>
    %210 = arith.mulf %209, %208 : vector<18x32xf32>
    %211 = math.tanh %210 : vector<18x32xf32>
    %cst_53 = arith.constant 1.000000e+00 : f32
    %212 = vector.broadcast %cst_53 : f32 to vector<18x32xf32>
    %213 = arith.addf %212, %211 : vector<18x32xf32>
    %214 = arith.mulf %203, %213 : vector<18x32xf32>
    %c160 = arith.constant 160 : index
    %c0_54 = arith.constant 0 : index
    %215 = vector.load %arg2[%c160, %c0_54] : memref<400x128xbf16, #tpu.memory_space<vmem>>, vector<32x16xbf16>
    %216 = arith.truncf %214 : vector<18x32xf32> to vector<18x32xbf16>
    %cst_55 = arith.constant dense<0.000000e+00> : vector<18x16xf32>
    %217 = tpu.matmul %216, %215, %cst_55 {dimension_numbers = #tpu.dot_dimension_numbers<[1], [0], [0], [1], [0, 0, 1, 1], [], []>} : vector<18x32xbf16>, vector<32x16xbf16>, vector<18x16xf32> -> vector<18x16xf32>
    %c40 = arith.constant 40 : index
    %c0_56 = arith.constant 0 : index
    %218 = vector.load %arg3[%c40, %c0_56] : memref<224x128xf32, #tpu.memory_space<vmem>>, vector<1x16xf32>
    %219 = vector.broadcast %218 : vector<1x16xf32> to vector<18x16xf32>
    %220 = arith.addf %217, %219 : vector<18x16xf32>
    %221 = arith.addf %195, %220 : vector<18x16xf32>
    %c48 = arith.constant 48 : index
    %c0_57 = arith.constant 0 : index
    %222 = vector.load %arg3[%c48, %c0_57] : memref<224x128xf32, #tpu.memory_space<vmem>>, vector<1x16xf32>
    %c56 = arith.constant 56 : index
    %c0_58 = arith.constant 0 : index
    %223 = vector.load %arg3[%c56, %c0_58] : memref<224x128xf32, #tpu.memory_space<vmem>>, vector<1x16xf32>
    %cst_59 = arith.constant dense<0.000000e+00> : vector<18xf32>
    %224 = vector.multi_reduction <add>, %221, %cst_59 [1] : vector<18x16xf32> to vector<18xf32>
    %225 = vector.shape_cast %224 : vector<18xf32> to vector<18x1xf32>
    %cst_60 = arith.constant 1.600000e+01 : f32
    %226 = vector.broadcast %cst_60 : f32 to vector<18x1xf32>
    %227 = arith.divf %225, %226 : vector<18x1xf32>
    %228 = vector.broadcast %227 : vector<18x1xf32> to vector<18x16xf32>
    %229 = arith.subf %221, %228 : vector<18x16xf32>
    %230 = arith.mulf %229, %229 : vector<18x16xf32>
    %cst_61 = arith.constant dense<0.000000e+00> : vector<18xf32>
    %231 = vector.multi_reduction <add>, %230, %cst_61 [1] : vector<18x16xf32> to vector<18xf32>
    %232 = vector.shape_cast %231 : vector<18xf32> to vector<18x1xf32>
    %cst_62 = arith.constant 1.600000e+01 : f32
    %233 = vector.broadcast %cst_62 : f32 to vector<18x1xf32>
    %234 = arith.divf %232, %233 : vector<18x1xf32>
    %235 = vector.broadcast %227 : vector<18x1xf32> to vector<18x16xf32>
    %236 = arith.subf %221, %235 : vector<18x16xf32>
    %cst_63 = arith.constant 9.99999974E-6 : f32
    %237 = vector.broadcast %cst_63 : f32 to vector<18x1xf32>
    %238 = arith.addf %234, %237 : vector<18x1xf32>
    %239 = math.rsqrt %238 : vector<18x1xf32>
    %240 = vector.broadcast %239 : vector<18x1xf32> to vector<18x16xf32>
    %241 = arith.mulf %236, %240 : vector<18x16xf32>
    %242 = vector.broadcast %222 : vector<1x16xf32> to vector<18x16xf32>
    %243 = arith.mulf %241, %242 : vector<18x16xf32>
    %244 = vector.broadcast %223 : vector<1x16xf32> to vector<18x16xf32>
    %245 = arith.addf %243, %244 : vector<18x16xf32>
    %246 = vector.extract_strided_slice %245 {offsets = [16, 0], sizes = [2, 16], strides = [1, 1]} : vector<18x16xf32> to vector<2x16xf32>
    %247 = vector.extract_strided_slice %245 {offsets = [0, 0], sizes = [16, 16], strides = [1, 1]} : vector<18x16xf32> to vector<16x16xf32>
    %248 = tpu.concatenate %246, %247 in 0 : vector<2x16xf32>, vector<16x16xf32> -> vector<18x16xf32>
    %c272 = arith.constant 272 : index
    %c0_64 = arith.constant 0 : index
    %249 = vector.load %arg2[%c272, %c0_64] : memref<400x128xbf16, #tpu.memory_space<vmem>>, vector<16x16xbf16>
    %250 = arith.truncf %248 : vector<18x16xf32> to vector<18x16xbf16>
    %cst_65 = arith.constant dense<0.000000e+00> : vector<18x16xf32>
    %251 = tpu.matmul %250, %249, %cst_65 {dimension_numbers = #tpu.dot_dimension_numbers<[1], [0], [0], [1], [0, 0, 1, 1], [], []>} : vector<18x16xbf16>, vector<16x16xbf16>, vector<18x16xf32> -> vector<18x16xf32>
    %252 = vector.extract_strided_slice %245 {offsets = [17, 0], sizes = [1, 16], strides = [1, 1]} : vector<18x16xf32> to vector<1x16xf32>
    %253 = vector.extract_strided_slice %245 {offsets = [0, 0], sizes = [17, 16], strides = [1, 1]} : vector<18x16xf32> to vector<17x16xf32>
    %254 = tpu.concatenate %252, %253 in 0 : vector<1x16xf32>, vector<17x16xf32> -> vector<18x16xf32>
    %c288 = arith.constant 288 : index
    %c0_66 = arith.constant 0 : index
    %255 = vector.load %arg2[%c288, %c0_66] : memref<400x128xbf16, #tpu.memory_space<vmem>>, vector<16x16xbf16>
    %256 = arith.truncf %254 : vector<18x16xf32> to vector<18x16xbf16>
    %cst_67 = arith.constant dense<0.000000e+00> : vector<18x16xf32>
    %257 = tpu.matmul %256, %255, %cst_67 {dimension_numbers = #tpu.dot_dimension_numbers<[1], [0], [0], [1], [0, 0, 1, 1], [], []>} : vector<18x16xbf16>, vector<16x16xbf16>, vector<18x16xf32> -> vector<18x16xf32>
    %258 = arith.addf %251, %257 : vector<18x16xf32>
    %c304 = arith.constant 304 : index
    %c0_68 = arith.constant 0 : index
    %259 = vector.load %arg2[%c304, %c0_68] : memref<400x128xbf16, #tpu.memory_space<vmem>>, vector<16x16xbf16>
    %260 = arith.truncf %245 : vector<18x16xf32> to vector<18x16xbf16>
    %cst_69 = arith.constant dense<0.000000e+00> : vector<18x16xf32>
    %261 = tpu.matmul %260, %259, %cst_69 {dimension_numbers = #tpu.dot_dimension_numbers<[1], [0], [0], [1], [0, 0, 1, 1], [], []>} : vector<18x16xbf16>, vector<16x16xbf16>, vector<18x16xf32> -> vector<18x16xf32>
    %262 = arith.addf %258, %261 : vector<18x16xf32>
    %c168 = arith.constant 168 : index
    %c0_70 = arith.constant 0 : index
    %263 = vector.load %arg3[%c168, %c0_70] : memref<224x128xf32, #tpu.memory_space<vmem>>, vector<1x16xf32>
    %264 = vector.broadcast %263 : vector<1x16xf32> to vector<18x16xf32>
    %265 = arith.addf %262, %264 : vector<18x16xf32>
    %c176 = arith.constant 176 : index
    %c0_71 = arith.constant 0 : index
    %266 = vector.load %arg3[%c176, %c0_71] : memref<224x128xf32, #tpu.memory_space<vmem>>, vector<1x16xf32>
    %267 = vector.broadcast %266 : vector<1x16xf32> to vector<18x16xf32>
    %268 = arith.mulf %265, %267 : vector<18x16xf32>
    %c184 = arith.constant 184 : index
    %c0_72 = arith.constant 0 : index
    %269 = vector.load %arg3[%c184, %c0_72] : memref<224x128xf32, #tpu.memory_space<vmem>>, vector<1x16xf32>
    %270 = vector.broadcast %269 : vector<1x16xf32> to vector<18x16xf32>
    %271 = arith.addf %268, %270 : vector<18x16xf32>
    %cst_73 = arith.constant 0.000000e+00 : f32
    %272 = vector.broadcast %cst_73 : f32 to vector<18x16xf32>
    %273 = arith.cmpf ogt, %271, %272 : vector<18x16xf32>
    %cst_74 = arith.constant 0.000000e+00 : f32
    %274 = vector.broadcast %cst_74 : f32 to vector<18x16xf32>
    %275 = arith.minimumf %271, %274 : vector<18x16xf32>
    %276 = math.exp %275 : vector<18x16xf32>
    %cst_75 = arith.constant 1.000000e+00 : f32
    %277 = vector.broadcast %cst_75 : f32 to vector<18x16xf32>
    %278 = arith.subf %276, %277 : vector<18x16xf32>
    %279 = arith.select %273, %271, %278 : vector<18x16xi1>, vector<18x16xf32>
    %280 = vector.extract_strided_slice %279 {offsets = [0, 0], sizes = [2, 16], strides = [1, 1]} : vector<18x16xf32> to vector<2x16xf32>
    %281 = tpu.concatenate %279, %280 in 0 : vector<18x16xf32>, vector<2x16xf32> -> vector<20x16xf32>
    %282 = vector.extract_strided_slice %281 {offsets = [19, 0], sizes = [1, 16], strides = [1, 1]} : vector<20x16xf32> to vector<1x16xf32>
    %283 = vector.extract_strided_slice %281 {offsets = [0, 0], sizes = [19, 16], strides = [1, 1]} : vector<20x16xf32> to vector<19x16xf32>
    %284 = tpu.concatenate %282, %283 in 0 : vector<1x16xf32>, vector<19x16xf32> -> vector<20x16xf32>
    %285 = vector.extract_strided_slice %281 {offsets = [1, 0], sizes = [19, 16], strides = [1, 1]} : vector<20x16xf32> to vector<19x16xf32>
    %286 = vector.extract_strided_slice %281 {offsets = [0, 0], sizes = [1, 16], strides = [1, 1]} : vector<20x16xf32> to vector<1x16xf32>
    %287 = tpu.concatenate %285, %286 in 0 : vector<19x16xf32>, vector<1x16xf32> -> vector<20x16xf32>
    %288 = arith.maximumf %284, %287 : vector<20x16xf32>
    %289 = arith.maximumf %281, %288 : vector<20x16xf32>
    %290 = tpu.iota {dimensions = array<i32: 1>} : vector<10x20xi32>
    %291 = tpu.iota {dimensions = array<i32: 0>} : vector<10x20xi32>
    %c2_i32 = arith.constant 2 : i32
    %292 = vector.broadcast %c2_i32 : i32 to vector<10x20xi32>
    %293 = arith.muli %292, %291 : vector<10x20xi32>
    %294 = arith.cmpi eq, %290, %293 : vector<10x20xi32>
    %295 = arith.extui %294 : vector<10x20xi1> to vector<10x20xi32>
    %296 = arith.sitofp %295 : vector<10x20xi32> to vector<10x20xf32>
    %cst_76 = arith.constant dense<0.000000e+00> : vector<10x16xf32>
    %297 = tpu.matmul %296, %289, %cst_76 {dimension_numbers = #tpu.dot_dimension_numbers<[1], [0], [0], [1], [0, 0, 1, 1], [], []>} : vector<10x20xf32>, vector<20x16xf32>, vector<10x16xf32> -> vector<10x16xf32>
    %c192 = arith.constant 192 : index
    %c0_77 = arith.constant 0 : index
    %298 = vector.load %arg2[%c192, %c0_77] : memref<400x128xbf16, #tpu.memory_space<vmem>>, vector<16x48xbf16>
    %299 = arith.truncf %297 : vector<10x16xf32> to vector<10x16xbf16>
    %cst_78 = arith.constant dense<0.000000e+00> : vector<10x48xf32>
    %300 = tpu.matmul %299, %298, %cst_78 {dimension_numbers = #tpu.dot_dimension_numbers<[1], [0], [0], [1], [0, 0, 1, 1], [], []>} : vector<10x16xbf16>, vector<16x48xbf16>, vector<10x48xf32> -> vector<10x48xf32>
    %c88 = arith.constant 88 : index
    %c0_79 = arith.constant 0 : index
    %301 = vector.load %arg3[%c88, %c0_79] : memref<224x128xf32, #tpu.memory_space<vmem>>, vector<1x48xf32>
    %302 = vector.broadcast %301 : vector<1x48xf32> to vector<10x48xf32>
    %303 = arith.addf %300, %302 : vector<10x48xf32>
    %c152 = arith.constant 152 : index
    %c0_80 = arith.constant 0 : index
    %304 = vector.load %arg3[%c152, %c0_80] : memref<224x128xf32, #tpu.memory_space<vmem>>, vector<10x10xf32>
    %305 = tpu.iota {dimensions = array<i32: 0>} : vector<10x10xi32>
    %306 = tpu.iota {dimensions = array<i32: 1>} : vector<10x10xi32>
    %307 = arith.cmpi eq, %305, %306 : vector<10x10xi32>
    %308 = arith.extui %307 : vector<10x10xi1> to vector<10x10xi32>
    %309 = arith.sitofp %308 : vector<10x10xi32> to vector<10x10xf32>
    %310 = tpu.iota {dimensions = array<i32: 0>} : vector<10x10xi32>
    %311 = tpu.iota {dimensions = array<i32: 1>} : vector<10x10xi32>
    %312 = vector.extract_strided_slice %303 {offsets = [0, 0], sizes = [5, 48], strides = [1, 1]} : vector<10x48xf32> to vector<5x48xf32>
    %313 = vector.extract_strided_slice %312 {offsets = [0, 0], sizes = [5, 8], strides = [1, 1]} : vector<5x48xf32> to vector<5x8xf32>
    %314 = vector.extract_strided_slice %312 {offsets = [0, 8], sizes = [5, 8], strides = [1, 1]} : vector<5x48xf32> to vector<5x8xf32>
    %315 = tpu.concatenate %313, %314 in 0 : vector<5x8xf32>, vector<5x8xf32> -> vector<10x8xf32>
    %316 = vector.extract_strided_slice %312 {offsets = [0, 16], sizes = [5, 8], strides = [1, 1]} : vector<5x48xf32> to vector<5x8xf32>
    %317 = vector.extract_strided_slice %312 {offsets = [0, 24], sizes = [5, 8], strides = [1, 1]} : vector<5x48xf32> to vector<5x8xf32>
    %318 = tpu.concatenate %316, %317 in 0 : vector<5x8xf32>, vector<5x8xf32> -> vector<10x8xf32>
    %319 = vector.extract_strided_slice %312 {offsets = [0, 32], sizes = [5, 8], strides = [1, 1]} : vector<5x48xf32> to vector<5x8xf32>
    %320 = vector.extract_strided_slice %312 {offsets = [0, 40], sizes = [5, 8], strides = [1, 1]} : vector<5x48xf32> to vector<5x8xf32>
    %321 = tpu.concatenate %319, %320 in 0 : vector<5x8xf32>, vector<5x8xf32> -> vector<10x8xf32>
    %322 = arith.truncf %315 : vector<10x8xf32> to vector<10x8xbf16>
    %323 = arith.truncf %318 : vector<10x8xf32> to vector<10x8xbf16>
    %cst_81 = arith.constant dense<0.000000e+00> : vector<10x10xf32>
    %324 = tpu.matmul %322, %323, %cst_81 {dimension_numbers = #tpu.dot_dimension_numbers<[1], [1], [0], [0], [0, 0, 1, 0], [], []>} : vector<10x8xbf16>, vector<10x8xbf16>, vector<10x10xf32> -> vector<10x10xf32>
    %325 = arith.mulf %324, %304 : vector<10x10xf32>
    %cst_82 = arith.constant dense<0.000000e+00> : vector<10xf32>
    %326 = vector.multi_reduction <add>, %325, %cst_82 [1] : vector<10x10xf32> to vector<10xf32>
    %327 = vector.shape_cast %326 : vector<10xf32> to vector<10x1xf32>
    %cst_83 = arith.constant 0.000000e+00 : f32
    %328 = vector.broadcast %cst_83 : f32 to vector<10x10xf32>
    %329 = arith.cmpf ogt, %304, %328 : vector<10x10xf32>
    %cst_84 = arith.constant 0xFF800000 : f32
    %330 = vector.broadcast %cst_84 : f32 to vector<10x10xf32>
    %331 = arith.select %329, %324, %330 : vector<10x10xi1>, vector<10x10xf32>
    %cst_85 = arith.constant dense<0xFF800000> : vector<10xf32>
    %332 = vector.multi_reduction <maximumf>, %331, %cst_85 [1] : vector<10x10xf32> to vector<10xf32>
    %333 = vector.shape_cast %332 : vector<10xf32> to vector<10x1xf32>
    %cst_86 = arith.constant 1.000000e-01 : f32
    %334 = vector.broadcast %cst_86 : f32 to vector<10x1xf32>
    %335 = arith.mulf %327, %334 : vector<10x1xf32>
    %336 = arith.subf %333, %335 : vector<10x1xf32>
    %337 = vector.broadcast %336 : vector<10x1xf32> to vector<10x10xf32>
    %338 = arith.mulf %309, %337 : vector<10x10xf32>
    %cst_87 = arith.constant dense<0.000000e+00> : vector<10xf32>
    %339 = vector.multi_reduction <add>, %338, %cst_87 [0] : vector<10x10xf32> to vector<10xf32>
    %340 = vector.shape_cast %339 : vector<10xf32> to vector<1x10xf32>
    %341 = vector.broadcast %340 : vector<1x10xf32> to vector<10x10xf32>
    %342 = vector.broadcast %336 : vector<10x1xf32> to vector<10x10xf32>
    %343 = arith.cmpf ogt, %341, %342 : vector<10x10xf32>
    %344 = arith.cmpi ne, %311, %310 : vector<10x10xi32>
    %345 = arith.andi %343, %344 : vector<10x10xi1>
    %346 = vector.broadcast %340 : vector<1x10xf32> to vector<10x10xf32>
    %347 = vector.broadcast %336 : vector<10x1xf32> to vector<10x10xf32>
    %348 = arith.cmpf oeq, %346, %347 : vector<10x10xf32>
    %349 = arith.cmpi slt, %311, %310 : vector<10x10xi32>
    %350 = arith.andi %348, %349 : vector<10x10xi1>
    %351 = arith.ori %345, %350 : vector<10x10xi1>
    %352 = arith.extui %351 : vector<10x10xi1> to vector<10x10xi32>
    %353 = arith.sitofp %352 : vector<10x10xi32> to vector<10x10xf32>
    %cst_88 = arith.constant dense<0.000000e+00> : vector<10xf32>
    %354 = vector.multi_reduction <add>, %353, %cst_88 [1] : vector<10x10xf32> to vector<10xf32>
    %355 = vector.shape_cast %354 : vector<10xf32> to vector<10x1xf32>
    %cst_89 = arith.constant 6.000000e+00 : f32
    %356 = vector.broadcast %cst_89 : f32 to vector<10x1xf32>
    %357 = arith.cmpf olt, %355, %356 : vector<10x1xf32>
    %cst_90 = arith.constant dense<0.000000e+00> : vector<8xf32>
    %358 = vector.multi_reduction <add>, %321, %cst_90 [0] : vector<10x8xf32> to vector<8xf32>
    %359 = vector.shape_cast %358 : vector<8xf32> to vector<1x8xf32>
    %cst_91 = arith.constant 0.353553385 : f32
    %360 = vector.broadcast %cst_91 : f32 to vector<10x10xf32>
    %361 = arith.mulf %324, %360 : vector<10x10xf32>
    %cst_92 = arith.constant dense<0xFF800000> : vector<10xf32>
    %362 = vector.multi_reduction <maximumf>, %361, %cst_92 [1] : vector<10x10xf32> to vector<10xf32>
    %363 = vector.shape_cast %362 : vector<10xf32> to vector<10x1xf32>
    %364 = vector.broadcast %363 : vector<10x1xf32> to vector<10x10xf32>
    %365 = arith.subf %361, %364 : vector<10x10xf32>
    %366 = math.exp %365 : vector<10x10xf32>
    %cst_93 = arith.constant dense<0.000000e+00> : vector<10xf32>
    %367 = vector.multi_reduction <add>, %366, %cst_93 [1] : vector<10x10xf32> to vector<10xf32>
    %368 = vector.shape_cast %367 : vector<10xf32> to vector<10x1xf32>
    %369 = vector.broadcast %368 : vector<10x1xf32> to vector<10x10xf32>
    %370 = arith.divf %366, %369 : vector<10x10xf32>
    %371 = arith.truncf %370 : vector<10x10xf32> to vector<10x10xbf16>
    %372 = arith.truncf %321 : vector<10x8xf32> to vector<10x8xbf16>
    %cst_94 = arith.constant dense<0.000000e+00> : vector<10x8xf32>
    %373 = tpu.matmul %371, %372, %cst_94 {dimension_numbers = #tpu.dot_dimension_numbers<[1], [0], [0], [1], [0, 0, 1, 1], [], []>} : vector<10x10xbf16>, vector<10x8xbf16>, vector<10x8xf32> -> vector<10x8xf32>
    %374 = vector.shape_cast %357 : vector<10x1xi1> to vector<10x1xi1>
    %375 = vector.broadcast %374 : vector<10x1xi1> to vector<10x8xi1>
    %376 = vector.shape_cast %359 : vector<1x8xf32> to vector<1x8xf32>
    %377 = vector.broadcast %376 : vector<1x8xf32> to vector<10x8xf32>
    %378 = arith.select %375, %373, %377 : vector<10x8xi1>, vector<10x8xf32>
    %379 = vector.extract_strided_slice %378 {offsets = [0, 0], sizes = [5, 8], strides = [1, 1]} : vector<10x8xf32> to vector<5x8xf32>
    %380 = vector.extract_strided_slice %378 {offsets = [5, 0], sizes = [5, 8], strides = [1, 1]} : vector<10x8xf32> to vector<5x8xf32>
    %381 = tpu.concatenate %379, %380 in 1 : vector<5x8xf32>, vector<5x8xf32> -> vector<5x16xf32>
    %382 = vector.extract_strided_slice %303 {offsets = [5, 0], sizes = [5, 48], strides = [1, 1]} : vector<10x48xf32> to vector<5x48xf32>
    %383 = vector.extract_strided_slice %382 {offsets = [0, 0], sizes = [5, 8], strides = [1, 1]} : vector<5x48xf32> to vector<5x8xf32>
    %384 = vector.extract_strided_slice %382 {offsets = [0, 8], sizes = [5, 8], strides = [1, 1]} : vector<5x48xf32> to vector<5x8xf32>
    %385 = tpu.concatenate %383, %384 in 0 : vector<5x8xf32>, vector<5x8xf32> -> vector<10x8xf32>
    %386 = vector.extract_strided_slice %382 {offsets = [0, 16], sizes = [5, 8], strides = [1, 1]} : vector<5x48xf32> to vector<5x8xf32>
    %387 = vector.extract_strided_slice %382 {offsets = [0, 24], sizes = [5, 8], strides = [1, 1]} : vector<5x48xf32> to vector<5x8xf32>
    %388 = tpu.concatenate %386, %387 in 0 : vector<5x8xf32>, vector<5x8xf32> -> vector<10x8xf32>
    %389 = vector.extract_strided_slice %382 {offsets = [0, 32], sizes = [5, 8], strides = [1, 1]} : vector<5x48xf32> to vector<5x8xf32>
    %390 = vector.extract_strided_slice %382 {offsets = [0, 40], sizes = [5, 8], strides = [1, 1]} : vector<5x48xf32> to vector<5x8xf32>
    %391 = tpu.concatenate %389, %390 in 0 : vector<5x8xf32>, vector<5x8xf32> -> vector<10x8xf32>
    %392 = arith.truncf %385 : vector<10x8xf32> to vector<10x8xbf16>
    %393 = arith.truncf %388 : vector<10x8xf32> to vector<10x8xbf16>
    %cst_95 = arith.constant dense<0.000000e+00> : vector<10x10xf32>
    %394 = tpu.matmul %392, %393, %cst_95 {dimension_numbers = #tpu.dot_dimension_numbers<[1], [1], [0], [0], [0, 0, 1, 0], [], []>} : vector<10x8xbf16>, vector<10x8xbf16>, vector<10x10xf32> -> vector<10x10xf32>
    %395 = arith.mulf %394, %304 : vector<10x10xf32>
    %cst_96 = arith.constant dense<0.000000e+00> : vector<10xf32>
    %396 = vector.multi_reduction <add>, %395, %cst_96 [1] : vector<10x10xf32> to vector<10xf32>
    %397 = vector.shape_cast %396 : vector<10xf32> to vector<10x1xf32>
    %cst_97 = arith.constant 0.000000e+00 : f32
    %398 = vector.broadcast %cst_97 : f32 to vector<10x10xf32>
    %399 = arith.cmpf ogt, %304, %398 : vector<10x10xf32>
    %cst_98 = arith.constant 0xFF800000 : f32
    %400 = vector.broadcast %cst_98 : f32 to vector<10x10xf32>
    %401 = arith.select %399, %394, %400 : vector<10x10xi1>, vector<10x10xf32>
    %cst_99 = arith.constant dense<0xFF800000> : vector<10xf32>
    %402 = vector.multi_reduction <maximumf>, %401, %cst_99 [1] : vector<10x10xf32> to vector<10xf32>
    %403 = vector.shape_cast %402 : vector<10xf32> to vector<10x1xf32>
    %cst_100 = arith.constant 1.000000e-01 : f32
    %404 = vector.broadcast %cst_100 : f32 to vector<10x1xf32>
    %405 = arith.mulf %397, %404 : vector<10x1xf32>
    %406 = arith.subf %403, %405 : vector<10x1xf32>
    %407 = vector.broadcast %406 : vector<10x1xf32> to vector<10x10xf32>
    %408 = arith.mulf %309, %407 : vector<10x10xf32>
    %cst_101 = arith.constant dense<0.000000e+00> : vector<10xf32>
    %409 = vector.multi_reduction <add>, %408, %cst_101 [0] : vector<10x10xf32> to vector<10xf32>
    %410 = vector.shape_cast %409 : vector<10xf32> to vector<1x10xf32>
    %411 = vector.broadcast %410 : vector<1x10xf32> to vector<10x10xf32>
    %412 = vector.broadcast %406 : vector<10x1xf32> to vector<10x10xf32>
    %413 = arith.cmpf ogt, %411, %412 : vector<10x10xf32>
    %414 = arith.cmpi ne, %311, %310 : vector<10x10xi32>
    %415 = arith.andi %413, %414 : vector<10x10xi1>
    %416 = vector.broadcast %410 : vector<1x10xf32> to vector<10x10xf32>
    %417 = vector.broadcast %406 : vector<10x1xf32> to vector<10x10xf32>
    %418 = arith.cmpf oeq, %416, %417 : vector<10x10xf32>
    %419 = arith.cmpi slt, %311, %310 : vector<10x10xi32>
    %420 = arith.andi %418, %419 : vector<10x10xi1>
    %421 = arith.ori %415, %420 : vector<10x10xi1>
    %422 = arith.extui %421 : vector<10x10xi1> to vector<10x10xi32>
    %423 = arith.sitofp %422 : vector<10x10xi32> to vector<10x10xf32>
    %cst_102 = arith.constant dense<0.000000e+00> : vector<10xf32>
    %424 = vector.multi_reduction <add>, %423, %cst_102 [1] : vector<10x10xf32> to vector<10xf32>
    %425 = vector.shape_cast %424 : vector<10xf32> to vector<10x1xf32>
    %cst_103 = arith.constant 6.000000e+00 : f32
    %426 = vector.broadcast %cst_103 : f32 to vector<10x1xf32>
    %427 = arith.cmpf olt, %425, %426 : vector<10x1xf32>
    %cst_104 = arith.constant dense<0.000000e+00> : vector<8xf32>
    %428 = vector.multi_reduction <add>, %391, %cst_104 [0] : vector<10x8xf32> to vector<8xf32>
    %429 = vector.shape_cast %428 : vector<8xf32> to vector<1x8xf32>
    %cst_105 = arith.constant 0.353553385 : f32
    %430 = vector.broadcast %cst_105 : f32 to vector<10x10xf32>
    %431 = arith.mulf %394, %430 : vector<10x10xf32>
    %cst_106 = arith.constant dense<0xFF800000> : vector<10xf32>
    %432 = vector.multi_reduction <maximumf>, %431, %cst_106 [1] : vector<10x10xf32> to vector<10xf32>
    %433 = vector.shape_cast %432 : vector<10xf32> to vector<10x1xf32>
    %434 = vector.broadcast %433 : vector<10x1xf32> to vector<10x10xf32>
    %435 = arith.subf %431, %434 : vector<10x10xf32>
    %436 = math.exp %435 : vector<10x10xf32>
    %cst_107 = arith.constant dense<0.000000e+00> : vector<10xf32>
    %437 = vector.multi_reduction <add>, %436, %cst_107 [1] : vector<10x10xf32> to vector<10xf32>
    %438 = vector.shape_cast %437 : vector<10xf32> to vector<10x1xf32>
    %439 = vector.broadcast %438 : vector<10x1xf32> to vector<10x10xf32>
    %440 = arith.divf %436, %439 : vector<10x10xf32>
    %441 = arith.truncf %440 : vector<10x10xf32> to vector<10x10xbf16>
    %442 = arith.truncf %391 : vector<10x8xf32> to vector<10x8xbf16>
    %cst_108 = arith.constant dense<0.000000e+00> : vector<10x8xf32>
    %443 = tpu.matmul %441, %442, %cst_108 {dimension_numbers = #tpu.dot_dimension_numbers<[1], [0], [0], [1], [0, 0, 1, 1], [], []>} : vector<10x10xbf16>, vector<10x8xbf16>, vector<10x8xf32> -> vector<10x8xf32>
    %444 = vector.shape_cast %427 : vector<10x1xi1> to vector<10x1xi1>
    %445 = vector.broadcast %444 : vector<10x1xi1> to vector<10x8xi1>
    %446 = vector.shape_cast %429 : vector<1x8xf32> to vector<1x8xf32>
    %447 = vector.broadcast %446 : vector<1x8xf32> to vector<10x8xf32>
    %448 = arith.select %445, %443, %447 : vector<10x8xi1>, vector<10x8xf32>
    %449 = vector.extract_strided_slice %448 {offsets = [0, 0], sizes = [5, 8], strides = [1, 1]} : vector<10x8xf32> to vector<5x8xf32>
    %450 = vector.extract_strided_slice %448 {offsets = [5, 0], sizes = [5, 8], strides = [1, 1]} : vector<10x8xf32> to vector<5x8xf32>
    %451 = tpu.concatenate %449, %450 in 1 : vector<5x8xf32>, vector<5x8xf32> -> vector<5x16xf32>
    %452 = tpu.concatenate %381, %451 in 0 : vector<5x16xf32>, vector<5x16xf32> -> vector<10x16xf32>
    %c208 = arith.constant 208 : index
    %c0_109 = arith.constant 0 : index
    %453 = vector.load %arg2[%c208, %c0_109] : memref<400x128xbf16, #tpu.memory_space<vmem>>, vector<16x16xbf16>
    %454 = arith.truncf %452 : vector<10x16xf32> to vector<10x16xbf16>
    %cst_110 = arith.constant dense<0.000000e+00> : vector<10x16xf32>
    %455 = tpu.matmul %454, %453, %cst_110 {dimension_numbers = #tpu.dot_dimension_numbers<[1], [0], [0], [1], [0, 0, 1, 1], [], []>} : vector<10x16xbf16>, vector<16x16xbf16>, vector<10x16xf32> -> vector<10x16xf32>
    %456 = arith.addf %297, %455 : vector<10x16xf32>
    %c96 = arith.constant 96 : index
    %c0_111 = arith.constant 0 : index
    %457 = vector.load %arg3[%c96, %c0_111] : memref<224x128xf32, #tpu.memory_space<vmem>>, vector<1x16xf32>
    %458 = vector.broadcast %457 : vector<1x16xf32> to vector<10x16xf32>
    %459 = arith.addf %456, %458 : vector<10x16xf32>
    %c104 = arith.constant 104 : index
    %c0_112 = arith.constant 0 : index
    %460 = vector.load %arg3[%c104, %c0_112] : memref<224x128xf32, #tpu.memory_space<vmem>>, vector<1x16xf32>
    %c112_113 = arith.constant 112 : index
    %c0_114 = arith.constant 0 : index
    %461 = vector.load %arg3[%c112_113, %c0_114] : memref<224x128xf32, #tpu.memory_space<vmem>>, vector<1x16xf32>
    %cst_115 = arith.constant dense<0.000000e+00> : vector<10xf32>
    %462 = vector.multi_reduction <add>, %459, %cst_115 [1] : vector<10x16xf32> to vector<10xf32>
    %463 = vector.shape_cast %462 : vector<10xf32> to vector<10x1xf32>
    %cst_116 = arith.constant 1.600000e+01 : f32
    %464 = vector.broadcast %cst_116 : f32 to vector<10x1xf32>
    %465 = arith.divf %463, %464 : vector<10x1xf32>
    %466 = vector.broadcast %465 : vector<10x1xf32> to vector<10x16xf32>
    %467 = arith.subf %459, %466 : vector<10x16xf32>
    %468 = arith.mulf %467, %467 : vector<10x16xf32>
    %cst_117 = arith.constant dense<0.000000e+00> : vector<10xf32>
    %469 = vector.multi_reduction <add>, %468, %cst_117 [1] : vector<10x16xf32> to vector<10xf32>
    %470 = vector.shape_cast %469 : vector<10xf32> to vector<10x1xf32>
    %cst_118 = arith.constant 1.600000e+01 : f32
    %471 = vector.broadcast %cst_118 : f32 to vector<10x1xf32>
    %472 = arith.divf %470, %471 : vector<10x1xf32>
    %473 = vector.broadcast %465 : vector<10x1xf32> to vector<10x16xf32>
    %474 = arith.subf %459, %473 : vector<10x16xf32>
    %cst_119 = arith.constant 9.99999974E-6 : f32
    %475 = vector.broadcast %cst_119 : f32 to vector<10x1xf32>
    %476 = arith.addf %472, %475 : vector<10x1xf32>
    %477 = math.rsqrt %476 : vector<10x1xf32>
    %478 = vector.broadcast %477 : vector<10x1xf32> to vector<10x16xf32>
    %479 = arith.mulf %474, %478 : vector<10x16xf32>
    %480 = vector.broadcast %460 : vector<1x16xf32> to vector<10x16xf32>
    %481 = arith.mulf %479, %480 : vector<10x16xf32>
    %482 = vector.broadcast %461 : vector<1x16xf32> to vector<10x16xf32>
    %483 = arith.addf %481, %482 : vector<10x16xf32>
    %c224 = arith.constant 224 : index
    %c0_120 = arith.constant 0 : index
    %484 = vector.load %arg2[%c224, %c0_120] : memref<400x128xbf16, #tpu.memory_space<vmem>>, vector<16x32xbf16>
    %485 = arith.truncf %483 : vector<10x16xf32> to vector<10x16xbf16>
    %cst_121 = arith.constant dense<0.000000e+00> : vector<10x32xf32>
    %486 = tpu.matmul %485, %484, %cst_121 {dimension_numbers = #tpu.dot_dimension_numbers<[1], [0], [0], [1], [0, 0, 1, 1], [], []>} : vector<10x16xbf16>, vector<16x32xbf16>, vector<10x32xf32> -> vector<10x32xf32>
    %c120 = arith.constant 120 : index
    %c0_122 = arith.constant 0 : index
    %487 = vector.load %arg3[%c120, %c0_122] : memref<224x128xf32, #tpu.memory_space<vmem>>, vector<1x32xf32>
    %488 = vector.broadcast %487 : vector<1x32xf32> to vector<10x32xf32>
    %489 = arith.addf %486, %488 : vector<10x32xf32>
    %cst_123 = arith.constant 5.000000e-01 : f32
    %490 = vector.broadcast %cst_123 : f32 to vector<10x32xf32>
    %491 = arith.mulf %490, %489 : vector<10x32xf32>
    %cst_124 = arith.constant 4.471500e-02 : f32
    %492 = vector.broadcast %cst_124 : f32 to vector<10x32xf32>
    %493 = arith.mulf %492, %489 : vector<10x32xf32>
    %494 = arith.mulf %493, %489 : vector<10x32xf32>
    %495 = arith.mulf %494, %489 : vector<10x32xf32>
    %496 = arith.addf %489, %495 : vector<10x32xf32>
    %cst_125 = arith.constant 0.797884583 : f32
    %497 = vector.broadcast %cst_125 : f32 to vector<10x32xf32>
    %498 = arith.mulf %497, %496 : vector<10x32xf32>
    %499 = math.tanh %498 : vector<10x32xf32>
    %cst_126 = arith.constant 1.000000e+00 : f32
    %500 = vector.broadcast %cst_126 : f32 to vector<10x32xf32>
    %501 = arith.addf %500, %499 : vector<10x32xf32>
    %502 = arith.mulf %491, %501 : vector<10x32xf32>
    %c240 = arith.constant 240 : index
    %c0_127 = arith.constant 0 : index
    %503 = vector.load %arg2[%c240, %c0_127] : memref<400x128xbf16, #tpu.memory_space<vmem>>, vector<32x16xbf16>
    %504 = arith.truncf %502 : vector<10x32xf32> to vector<10x32xbf16>
    %cst_128 = arith.constant dense<0.000000e+00> : vector<10x16xf32>
    %505 = tpu.matmul %504, %503, %cst_128 {dimension_numbers = #tpu.dot_dimension_numbers<[1], [0], [0], [1], [0, 0, 1, 1], [], []>} : vector<10x32xbf16>, vector<32x16xbf16>, vector<10x16xf32> -> vector<10x16xf32>
    %c128_129 = arith.constant 128 : index
    %c0_130 = arith.constant 0 : index
    %506 = vector.load %arg3[%c128_129, %c0_130] : memref<224x128xf32, #tpu.memory_space<vmem>>, vector<1x16xf32>
    %507 = vector.broadcast %506 : vector<1x16xf32> to vector<10x16xf32>
    %508 = arith.addf %505, %507 : vector<10x16xf32>
    %509 = arith.addf %483, %508 : vector<10x16xf32>
    %c136 = arith.constant 136 : index
    %c0_131 = arith.constant 0 : index
    %510 = vector.load %arg3[%c136, %c0_131] : memref<224x128xf32, #tpu.memory_space<vmem>>, vector<1x16xf32>
    %c144_132 = arith.constant 144 : index
    %c0_133 = arith.constant 0 : index
    %511 = vector.load %arg3[%c144_132, %c0_133] : memref<224x128xf32, #tpu.memory_space<vmem>>, vector<1x16xf32>
    %cst_134 = arith.constant dense<0.000000e+00> : vector<10xf32>
    %512 = vector.multi_reduction <add>, %509, %cst_134 [1] : vector<10x16xf32> to vector<10xf32>
    %513 = vector.shape_cast %512 : vector<10xf32> to vector<10x1xf32>
    %cst_135 = arith.constant 1.600000e+01 : f32
    %514 = vector.broadcast %cst_135 : f32 to vector<10x1xf32>
    %515 = arith.divf %513, %514 : vector<10x1xf32>
    %516 = vector.broadcast %515 : vector<10x1xf32> to vector<10x16xf32>
    %517 = arith.subf %509, %516 : vector<10x16xf32>
    %518 = arith.mulf %517, %517 : vector<10x16xf32>
    %cst_136 = arith.constant dense<0.000000e+00> : vector<10xf32>
    %519 = vector.multi_reduction <add>, %518, %cst_136 [1] : vector<10x16xf32> to vector<10xf32>
    %520 = vector.shape_cast %519 : vector<10xf32> to vector<10x1xf32>
    %cst_137 = arith.constant 1.600000e+01 : f32
    %521 = vector.broadcast %cst_137 : f32 to vector<10x1xf32>
    %522 = arith.divf %520, %521 : vector<10x1xf32>
    %523 = vector.broadcast %515 : vector<10x1xf32> to vector<10x16xf32>
    %524 = arith.subf %509, %523 : vector<10x16xf32>
    %cst_138 = arith.constant 9.99999974E-6 : f32
    %525 = vector.broadcast %cst_138 : f32 to vector<10x1xf32>
    %526 = arith.addf %522, %525 : vector<10x1xf32>
    %527 = math.rsqrt %526 : vector<10x1xf32>
    %528 = vector.broadcast %527 : vector<10x1xf32> to vector<10x16xf32>
    %529 = arith.mulf %524, %528 : vector<10x16xf32>
    %530 = vector.broadcast %510 : vector<1x16xf32> to vector<10x16xf32>
    %531 = arith.mulf %529, %530 : vector<10x16xf32>
    %532 = vector.broadcast %511 : vector<1x16xf32> to vector<10x16xf32>
    %533 = arith.addf %531, %532 : vector<10x16xf32>
    %c192_139 = arith.constant 192 : index
    %c0_140 = arith.constant 0 : index
    %534 = vector.load %arg3[%c192_139, %c0_140] : memref<224x128xf32, #tpu.memory_space<vmem>>, vector<1x16xf32>
    %c200 = arith.constant 200 : index
    %c0_141 = arith.constant 0 : index
    %535 = vector.load %arg3[%c200, %c0_141] : memref<224x128xf32, #tpu.memory_space<vmem>>, vector<1x16xf32>
    %cst_142 = arith.constant dense<0.000000e+00> : vector<10xf32>
    %536 = vector.multi_reduction <add>, %533, %cst_142 [1] : vector<10x16xf32> to vector<10xf32>
    %537 = vector.shape_cast %536 : vector<10xf32> to vector<10x1xf32>
    %cst_143 = arith.constant 1.600000e+01 : f32
    %538 = vector.broadcast %cst_143 : f32 to vector<10x1xf32>
    %539 = arith.divf %537, %538 : vector<10x1xf32>
    %540 = vector.broadcast %539 : vector<10x1xf32> to vector<10x16xf32>
    %541 = arith.subf %533, %540 : vector<10x16xf32>
    %542 = arith.mulf %541, %541 : vector<10x16xf32>
    %cst_144 = arith.constant dense<0.000000e+00> : vector<10xf32>
    %543 = vector.multi_reduction <add>, %542, %cst_144 [1] : vector<10x16xf32> to vector<10xf32>
    %544 = vector.shape_cast %543 : vector<10xf32> to vector<10x1xf32>
    %cst_145 = arith.constant 1.600000e+01 : f32
    %545 = vector.broadcast %cst_145 : f32 to vector<10x1xf32>
    %546 = arith.divf %544, %545 : vector<10x1xf32>
    %547 = vector.broadcast %539 : vector<10x1xf32> to vector<10x16xf32>
    %548 = arith.subf %533, %547 : vector<10x16xf32>
    %cst_146 = arith.constant 9.99999974E-6 : f32
    %549 = vector.broadcast %cst_146 : f32 to vector<10x1xf32>
    %550 = arith.addf %546, %549 : vector<10x1xf32>
    %551 = math.rsqrt %550 : vector<10x1xf32>
    %552 = vector.broadcast %551 : vector<10x1xf32> to vector<10x16xf32>
    %553 = arith.mulf %548, %552 : vector<10x16xf32>
    %554 = vector.broadcast %534 : vector<1x16xf32> to vector<10x16xf32>
    %555 = arith.mulf %553, %554 : vector<10x16xf32>
    %556 = vector.broadcast %535 : vector<1x16xf32> to vector<10x16xf32>
    %557 = arith.addf %555, %556 : vector<10x16xf32>
    %c1 = arith.constant 1 : index
    %c0_147 = arith.constant 0 : index
    %c0_148 = arith.constant 0 : index
    %558 = vector.load %arg0[%c1, %c0_147, %c0_148] : memref<2x18x1xi32, #tpu.memory_space<vmem>>, vector<1x18x1xi32>
    %559 = vector.shape_cast %558 : vector<1x18x1xi32> to vector<18x1xi32>
    %560 = tpu.iota {dimensions = array<i32: 1>} : vector<18x100xi32>
    %561 = vector.broadcast %559 : vector<18x1xi32> to vector<18x100xi32>
    %562 = arith.cmpi eq, %560, %561 : vector<18x100xi32>
    %563 = arith.extui %562 : vector<18x100xi1> to vector<18x100xi32>
    %564 = arith.sitofp %563 : vector<18x100xi32> to vector<18x100xf32>
    %565 = arith.truncf %564 : vector<18x100xf32> to vector<18x100xbf16>
    %cst_149 = arith.constant dense<0.000000e+00> : vector<18x16xf32>
    %566 = tpu.matmul %565, %7, %cst_149 {dimension_numbers = #tpu.dot_dimension_numbers<[1], [0], [0], [1], [0, 0, 1, 1], [], []>} : vector<18x100xbf16>, vector<100x16xbf16>, vector<18x16xf32> -> vector<18x16xf32>
    %567 = arith.truncf %566 : vector<18x16xf32> to vector<18x16xbf16>
    %cst_150 = arith.constant dense<0.000000e+00> : vector<18x48xf32>
    %568 = tpu.matmul %567, %10, %cst_150 {dimension_numbers = #tpu.dot_dimension_numbers<[1], [0], [0], [1], [0, 0, 1, 1], [], []>} : vector<18x16xbf16>, vector<16x48xbf16>, vector<18x48xf32> -> vector<18x48xf32>
    %569 = vector.broadcast %13 : vector<1x48xf32> to vector<18x48xf32>
    %570 = arith.addf %568, %569 : vector<18x48xf32>
    %571 = tpu.iota {dimensions = array<i32: 0>} : vector<18x18xi32>
    %572 = tpu.iota {dimensions = array<i32: 1>} : vector<18x18xi32>
    %573 = arith.cmpi eq, %571, %572 : vector<18x18xi32>
    %574 = arith.extui %573 : vector<18x18xi1> to vector<18x18xi32>
    %575 = arith.sitofp %574 : vector<18x18xi32> to vector<18x18xf32>
    %576 = tpu.iota {dimensions = array<i32: 0>} : vector<18x18xi32>
    %577 = tpu.iota {dimensions = array<i32: 1>} : vector<18x18xi32>
    %578 = vector.extract_strided_slice %570 {offsets = [0, 0], sizes = [9, 48], strides = [1, 1]} : vector<18x48xf32> to vector<9x48xf32>
    %579 = vector.extract_strided_slice %578 {offsets = [0, 0], sizes = [9, 8], strides = [1, 1]} : vector<9x48xf32> to vector<9x8xf32>
    %580 = vector.extract_strided_slice %578 {offsets = [0, 8], sizes = [9, 8], strides = [1, 1]} : vector<9x48xf32> to vector<9x8xf32>
    %581 = tpu.concatenate %579, %580 in 0 : vector<9x8xf32>, vector<9x8xf32> -> vector<18x8xf32>
    %582 = vector.extract_strided_slice %578 {offsets = [0, 16], sizes = [9, 8], strides = [1, 1]} : vector<9x48xf32> to vector<9x8xf32>
    %583 = vector.extract_strided_slice %578 {offsets = [0, 24], sizes = [9, 8], strides = [1, 1]} : vector<9x48xf32> to vector<9x8xf32>
    %584 = tpu.concatenate %582, %583 in 0 : vector<9x8xf32>, vector<9x8xf32> -> vector<18x8xf32>
    %585 = vector.extract_strided_slice %578 {offsets = [0, 32], sizes = [9, 8], strides = [1, 1]} : vector<9x48xf32> to vector<9x8xf32>
    %586 = vector.extract_strided_slice %578 {offsets = [0, 40], sizes = [9, 8], strides = [1, 1]} : vector<9x48xf32> to vector<9x8xf32>
    %587 = tpu.concatenate %585, %586 in 0 : vector<9x8xf32>, vector<9x8xf32> -> vector<18x8xf32>
    %588 = arith.truncf %581 : vector<18x8xf32> to vector<18x8xbf16>
    %589 = arith.truncf %584 : vector<18x8xf32> to vector<18x8xbf16>
    %cst_151 = arith.constant dense<0.000000e+00> : vector<18x18xf32>
    %590 = tpu.matmul %588, %589, %cst_151 {dimension_numbers = #tpu.dot_dimension_numbers<[1], [1], [0], [0], [0, 0, 1, 0], [], []>} : vector<18x8xbf16>, vector<18x8xbf16>, vector<18x18xf32> -> vector<18x18xf32>
    %591 = arith.mulf %590, %16 : vector<18x18xf32>
    %cst_152 = arith.constant dense<0.000000e+00> : vector<18xf32>
    %592 = vector.multi_reduction <add>, %591, %cst_152 [1] : vector<18x18xf32> to vector<18xf32>
    %593 = vector.shape_cast %592 : vector<18xf32> to vector<18x1xf32>
    %cst_153 = arith.constant 0.000000e+00 : f32
    %594 = vector.broadcast %cst_153 : f32 to vector<18x18xf32>
    %595 = arith.cmpf ogt, %16, %594 : vector<18x18xf32>
    %cst_154 = arith.constant 0xFF800000 : f32
    %596 = vector.broadcast %cst_154 : f32 to vector<18x18xf32>
    %597 = arith.select %595, %590, %596 : vector<18x18xi1>, vector<18x18xf32>
    %cst_155 = arith.constant dense<0xFF800000> : vector<18xf32>
    %598 = vector.multi_reduction <maximumf>, %597, %cst_155 [1] : vector<18x18xf32> to vector<18xf32>
    %599 = vector.shape_cast %598 : vector<18xf32> to vector<18x1xf32>
    %cst_156 = arith.constant 0.055555556 : f32
    %600 = vector.broadcast %cst_156 : f32 to vector<18x1xf32>
    %601 = arith.mulf %593, %600 : vector<18x1xf32>
    %602 = arith.subf %599, %601 : vector<18x1xf32>
    %603 = vector.broadcast %602 : vector<18x1xf32> to vector<18x18xf32>
    %604 = arith.mulf %575, %603 : vector<18x18xf32>
    %cst_157 = arith.constant dense<0.000000e+00> : vector<18xf32>
    %605 = vector.multi_reduction <add>, %604, %cst_157 [0] : vector<18x18xf32> to vector<18xf32>
    %606 = vector.shape_cast %605 : vector<18xf32> to vector<1x18xf32>
    %607 = vector.broadcast %606 : vector<1x18xf32> to vector<18x18xf32>
    %608 = vector.broadcast %602 : vector<18x1xf32> to vector<18x18xf32>
    %609 = arith.cmpf ogt, %607, %608 : vector<18x18xf32>
    %610 = arith.cmpi ne, %577, %576 : vector<18x18xi32>
    %611 = arith.andi %609, %610 : vector<18x18xi1>
    %612 = vector.broadcast %606 : vector<1x18xf32> to vector<18x18xf32>
    %613 = vector.broadcast %602 : vector<18x1xf32> to vector<18x18xf32>
    %614 = arith.cmpf oeq, %612, %613 : vector<18x18xf32>
    %615 = arith.cmpi slt, %577, %576 : vector<18x18xi32>
    %616 = arith.andi %614, %615 : vector<18x18xi1>
    %617 = arith.ori %611, %616 : vector<18x18xi1>
    %618 = arith.extui %617 : vector<18x18xi1> to vector<18x18xi32>
    %619 = arith.sitofp %618 : vector<18x18xi32> to vector<18x18xf32>
    %cst_158 = arith.constant dense<0.000000e+00> : vector<18xf32>
    %620 = vector.multi_reduction <add>, %619, %cst_158 [1] : vector<18x18xf32> to vector<18xf32>
    %621 = vector.shape_cast %620 : vector<18xf32> to vector<18x1xf32>
    %cst_159 = arith.constant 6.000000e+00 : f32
    %622 = vector.broadcast %cst_159 : f32 to vector<18x1xf32>
    %623 = arith.cmpf olt, %621, %622 : vector<18x1xf32>
    %cst_160 = arith.constant dense<0.000000e+00> : vector<8xf32>
    %624 = vector.multi_reduction <add>, %587, %cst_160 [0] : vector<18x8xf32> to vector<8xf32>
    %625 = vector.shape_cast %624 : vector<8xf32> to vector<1x8xf32>
    %cst_161 = arith.constant 0.353553385 : f32
    %626 = vector.broadcast %cst_161 : f32 to vector<18x18xf32>
    %627 = arith.mulf %590, %626 : vector<18x18xf32>
    %cst_162 = arith.constant dense<0xFF800000> : vector<18xf32>
    %628 = vector.multi_reduction <maximumf>, %627, %cst_162 [1] : vector<18x18xf32> to vector<18xf32>
    %629 = vector.shape_cast %628 : vector<18xf32> to vector<18x1xf32>
    %630 = vector.broadcast %629 : vector<18x1xf32> to vector<18x18xf32>
    %631 = arith.subf %627, %630 : vector<18x18xf32>
    %632 = math.exp %631 : vector<18x18xf32>
    %cst_163 = arith.constant dense<0.000000e+00> : vector<18xf32>
    %633 = vector.multi_reduction <add>, %632, %cst_163 [1] : vector<18x18xf32> to vector<18xf32>
    %634 = vector.shape_cast %633 : vector<18xf32> to vector<18x1xf32>
    %635 = vector.broadcast %634 : vector<18x1xf32> to vector<18x18xf32>
    %636 = arith.divf %632, %635 : vector<18x18xf32>
    %637 = arith.truncf %636 : vector<18x18xf32> to vector<18x18xbf16>
    %638 = arith.truncf %587 : vector<18x8xf32> to vector<18x8xbf16>
    %cst_164 = arith.constant dense<0.000000e+00> : vector<18x8xf32>
    %639 = tpu.matmul %637, %638, %cst_164 {dimension_numbers = #tpu.dot_dimension_numbers<[1], [0], [0], [1], [0, 0, 1, 1], [], []>} : vector<18x18xbf16>, vector<18x8xbf16>, vector<18x8xf32> -> vector<18x8xf32>
    %640 = vector.shape_cast %623 : vector<18x1xi1> to vector<18x1xi1>
    %641 = vector.broadcast %640 : vector<18x1xi1> to vector<18x8xi1>
    %642 = vector.shape_cast %625 : vector<1x8xf32> to vector<1x8xf32>
    %643 = vector.broadcast %642 : vector<1x8xf32> to vector<18x8xf32>
    %644 = arith.select %641, %639, %643 : vector<18x8xi1>, vector<18x8xf32>
    %645 = vector.extract_strided_slice %644 {offsets = [0, 0], sizes = [9, 8], strides = [1, 1]} : vector<18x8xf32> to vector<9x8xf32>
    %646 = vector.extract_strided_slice %644 {offsets = [9, 0], sizes = [9, 8], strides = [1, 1]} : vector<18x8xf32> to vector<9x8xf32>
    %647 = tpu.concatenate %645, %646 in 1 : vector<9x8xf32>, vector<9x8xf32> -> vector<9x16xf32>
    %648 = vector.extract_strided_slice %570 {offsets = [9, 0], sizes = [9, 48], strides = [1, 1]} : vector<18x48xf32> to vector<9x48xf32>
    %649 = vector.extract_strided_slice %648 {offsets = [0, 0], sizes = [9, 8], strides = [1, 1]} : vector<9x48xf32> to vector<9x8xf32>
    %650 = vector.extract_strided_slice %648 {offsets = [0, 8], sizes = [9, 8], strides = [1, 1]} : vector<9x48xf32> to vector<9x8xf32>
    %651 = tpu.concatenate %649, %650 in 0 : vector<9x8xf32>, vector<9x8xf32> -> vector<18x8xf32>
    %652 = vector.extract_strided_slice %648 {offsets = [0, 16], sizes = [9, 8], strides = [1, 1]} : vector<9x48xf32> to vector<9x8xf32>
    %653 = vector.extract_strided_slice %648 {offsets = [0, 24], sizes = [9, 8], strides = [1, 1]} : vector<9x48xf32> to vector<9x8xf32>
    %654 = tpu.concatenate %652, %653 in 0 : vector<9x8xf32>, vector<9x8xf32> -> vector<18x8xf32>
    %655 = vector.extract_strided_slice %648 {offsets = [0, 32], sizes = [9, 8], strides = [1, 1]} : vector<9x48xf32> to vector<9x8xf32>
    %656 = vector.extract_strided_slice %648 {offsets = [0, 40], sizes = [9, 8], strides = [1, 1]} : vector<9x48xf32> to vector<9x8xf32>
    %657 = tpu.concatenate %655, %656 in 0 : vector<9x8xf32>, vector<9x8xf32> -> vector<18x8xf32>
    %658 = arith.truncf %651 : vector<18x8xf32> to vector<18x8xbf16>
    %659 = arith.truncf %654 : vector<18x8xf32> to vector<18x8xbf16>
    %cst_165 = arith.constant dense<0.000000e+00> : vector<18x18xf32>
    %660 = tpu.matmul %658, %659, %cst_165 {dimension_numbers = #tpu.dot_dimension_numbers<[1], [1], [0], [0], [0, 0, 1, 0], [], []>} : vector<18x8xbf16>, vector<18x8xbf16>, vector<18x18xf32> -> vector<18x18xf32>
    %661 = arith.mulf %660, %16 : vector<18x18xf32>
    %cst_166 = arith.constant dense<0.000000e+00> : vector<18xf32>
    %662 = vector.multi_reduction <add>, %661, %cst_166 [1] : vector<18x18xf32> to vector<18xf32>
    %663 = vector.shape_cast %662 : vector<18xf32> to vector<18x1xf32>
    %cst_167 = arith.constant 0.000000e+00 : f32
    %664 = vector.broadcast %cst_167 : f32 to vector<18x18xf32>
    %665 = arith.cmpf ogt, %16, %664 : vector<18x18xf32>
    %cst_168 = arith.constant 0xFF800000 : f32
    %666 = vector.broadcast %cst_168 : f32 to vector<18x18xf32>
    %667 = arith.select %665, %660, %666 : vector<18x18xi1>, vector<18x18xf32>
    %cst_169 = arith.constant dense<0xFF800000> : vector<18xf32>
    %668 = vector.multi_reduction <maximumf>, %667, %cst_169 [1] : vector<18x18xf32> to vector<18xf32>
    %669 = vector.shape_cast %668 : vector<18xf32> to vector<18x1xf32>
    %cst_170 = arith.constant 0.055555556 : f32
    %670 = vector.broadcast %cst_170 : f32 to vector<18x1xf32>
    %671 = arith.mulf %663, %670 : vector<18x1xf32>
    %672 = arith.subf %669, %671 : vector<18x1xf32>
    %673 = vector.broadcast %672 : vector<18x1xf32> to vector<18x18xf32>
    %674 = arith.mulf %575, %673 : vector<18x18xf32>
    %cst_171 = arith.constant dense<0.000000e+00> : vector<18xf32>
    %675 = vector.multi_reduction <add>, %674, %cst_171 [0] : vector<18x18xf32> to vector<18xf32>
    %676 = vector.shape_cast %675 : vector<18xf32> to vector<1x18xf32>
    %677 = vector.broadcast %676 : vector<1x18xf32> to vector<18x18xf32>
    %678 = vector.broadcast %672 : vector<18x1xf32> to vector<18x18xf32>
    %679 = arith.cmpf ogt, %677, %678 : vector<18x18xf32>
    %680 = arith.cmpi ne, %577, %576 : vector<18x18xi32>
    %681 = arith.andi %679, %680 : vector<18x18xi1>
    %682 = vector.broadcast %676 : vector<1x18xf32> to vector<18x18xf32>
    %683 = vector.broadcast %672 : vector<18x1xf32> to vector<18x18xf32>
    %684 = arith.cmpf oeq, %682, %683 : vector<18x18xf32>
    %685 = arith.cmpi slt, %577, %576 : vector<18x18xi32>
    %686 = arith.andi %684, %685 : vector<18x18xi1>
    %687 = arith.ori %681, %686 : vector<18x18xi1>
    %688 = arith.extui %687 : vector<18x18xi1> to vector<18x18xi32>
    %689 = arith.sitofp %688 : vector<18x18xi32> to vector<18x18xf32>
    %cst_172 = arith.constant dense<0.000000e+00> : vector<18xf32>
    %690 = vector.multi_reduction <add>, %689, %cst_172 [1] : vector<18x18xf32> to vector<18xf32>
    %691 = vector.shape_cast %690 : vector<18xf32> to vector<18x1xf32>
    %cst_173 = arith.constant 6.000000e+00 : f32
    %692 = vector.broadcast %cst_173 : f32 to vector<18x1xf32>
    %693 = arith.cmpf olt, %691, %692 : vector<18x1xf32>
    %cst_174 = arith.constant dense<0.000000e+00> : vector<8xf32>
    %694 = vector.multi_reduction <add>, %657, %cst_174 [0] : vector<18x8xf32> to vector<8xf32>
    %695 = vector.shape_cast %694 : vector<8xf32> to vector<1x8xf32>
    %cst_175 = arith.constant 0.353553385 : f32
    %696 = vector.broadcast %cst_175 : f32 to vector<18x18xf32>
    %697 = arith.mulf %660, %696 : vector<18x18xf32>
    %cst_176 = arith.constant dense<0xFF800000> : vector<18xf32>
    %698 = vector.multi_reduction <maximumf>, %697, %cst_176 [1] : vector<18x18xf32> to vector<18xf32>
    %699 = vector.shape_cast %698 : vector<18xf32> to vector<18x1xf32>
    %700 = vector.broadcast %699 : vector<18x1xf32> to vector<18x18xf32>
    %701 = arith.subf %697, %700 : vector<18x18xf32>
    %702 = math.exp %701 : vector<18x18xf32>
    %cst_177 = arith.constant dense<0.000000e+00> : vector<18xf32>
    %703 = vector.multi_reduction <add>, %702, %cst_177 [1] : vector<18x18xf32> to vector<18xf32>
    %704 = vector.shape_cast %703 : vector<18xf32> to vector<18x1xf32>
    %705 = vector.broadcast %704 : vector<18x1xf32> to vector<18x18xf32>
    %706 = arith.divf %702, %705 : vector<18x18xf32>
    %707 = arith.truncf %706 : vector<18x18xf32> to vector<18x18xbf16>
    %708 = arith.truncf %657 : vector<18x8xf32> to vector<18x8xbf16>
    %cst_178 = arith.constant dense<0.000000e+00> : vector<18x8xf32>
    %709 = tpu.matmul %707, %708, %cst_178 {dimension_numbers = #tpu.dot_dimension_numbers<[1], [0], [0], [1], [0, 0, 1, 1], [], []>} : vector<18x18xbf16>, vector<18x8xbf16>, vector<18x8xf32> -> vector<18x8xf32>
    %710 = vector.shape_cast %693 : vector<18x1xi1> to vector<18x1xi1>
    %711 = vector.broadcast %710 : vector<18x1xi1> to vector<18x8xi1>
    %712 = vector.shape_cast %695 : vector<1x8xf32> to vector<1x8xf32>
    %713 = vector.broadcast %712 : vector<1x8xf32> to vector<18x8xf32>
    %714 = arith.select %711, %709, %713 : vector<18x8xi1>, vector<18x8xf32>
    %715 = vector.extract_strided_slice %714 {offsets = [0, 0], sizes = [9, 8], strides = [1, 1]} : vector<18x8xf32> to vector<9x8xf32>
    %716 = vector.extract_strided_slice %714 {offsets = [9, 0], sizes = [9, 8], strides = [1, 1]} : vector<18x8xf32> to vector<9x8xf32>
    %717 = tpu.concatenate %715, %716 in 1 : vector<9x8xf32>, vector<9x8xf32> -> vector<9x16xf32>
    %718 = tpu.concatenate %647, %717 in 0 : vector<9x16xf32>, vector<9x16xf32> -> vector<18x16xf32>
    %719 = arith.truncf %718 : vector<18x16xf32> to vector<18x16xbf16>
    %cst_179 = arith.constant dense<0.000000e+00> : vector<18x16xf32>
    %720 = tpu.matmul %719, %165, %cst_179 {dimension_numbers = #tpu.dot_dimension_numbers<[1], [0], [0], [1], [0, 0, 1, 1], [], []>} : vector<18x16xbf16>, vector<16x16xbf16>, vector<18x16xf32> -> vector<18x16xf32>
    %721 = arith.addf %566, %720 : vector<18x16xf32>
    %722 = vector.broadcast %169 : vector<1x16xf32> to vector<18x16xf32>
    %723 = arith.addf %721, %722 : vector<18x16xf32>
    %cst_180 = arith.constant dense<0.000000e+00> : vector<18xf32>
    %724 = vector.multi_reduction <add>, %723, %cst_180 [1] : vector<18x16xf32> to vector<18xf32>
    %725 = vector.shape_cast %724 : vector<18xf32> to vector<18x1xf32>
    %cst_181 = arith.constant 1.600000e+01 : f32
    %726 = vector.broadcast %cst_181 : f32 to vector<18x1xf32>
    %727 = arith.divf %725, %726 : vector<18x1xf32>
    %728 = vector.broadcast %727 : vector<18x1xf32> to vector<18x16xf32>
    %729 = arith.subf %723, %728 : vector<18x16xf32>
    %730 = arith.mulf %729, %729 : vector<18x16xf32>
    %cst_182 = arith.constant dense<0.000000e+00> : vector<18xf32>
    %731 = vector.multi_reduction <add>, %730, %cst_182 [1] : vector<18x16xf32> to vector<18xf32>
    %732 = vector.shape_cast %731 : vector<18xf32> to vector<18x1xf32>
    %cst_183 = arith.constant 1.600000e+01 : f32
    %733 = vector.broadcast %cst_183 : f32 to vector<18x1xf32>
    %734 = arith.divf %732, %733 : vector<18x1xf32>
    %735 = vector.broadcast %727 : vector<18x1xf32> to vector<18x16xf32>
    %736 = arith.subf %723, %735 : vector<18x16xf32>
    %cst_184 = arith.constant 9.99999974E-6 : f32
    %737 = vector.broadcast %cst_184 : f32 to vector<18x1xf32>
    %738 = arith.addf %734, %737 : vector<18x1xf32>
    %739 = math.rsqrt %738 : vector<18x1xf32>
    %740 = vector.broadcast %739 : vector<18x1xf32> to vector<18x16xf32>
    %741 = arith.mulf %736, %740 : vector<18x16xf32>
    %742 = vector.broadcast %172 : vector<1x16xf32> to vector<18x16xf32>
    %743 = arith.mulf %741, %742 : vector<18x16xf32>
    %744 = vector.broadcast %173 : vector<1x16xf32> to vector<18x16xf32>
    %745 = arith.addf %743, %744 : vector<18x16xf32>
    %746 = arith.truncf %745 : vector<18x16xf32> to vector<18x16xbf16>
    %cst_185 = arith.constant dense<0.000000e+00> : vector<18x32xf32>
    %747 = tpu.matmul %746, %196, %cst_185 {dimension_numbers = #tpu.dot_dimension_numbers<[1], [0], [0], [1], [0, 0, 1, 1], [], []>} : vector<18x16xbf16>, vector<16x32xbf16>, vector<18x32xf32> -> vector<18x32xf32>
    %748 = vector.broadcast %199 : vector<1x32xf32> to vector<18x32xf32>
    %749 = arith.addf %747, %748 : vector<18x32xf32>
    %cst_186 = arith.constant 5.000000e-01 : f32
    %750 = vector.broadcast %cst_186 : f32 to vector<18x32xf32>
    %751 = arith.mulf %750, %749 : vector<18x32xf32>
    %cst_187 = arith.constant 4.471500e-02 : f32
    %752 = vector.broadcast %cst_187 : f32 to vector<18x32xf32>
    %753 = arith.mulf %752, %749 : vector<18x32xf32>
    %754 = arith.mulf %753, %749 : vector<18x32xf32>
    %755 = arith.mulf %754, %749 : vector<18x32xf32>
    %756 = arith.addf %749, %755 : vector<18x32xf32>
    %cst_188 = arith.constant 0.797884583 : f32
    %757 = vector.broadcast %cst_188 : f32 to vector<18x32xf32>
    %758 = arith.mulf %757, %756 : vector<18x32xf32>
    %759 = math.tanh %758 : vector<18x32xf32>
    %cst_189 = arith.constant 1.000000e+00 : f32
    %760 = vector.broadcast %cst_189 : f32 to vector<18x32xf32>
    %761 = arith.addf %760, %759 : vector<18x32xf32>
    %762 = arith.mulf %751, %761 : vector<18x32xf32>
    %763 = arith.truncf %762 : vector<18x32xf32> to vector<18x32xbf16>
    %cst_190 = arith.constant dense<0.000000e+00> : vector<18x16xf32>
    %764 = tpu.matmul %763, %215, %cst_190 {dimension_numbers = #tpu.dot_dimension_numbers<[1], [0], [0], [1], [0, 0, 1, 1], [], []>} : vector<18x32xbf16>, vector<32x16xbf16>, vector<18x16xf32> -> vector<18x16xf32>
    %765 = vector.broadcast %218 : vector<1x16xf32> to vector<18x16xf32>
    %766 = arith.addf %764, %765 : vector<18x16xf32>
    %767 = arith.addf %745, %766 : vector<18x16xf32>
    %cst_191 = arith.constant dense<0.000000e+00> : vector<18xf32>
    %768 = vector.multi_reduction <add>, %767, %cst_191 [1] : vector<18x16xf32> to vector<18xf32>
    %769 = vector.shape_cast %768 : vector<18xf32> to vector<18x1xf32>
    %cst_192 = arith.constant 1.600000e+01 : f32
    %770 = vector.broadcast %cst_192 : f32 to vector<18x1xf32>
    %771 = arith.divf %769, %770 : vector<18x1xf32>
    %772 = vector.broadcast %771 : vector<18x1xf32> to vector<18x16xf32>
    %773 = arith.subf %767, %772 : vector<18x16xf32>
    %774 = arith.mulf %773, %773 : vector<18x16xf32>
    %cst_193 = arith.constant dense<0.000000e+00> : vector<18xf32>
    %775 = vector.multi_reduction <add>, %774, %cst_193 [1] : vector<18x16xf32> to vector<18xf32>
    %776 = vector.shape_cast %775 : vector<18xf32> to vector<18x1xf32>
    %cst_194 = arith.constant 1.600000e+01 : f32
    %777 = vector.broadcast %cst_194 : f32 to vector<18x1xf32>
    %778 = arith.divf %776, %777 : vector<18x1xf32>
    %779 = vector.broadcast %771 : vector<18x1xf32> to vector<18x16xf32>
    %780 = arith.subf %767, %779 : vector<18x16xf32>
    %cst_195 = arith.constant 9.99999974E-6 : f32
    %781 = vector.broadcast %cst_195 : f32 to vector<18x1xf32>
    %782 = arith.addf %778, %781 : vector<18x1xf32>
    %783 = math.rsqrt %782 : vector<18x1xf32>
    %784 = vector.broadcast %783 : vector<18x1xf32> to vector<18x16xf32>
    %785 = arith.mulf %780, %784 : vector<18x16xf32>
    %786 = vector.broadcast %222 : vector<1x16xf32> to vector<18x16xf32>
    %787 = arith.mulf %785, %786 : vector<18x16xf32>
    %788 = vector.broadcast %223 : vector<1x16xf32> to vector<18x16xf32>
    %789 = arith.addf %787, %788 : vector<18x16xf32>
    %790 = vector.extract_strided_slice %789 {offsets = [16, 0], sizes = [2, 16], strides = [1, 1]} : vector<18x16xf32> to vector<2x16xf32>
    %791 = vector.extract_strided_slice %789 {offsets = [0, 0], sizes = [16, 16], strides = [1, 1]} : vector<18x16xf32> to vector<16x16xf32>
    %792 = tpu.concatenate %790, %791 in 0 : vector<2x16xf32>, vector<16x16xf32> -> vector<18x16xf32>
    %793 = arith.truncf %792 : vector<18x16xf32> to vector<18x16xbf16>
    %cst_196 = arith.constant dense<0.000000e+00> : vector<18x16xf32>
    %794 = tpu.matmul %793, %249, %cst_196 {dimension_numbers = #tpu.dot_dimension_numbers<[1], [0], [0], [1], [0, 0, 1, 1], [], []>} : vector<18x16xbf16>, vector<16x16xbf16>, vector<18x16xf32> -> vector<18x16xf32>
    %795 = vector.extract_strided_slice %789 {offsets = [17, 0], sizes = [1, 16], strides = [1, 1]} : vector<18x16xf32> to vector<1x16xf32>
    %796 = vector.extract_strided_slice %789 {offsets = [0, 0], sizes = [17, 16], strides = [1, 1]} : vector<18x16xf32> to vector<17x16xf32>
    %797 = tpu.concatenate %795, %796 in 0 : vector<1x16xf32>, vector<17x16xf32> -> vector<18x16xf32>
    %798 = arith.truncf %797 : vector<18x16xf32> to vector<18x16xbf16>
    %cst_197 = arith.constant dense<0.000000e+00> : vector<18x16xf32>
    %799 = tpu.matmul %798, %255, %cst_197 {dimension_numbers = #tpu.dot_dimension_numbers<[1], [0], [0], [1], [0, 0, 1, 1], [], []>} : vector<18x16xbf16>, vector<16x16xbf16>, vector<18x16xf32> -> vector<18x16xf32>
    %800 = arith.addf %794, %799 : vector<18x16xf32>
    %801 = arith.truncf %789 : vector<18x16xf32> to vector<18x16xbf16>
    %cst_198 = arith.constant dense<0.000000e+00> : vector<18x16xf32>
    %802 = tpu.matmul %801, %259, %cst_198 {dimension_numbers = #tpu.dot_dimension_numbers<[1], [0], [0], [1], [0, 0, 1, 1], [], []>} : vector<18x16xbf16>, vector<16x16xbf16>, vector<18x16xf32> -> vector<18x16xf32>
    %803 = arith.addf %800, %802 : vector<18x16xf32>
    %804 = vector.broadcast %263 : vector<1x16xf32> to vector<18x16xf32>
    %805 = arith.addf %803, %804 : vector<18x16xf32>
    %806 = vector.broadcast %266 : vector<1x16xf32> to vector<18x16xf32>
    %807 = arith.mulf %805, %806 : vector<18x16xf32>
    %808 = vector.broadcast %269 : vector<1x16xf32> to vector<18x16xf32>
    %809 = arith.addf %807, %808 : vector<18x16xf32>
    %cst_199 = arith.constant 0.000000e+00 : f32
    %810 = vector.broadcast %cst_199 : f32 to vector<18x16xf32>
    %811 = arith.cmpf ogt, %809, %810 : vector<18x16xf32>
    %cst_200 = arith.constant 0.000000e+00 : f32
    %812 = vector.broadcast %cst_200 : f32 to vector<18x16xf32>
    %813 = arith.minimumf %809, %812 : vector<18x16xf32>
    %814 = math.exp %813 : vector<18x16xf32>
    %cst_201 = arith.constant 1.000000e+00 : f32
    %815 = vector.broadcast %cst_201 : f32 to vector<18x16xf32>
    %816 = arith.subf %814, %815 : vector<18x16xf32>
    %817 = arith.select %811, %809, %816 : vector<18x16xi1>, vector<18x16xf32>
    %818 = vector.extract_strided_slice %817 {offsets = [0, 0], sizes = [2, 16], strides = [1, 1]} : vector<18x16xf32> to vector<2x16xf32>
    %819 = tpu.concatenate %817, %818 in 0 : vector<18x16xf32>, vector<2x16xf32> -> vector<20x16xf32>
    %820 = vector.extract_strided_slice %819 {offsets = [19, 0], sizes = [1, 16], strides = [1, 1]} : vector<20x16xf32> to vector<1x16xf32>
    %821 = vector.extract_strided_slice %819 {offsets = [0, 0], sizes = [19, 16], strides = [1, 1]} : vector<20x16xf32> to vector<19x16xf32>
    %822 = tpu.concatenate %820, %821 in 0 : vector<1x16xf32>, vector<19x16xf32> -> vector<20x16xf32>
    %823 = vector.extract_strided_slice %819 {offsets = [1, 0], sizes = [19, 16], strides = [1, 1]} : vector<20x16xf32> to vector<19x16xf32>
    %824 = vector.extract_strided_slice %819 {offsets = [0, 0], sizes = [1, 16], strides = [1, 1]} : vector<20x16xf32> to vector<1x16xf32>
    %825 = tpu.concatenate %823, %824 in 0 : vector<19x16xf32>, vector<1x16xf32> -> vector<20x16xf32>
    %826 = arith.maximumf %822, %825 : vector<20x16xf32>
    %827 = arith.maximumf %819, %826 : vector<20x16xf32>
    %828 = tpu.iota {dimensions = array<i32: 1>} : vector<10x20xi32>
    %829 = tpu.iota {dimensions = array<i32: 0>} : vector<10x20xi32>
    %c2_i32_202 = arith.constant 2 : i32
    %830 = vector.broadcast %c2_i32_202 : i32 to vector<10x20xi32>
    %831 = arith.muli %830, %829 : vector<10x20xi32>
    %832 = arith.cmpi eq, %828, %831 : vector<10x20xi32>
    %833 = arith.extui %832 : vector<10x20xi1> to vector<10x20xi32>
    %834 = arith.sitofp %833 : vector<10x20xi32> to vector<10x20xf32>
    %cst_203 = arith.constant dense<0.000000e+00> : vector<10x16xf32>
    %835 = tpu.matmul %834, %827, %cst_203 {dimension_numbers = #tpu.dot_dimension_numbers<[1], [0], [0], [1], [0, 0, 1, 1], [], []>} : vector<10x20xf32>, vector<20x16xf32>, vector<10x16xf32> -> vector<10x16xf32>
    %836 = arith.truncf %835 : vector<10x16xf32> to vector<10x16xbf16>
    %cst_204 = arith.constant dense<0.000000e+00> : vector<10x48xf32>
    %837 = tpu.matmul %836, %298, %cst_204 {dimension_numbers = #tpu.dot_dimension_numbers<[1], [0], [0], [1], [0, 0, 1, 1], [], []>} : vector<10x16xbf16>, vector<16x48xbf16>, vector<10x48xf32> -> vector<10x48xf32>
    %838 = vector.broadcast %301 : vector<1x48xf32> to vector<10x48xf32>
    %839 = arith.addf %837, %838 : vector<10x48xf32>
    %840 = tpu.iota {dimensions = array<i32: 0>} : vector<10x10xi32>
    %841 = tpu.iota {dimensions = array<i32: 1>} : vector<10x10xi32>
    %842 = arith.cmpi eq, %840, %841 : vector<10x10xi32>
    %843 = arith.extui %842 : vector<10x10xi1> to vector<10x10xi32>
    %844 = arith.sitofp %843 : vector<10x10xi32> to vector<10x10xf32>
    %845 = tpu.iota {dimensions = array<i32: 0>} : vector<10x10xi32>
    %846 = tpu.iota {dimensions = array<i32: 1>} : vector<10x10xi32>
    %847 = vector.extract_strided_slice %839 {offsets = [0, 0], sizes = [5, 48], strides = [1, 1]} : vector<10x48xf32> to vector<5x48xf32>
    %848 = vector.extract_strided_slice %847 {offsets = [0, 0], sizes = [5, 8], strides = [1, 1]} : vector<5x48xf32> to vector<5x8xf32>
    %849 = vector.extract_strided_slice %847 {offsets = [0, 8], sizes = [5, 8], strides = [1, 1]} : vector<5x48xf32> to vector<5x8xf32>
    %850 = tpu.concatenate %848, %849 in 0 : vector<5x8xf32>, vector<5x8xf32> -> vector<10x8xf32>
    %851 = vector.extract_strided_slice %847 {offsets = [0, 16], sizes = [5, 8], strides = [1, 1]} : vector<5x48xf32> to vector<5x8xf32>
    %852 = vector.extract_strided_slice %847 {offsets = [0, 24], sizes = [5, 8], strides = [1, 1]} : vector<5x48xf32> to vector<5x8xf32>
    %853 = tpu.concatenate %851, %852 in 0 : vector<5x8xf32>, vector<5x8xf32> -> vector<10x8xf32>
    %854 = vector.extract_strided_slice %847 {offsets = [0, 32], sizes = [5, 8], strides = [1, 1]} : vector<5x48xf32> to vector<5x8xf32>
    %855 = vector.extract_strided_slice %847 {offsets = [0, 40], sizes = [5, 8], strides = [1, 1]} : vector<5x48xf32> to vector<5x8xf32>
    %856 = tpu.concatenate %854, %855 in 0 : vector<5x8xf32>, vector<5x8xf32> -> vector<10x8xf32>
    %857 = arith.truncf %850 : vector<10x8xf32> to vector<10x8xbf16>
    %858 = arith.truncf %853 : vector<10x8xf32> to vector<10x8xbf16>
    %cst_205 = arith.constant dense<0.000000e+00> : vector<10x10xf32>
    %859 = tpu.matmul %857, %858, %cst_205 {dimension_numbers = #tpu.dot_dimension_numbers<[1], [1], [0], [0], [0, 0, 1, 0], [], []>} : vector<10x8xbf16>, vector<10x8xbf16>, vector<10x10xf32> -> vector<10x10xf32>
    %860 = arith.mulf %859, %304 : vector<10x10xf32>
    %cst_206 = arith.constant dense<0.000000e+00> : vector<10xf32>
    %861 = vector.multi_reduction <add>, %860, %cst_206 [1] : vector<10x10xf32> to vector<10xf32>
    %862 = vector.shape_cast %861 : vector<10xf32> to vector<10x1xf32>
    %cst_207 = arith.constant 0.000000e+00 : f32
    %863 = vector.broadcast %cst_207 : f32 to vector<10x10xf32>
    %864 = arith.cmpf ogt, %304, %863 : vector<10x10xf32>
    %cst_208 = arith.constant 0xFF800000 : f32
    %865 = vector.broadcast %cst_208 : f32 to vector<10x10xf32>
    %866 = arith.select %864, %859, %865 : vector<10x10xi1>, vector<10x10xf32>
    %cst_209 = arith.constant dense<0xFF800000> : vector<10xf32>
    %867 = vector.multi_reduction <maximumf>, %866, %cst_209 [1] : vector<10x10xf32> to vector<10xf32>
    %868 = vector.shape_cast %867 : vector<10xf32> to vector<10x1xf32>
    %cst_210 = arith.constant 1.000000e-01 : f32
    %869 = vector.broadcast %cst_210 : f32 to vector<10x1xf32>
    %870 = arith.mulf %862, %869 : vector<10x1xf32>
    %871 = arith.subf %868, %870 : vector<10x1xf32>
    %872 = vector.broadcast %871 : vector<10x1xf32> to vector<10x10xf32>
    %873 = arith.mulf %844, %872 : vector<10x10xf32>
    %cst_211 = arith.constant dense<0.000000e+00> : vector<10xf32>
    %874 = vector.multi_reduction <add>, %873, %cst_211 [0] : vector<10x10xf32> to vector<10xf32>
    %875 = vector.shape_cast %874 : vector<10xf32> to vector<1x10xf32>
    %876 = vector.broadcast %875 : vector<1x10xf32> to vector<10x10xf32>
    %877 = vector.broadcast %871 : vector<10x1xf32> to vector<10x10xf32>
    %878 = arith.cmpf ogt, %876, %877 : vector<10x10xf32>
    %879 = arith.cmpi ne, %846, %845 : vector<10x10xi32>
    %880 = arith.andi %878, %879 : vector<10x10xi1>
    %881 = vector.broadcast %875 : vector<1x10xf32> to vector<10x10xf32>
    %882 = vector.broadcast %871 : vector<10x1xf32> to vector<10x10xf32>
    %883 = arith.cmpf oeq, %881, %882 : vector<10x10xf32>
    %884 = arith.cmpi slt, %846, %845 : vector<10x10xi32>
    %885 = arith.andi %883, %884 : vector<10x10xi1>
    %886 = arith.ori %880, %885 : vector<10x10xi1>
    %887 = arith.extui %886 : vector<10x10xi1> to vector<10x10xi32>
    %888 = arith.sitofp %887 : vector<10x10xi32> to vector<10x10xf32>
    %cst_212 = arith.constant dense<0.000000e+00> : vector<10xf32>
    %889 = vector.multi_reduction <add>, %888, %cst_212 [1] : vector<10x10xf32> to vector<10xf32>
    %890 = vector.shape_cast %889 : vector<10xf32> to vector<10x1xf32>
    %cst_213 = arith.constant 6.000000e+00 : f32
    %891 = vector.broadcast %cst_213 : f32 to vector<10x1xf32>
    %892 = arith.cmpf olt, %890, %891 : vector<10x1xf32>
    %cst_214 = arith.constant dense<0.000000e+00> : vector<8xf32>
    %893 = vector.multi_reduction <add>, %856, %cst_214 [0] : vector<10x8xf32> to vector<8xf32>
    %894 = vector.shape_cast %893 : vector<8xf32> to vector<1x8xf32>
    %cst_215 = arith.constant 0.353553385 : f32
    %895 = vector.broadcast %cst_215 : f32 to vector<10x10xf32>
    %896 = arith.mulf %859, %895 : vector<10x10xf32>
    %cst_216 = arith.constant dense<0xFF800000> : vector<10xf32>
    %897 = vector.multi_reduction <maximumf>, %896, %cst_216 [1] : vector<10x10xf32> to vector<10xf32>
    %898 = vector.shape_cast %897 : vector<10xf32> to vector<10x1xf32>
    %899 = vector.broadcast %898 : vector<10x1xf32> to vector<10x10xf32>
    %900 = arith.subf %896, %899 : vector<10x10xf32>
    %901 = math.exp %900 : vector<10x10xf32>
    %cst_217 = arith.constant dense<0.000000e+00> : vector<10xf32>
    %902 = vector.multi_reduction <add>, %901, %cst_217 [1] : vector<10x10xf32> to vector<10xf32>
    %903 = vector.shape_cast %902 : vector<10xf32> to vector<10x1xf32>
    %904 = vector.broadcast %903 : vector<10x1xf32> to vector<10x10xf32>
    %905 = arith.divf %901, %904 : vector<10x10xf32>
    %906 = arith.truncf %905 : vector<10x10xf32> to vector<10x10xbf16>
    %907 = arith.truncf %856 : vector<10x8xf32> to vector<10x8xbf16>
    %cst_218 = arith.constant dense<0.000000e+00> : vector<10x8xf32>
    %908 = tpu.matmul %906, %907, %cst_218 {dimension_numbers = #tpu.dot_dimension_numbers<[1], [0], [0], [1], [0, 0, 1, 1], [], []>} : vector<10x10xbf16>, vector<10x8xbf16>, vector<10x8xf32> -> vector<10x8xf32>
    %909 = vector.shape_cast %892 : vector<10x1xi1> to vector<10x1xi1>
    %910 = vector.broadcast %909 : vector<10x1xi1> to vector<10x8xi1>
    %911 = vector.shape_cast %894 : vector<1x8xf32> to vector<1x8xf32>
    %912 = vector.broadcast %911 : vector<1x8xf32> to vector<10x8xf32>
    %913 = arith.select %910, %908, %912 : vector<10x8xi1>, vector<10x8xf32>
    %914 = vector.extract_strided_slice %913 {offsets = [0, 0], sizes = [5, 8], strides = [1, 1]} : vector<10x8xf32> to vector<5x8xf32>
    %915 = vector.extract_strided_slice %913 {offsets = [5, 0], sizes = [5, 8], strides = [1, 1]} : vector<10x8xf32> to vector<5x8xf32>
    %916 = tpu.concatenate %914, %915 in 1 : vector<5x8xf32>, vector<5x8xf32> -> vector<5x16xf32>
    %917 = vector.extract_strided_slice %839 {offsets = [5, 0], sizes = [5, 48], strides = [1, 1]} : vector<10x48xf32> to vector<5x48xf32>
    %918 = vector.extract_strided_slice %917 {offsets = [0, 0], sizes = [5, 8], strides = [1, 1]} : vector<5x48xf32> to vector<5x8xf32>
    %919 = vector.extract_strided_slice %917 {offsets = [0, 8], sizes = [5, 8], strides = [1, 1]} : vector<5x48xf32> to vector<5x8xf32>
    %920 = tpu.concatenate %918, %919 in 0 : vector<5x8xf32>, vector<5x8xf32> -> vector<10x8xf32>
    %921 = vector.extract_strided_slice %917 {offsets = [0, 16], sizes = [5, 8], strides = [1, 1]} : vector<5x48xf32> to vector<5x8xf32>
    %922 = vector.extract_strided_slice %917 {offsets = [0, 24], sizes = [5, 8], strides = [1, 1]} : vector<5x48xf32> to vector<5x8xf32>
    %923 = tpu.concatenate %921, %922 in 0 : vector<5x8xf32>, vector<5x8xf32> -> vector<10x8xf32>
    %924 = vector.extract_strided_slice %917 {offsets = [0, 32], sizes = [5, 8], strides = [1, 1]} : vector<5x48xf32> to vector<5x8xf32>
    %925 = vector.extract_strided_slice %917 {offsets = [0, 40], sizes = [5, 8], strides = [1, 1]} : vector<5x48xf32> to vector<5x8xf32>
    %926 = tpu.concatenate %924, %925 in 0 : vector<5x8xf32>, vector<5x8xf32> -> vector<10x8xf32>
    %927 = arith.truncf %920 : vector<10x8xf32> to vector<10x8xbf16>
    %928 = arith.truncf %923 : vector<10x8xf32> to vector<10x8xbf16>
    %cst_219 = arith.constant dense<0.000000e+00> : vector<10x10xf32>
    %929 = tpu.matmul %927, %928, %cst_219 {dimension_numbers = #tpu.dot_dimension_numbers<[1], [1], [0], [0], [0, 0, 1, 0], [], []>} : vector<10x8xbf16>, vector<10x8xbf16>, vector<10x10xf32> -> vector<10x10xf32>
    %930 = arith.mulf %929, %304 : vector<10x10xf32>
    %cst_220 = arith.constant dense<0.000000e+00> : vector<10xf32>
    %931 = vector.multi_reduction <add>, %930, %cst_220 [1] : vector<10x10xf32> to vector<10xf32>
    %932 = vector.shape_cast %931 : vector<10xf32> to vector<10x1xf32>
    %cst_221 = arith.constant 0.000000e+00 : f32
    %933 = vector.broadcast %cst_221 : f32 to vector<10x10xf32>
    %934 = arith.cmpf ogt, %304, %933 : vector<10x10xf32>
    %cst_222 = arith.constant 0xFF800000 : f32
    %935 = vector.broadcast %cst_222 : f32 to vector<10x10xf32>
    %936 = arith.select %934, %929, %935 : vector<10x10xi1>, vector<10x10xf32>
    %cst_223 = arith.constant dense<0xFF800000> : vector<10xf32>
    %937 = vector.multi_reduction <maximumf>, %936, %cst_223 [1] : vector<10x10xf32> to vector<10xf32>
    %938 = vector.shape_cast %937 : vector<10xf32> to vector<10x1xf32>
    %cst_224 = arith.constant 1.000000e-01 : f32
    %939 = vector.broadcast %cst_224 : f32 to vector<10x1xf32>
    %940 = arith.mulf %932, %939 : vector<10x1xf32>
    %941 = arith.subf %938, %940 : vector<10x1xf32>
    %942 = vector.broadcast %941 : vector<10x1xf32> to vector<10x10xf32>
    %943 = arith.mulf %844, %942 : vector<10x10xf32>
    %cst_225 = arith.constant dense<0.000000e+00> : vector<10xf32>
    %944 = vector.multi_reduction <add>, %943, %cst_225 [0] : vector<10x10xf32> to vector<10xf32>
    %945 = vector.shape_cast %944 : vector<10xf32> to vector<1x10xf32>
    %946 = vector.broadcast %945 : vector<1x10xf32> to vector<10x10xf32>
    %947 = vector.broadcast %941 : vector<10x1xf32> to vector<10x10xf32>
    %948 = arith.cmpf ogt, %946, %947 : vector<10x10xf32>
    %949 = arith.cmpi ne, %846, %845 : vector<10x10xi32>
    %950 = arith.andi %948, %949 : vector<10x10xi1>
    %951 = vector.broadcast %945 : vector<1x10xf32> to vector<10x10xf32>
    %952 = vector.broadcast %941 : vector<10x1xf32> to vector<10x10xf32>
    %953 = arith.cmpf oeq, %951, %952 : vector<10x10xf32>
    %954 = arith.cmpi slt, %846, %845 : vector<10x10xi32>
    %955 = arith.andi %953, %954 : vector<10x10xi1>
    %956 = arith.ori %950, %955 : vector<10x10xi1>
    %957 = arith.extui %956 : vector<10x10xi1> to vector<10x10xi32>
    %958 = arith.sitofp %957 : vector<10x10xi32> to vector<10x10xf32>
    %cst_226 = arith.constant dense<0.000000e+00> : vector<10xf32>
    %959 = vector.multi_reduction <add>, %958, %cst_226 [1] : vector<10x10xf32> to vector<10xf32>
    %960 = vector.shape_cast %959 : vector<10xf32> to vector<10x1xf32>
    %cst_227 = arith.constant 6.000000e+00 : f32
    %961 = vector.broadcast %cst_227 : f32 to vector<10x1xf32>
    %962 = arith.cmpf olt, %960, %961 : vector<10x1xf32>
    %cst_228 = arith.constant dense<0.000000e+00> : vector<8xf32>
    %963 = vector.multi_reduction <add>, %926, %cst_228 [0] : vector<10x8xf32> to vector<8xf32>
    %964 = vector.shape_cast %963 : vector<8xf32> to vector<1x8xf32>
    %cst_229 = arith.constant 0.353553385 : f32
    %965 = vector.broadcast %cst_229 : f32 to vector<10x10xf32>
    %966 = arith.mulf %929, %965 : vector<10x10xf32>
    %cst_230 = arith.constant dense<0xFF800000> : vector<10xf32>
    %967 = vector.multi_reduction <maximumf>, %966, %cst_230 [1] : vector<10x10xf32> to vector<10xf32>
    %968 = vector.shape_cast %967 : vector<10xf32> to vector<10x1xf32>
    %969 = vector.broadcast %968 : vector<10x1xf32> to vector<10x10xf32>
    %970 = arith.subf %966, %969 : vector<10x10xf32>
    %971 = math.exp %970 : vector<10x10xf32>
    %cst_231 = arith.constant dense<0.000000e+00> : vector<10xf32>
    %972 = vector.multi_reduction <add>, %971, %cst_231 [1] : vector<10x10xf32> to vector<10xf32>
    %973 = vector.shape_cast %972 : vector<10xf32> to vector<10x1xf32>
    %974 = vector.broadcast %973 : vector<10x1xf32> to vector<10x10xf32>
    %975 = arith.divf %971, %974 : vector<10x10xf32>
    %976 = arith.truncf %975 : vector<10x10xf32> to vector<10x10xbf16>
    %977 = arith.truncf %926 : vector<10x8xf32> to vector<10x8xbf16>
    %cst_232 = arith.constant dense<0.000000e+00> : vector<10x8xf32>
    %978 = tpu.matmul %976, %977, %cst_232 {dimension_numbers = #tpu.dot_dimension_numbers<[1], [0], [0], [1], [0, 0, 1, 1], [], []>} : vector<10x10xbf16>, vector<10x8xbf16>, vector<10x8xf32> -> vector<10x8xf32>
    %979 = vector.shape_cast %962 : vector<10x1xi1> to vector<10x1xi1>
    %980 = vector.broadcast %979 : vector<10x1xi1> to vector<10x8xi1>
    %981 = vector.shape_cast %964 : vector<1x8xf32> to vector<1x8xf32>
    %982 = vector.broadcast %981 : vector<1x8xf32> to vector<10x8xf32>
    %983 = arith.select %980, %978, %982 : vector<10x8xi1>, vector<10x8xf32>
    %984 = vector.extract_strided_slice %983 {offsets = [0, 0], sizes = [5, 8], strides = [1, 1]} : vector<10x8xf32> to vector<5x8xf32>
    %985 = vector.extract_strided_slice %983 {offsets = [5, 0], sizes = [5, 8], strides = [1, 1]} : vector<10x8xf32> to vector<5x8xf32>
    %986 = tpu.concatenate %984, %985 in 1 : vector<5x8xf32>, vector<5x8xf32> -> vector<5x16xf32>
    %987 = tpu.concatenate %916, %986 in 0 : vector<5x16xf32>, vector<5x16xf32> -> vector<10x16xf32>
    %988 = arith.truncf %987 : vector<10x16xf32> to vector<10x16xbf16>
    %cst_233 = arith.constant dense<0.000000e+00> : vector<10x16xf32>
    %989 = tpu.matmul %988, %453, %cst_233 {dimension_numbers = #tpu.dot_dimension_numbers<[1], [0], [0], [1], [0, 0, 1, 1], [], []>} : vector<10x16xbf16>, vector<16x16xbf16>, vector<10x16xf32> -> vector<10x16xf32>
    %990 = arith.addf %835, %989 : vector<10x16xf32>
    %991 = vector.broadcast %457 : vector<1x16xf32> to vector<10x16xf32>
    %992 = arith.addf %990, %991 : vector<10x16xf32>
    %cst_234 = arith.constant dense<0.000000e+00> : vector<10xf32>
    %993 = vector.multi_reduction <add>, %992, %cst_234 [1] : vector<10x16xf32> to vector<10xf32>
    %994 = vector.shape_cast %993 : vector<10xf32> to vector<10x1xf32>
    %cst_235 = arith.constant 1.600000e+01 : f32
    %995 = vector.broadcast %cst_235 : f32 to vector<10x1xf32>
    %996 = arith.divf %994, %995 : vector<10x1xf32>
    %997 = vector.broadcast %996 : vector<10x1xf32> to vector<10x16xf32>
    %998 = arith.subf %992, %997 : vector<10x16xf32>
    %999 = arith.mulf %998, %998 : vector<10x16xf32>
    %cst_236 = arith.constant dense<0.000000e+00> : vector<10xf32>
    %1000 = vector.multi_reduction <add>, %999, %cst_236 [1] : vector<10x16xf32> to vector<10xf32>
    %1001 = vector.shape_cast %1000 : vector<10xf32> to vector<10x1xf32>
    %cst_237 = arith.constant 1.600000e+01 : f32
    %1002 = vector.broadcast %cst_237 : f32 to vector<10x1xf32>
    %1003 = arith.divf %1001, %1002 : vector<10x1xf32>
    %1004 = vector.broadcast %996 : vector<10x1xf32> to vector<10x16xf32>
    %1005 = arith.subf %992, %1004 : vector<10x16xf32>
    %cst_238 = arith.constant 9.99999974E-6 : f32
    %1006 = vector.broadcast %cst_238 : f32 to vector<10x1xf32>
    %1007 = arith.addf %1003, %1006 : vector<10x1xf32>
    %1008 = math.rsqrt %1007 : vector<10x1xf32>
    %1009 = vector.broadcast %1008 : vector<10x1xf32> to vector<10x16xf32>
    %1010 = arith.mulf %1005, %1009 : vector<10x16xf32>
    %1011 = vector.broadcast %460 : vector<1x16xf32> to vector<10x16xf32>
    %1012 = arith.mulf %1010, %1011 : vector<10x16xf32>
    %1013 = vector.broadcast %461 : vector<1x16xf32> to vector<10x16xf32>
    %1014 = arith.addf %1012, %1013 : vector<10x16xf32>
    %1015 = arith.truncf %1014 : vector<10x16xf32> to vector<10x16xbf16>
    %cst_239 = arith.constant dense<0.000000e+00> : vector<10x32xf32>
    %1016 = tpu.matmul %1015, %484, %cst_239 {dimension_numbers = #tpu.dot_dimension_numbers<[1], [0], [0], [1], [0, 0, 1, 1], [], []>} : vector<10x16xbf16>, vector<16x32xbf16>, vector<10x32xf32> -> vector<10x32xf32>
    %1017 = vector.broadcast %487 : vector<1x32xf32> to vector<10x32xf32>
    %1018 = arith.addf %1016, %1017 : vector<10x32xf32>
    %cst_240 = arith.constant 5.000000e-01 : f32
    %1019 = vector.broadcast %cst_240 : f32 to vector<10x32xf32>
    %1020 = arith.mulf %1019, %1018 : vector<10x32xf32>
    %cst_241 = arith.constant 4.471500e-02 : f32
    %1021 = vector.broadcast %cst_241 : f32 to vector<10x32xf32>
    %1022 = arith.mulf %1021, %1018 : vector<10x32xf32>
    %1023 = arith.mulf %1022, %1018 : vector<10x32xf32>
    %1024 = arith.mulf %1023, %1018 : vector<10x32xf32>
    %1025 = arith.addf %1018, %1024 : vector<10x32xf32>
    %cst_242 = arith.constant 0.797884583 : f32
    %1026 = vector.broadcast %cst_242 : f32 to vector<10x32xf32>
    %1027 = arith.mulf %1026, %1025 : vector<10x32xf32>
    %1028 = math.tanh %1027 : vector<10x32xf32>
    %cst_243 = arith.constant 1.000000e+00 : f32
    %1029 = vector.broadcast %cst_243 : f32 to vector<10x32xf32>
    %1030 = arith.addf %1029, %1028 : vector<10x32xf32>
    %1031 = arith.mulf %1020, %1030 : vector<10x32xf32>
    %1032 = arith.truncf %1031 : vector<10x32xf32> to vector<10x32xbf16>
    %cst_244 = arith.constant dense<0.000000e+00> : vector<10x16xf32>
    %1033 = tpu.matmul %1032, %503, %cst_244 {dimension_numbers = #tpu.dot_dimension_numbers<[1], [0], [0], [1], [0, 0, 1, 1], [], []>} : vector<10x32xbf16>, vector<32x16xbf16>, vector<10x16xf32> -> vector<10x16xf32>
    %1034 = vector.broadcast %506 : vector<1x16xf32> to vector<10x16xf32>
    %1035 = arith.addf %1033, %1034 : vector<10x16xf32>
    %1036 = arith.addf %1014, %1035 : vector<10x16xf32>
    %cst_245 = arith.constant dense<0.000000e+00> : vector<10xf32>
    %1037 = vector.multi_reduction <add>, %1036, %cst_245 [1] : vector<10x16xf32> to vector<10xf32>
    %1038 = vector.shape_cast %1037 : vector<10xf32> to vector<10x1xf32>
    %cst_246 = arith.constant 1.600000e+01 : f32
    %1039 = vector.broadcast %cst_246 : f32 to vector<10x1xf32>
    %1040 = arith.divf %1038, %1039 : vector<10x1xf32>
    %1041 = vector.broadcast %1040 : vector<10x1xf32> to vector<10x16xf32>
    %1042 = arith.subf %1036, %1041 : vector<10x16xf32>
    %1043 = arith.mulf %1042, %1042 : vector<10x16xf32>
    %cst_247 = arith.constant dense<0.000000e+00> : vector<10xf32>
    %1044 = vector.multi_reduction <add>, %1043, %cst_247 [1] : vector<10x16xf32> to vector<10xf32>
    %1045 = vector.shape_cast %1044 : vector<10xf32> to vector<10x1xf32>
    %cst_248 = arith.constant 1.600000e+01 : f32
    %1046 = vector.broadcast %cst_248 : f32 to vector<10x1xf32>
    %1047 = arith.divf %1045, %1046 : vector<10x1xf32>
    %1048 = vector.broadcast %1040 : vector<10x1xf32> to vector<10x16xf32>
    %1049 = arith.subf %1036, %1048 : vector<10x16xf32>
    %cst_249 = arith.constant 9.99999974E-6 : f32
    %1050 = vector.broadcast %cst_249 : f32 to vector<10x1xf32>
    %1051 = arith.addf %1047, %1050 : vector<10x1xf32>
    %1052 = math.rsqrt %1051 : vector<10x1xf32>
    %1053 = vector.broadcast %1052 : vector<10x1xf32> to vector<10x16xf32>
    %1054 = arith.mulf %1049, %1053 : vector<10x16xf32>
    %1055 = vector.broadcast %510 : vector<1x16xf32> to vector<10x16xf32>
    %1056 = arith.mulf %1054, %1055 : vector<10x16xf32>
    %1057 = vector.broadcast %511 : vector<1x16xf32> to vector<10x16xf32>
    %1058 = arith.addf %1056, %1057 : vector<10x16xf32>
    %cst_250 = arith.constant dense<0.000000e+00> : vector<10xf32>
    %1059 = vector.multi_reduction <add>, %1058, %cst_250 [1] : vector<10x16xf32> to vector<10xf32>
    %1060 = vector.shape_cast %1059 : vector<10xf32> to vector<10x1xf32>
    %cst_251 = arith.constant 1.600000e+01 : f32
    %1061 = vector.broadcast %cst_251 : f32 to vector<10x1xf32>
    %1062 = arith.divf %1060, %1061 : vector<10x1xf32>
    %1063 = vector.broadcast %1062 : vector<10x1xf32> to vector<10x16xf32>
    %1064 = arith.subf %1058, %1063 : vector<10x16xf32>
    %1065 = arith.mulf %1064, %1064 : vector<10x16xf32>
    %cst_252 = arith.constant dense<0.000000e+00> : vector<10xf32>
    %1066 = vector.multi_reduction <add>, %1065, %cst_252 [1] : vector<10x16xf32> to vector<10xf32>
    %1067 = vector.shape_cast %1066 : vector<10xf32> to vector<10x1xf32>
    %cst_253 = arith.constant 1.600000e+01 : f32
    %1068 = vector.broadcast %cst_253 : f32 to vector<10x1xf32>
    %1069 = arith.divf %1067, %1068 : vector<10x1xf32>
    %1070 = vector.broadcast %1062 : vector<10x1xf32> to vector<10x16xf32>
    %1071 = arith.subf %1058, %1070 : vector<10x16xf32>
    %cst_254 = arith.constant 9.99999974E-6 : f32
    %1072 = vector.broadcast %cst_254 : f32 to vector<10x1xf32>
    %1073 = arith.addf %1069, %1072 : vector<10x1xf32>
    %1074 = math.rsqrt %1073 : vector<10x1xf32>
    %1075 = vector.broadcast %1074 : vector<10x1xf32> to vector<10x16xf32>
    %1076 = arith.mulf %1071, %1075 : vector<10x16xf32>
    %1077 = vector.broadcast %534 : vector<1x16xf32> to vector<10x16xf32>
    %1078 = arith.mulf %1076, %1077 : vector<10x16xf32>
    %1079 = vector.broadcast %535 : vector<1x16xf32> to vector<10x16xf32>
    %1080 = arith.addf %1078, %1079 : vector<10x16xf32>
    %c336 = arith.constant 336 : index
    %c0_255 = arith.constant 0 : index
    %1081 = vector.load %arg2[%c336, %c0_255] : memref<400x128xbf16, #tpu.memory_space<vmem>>, vector<32x32xbf16>
    %c320 = arith.constant 320 : index
    %c0_256 = arith.constant 0 : index
    %1082 = vector.load %arg2[%c320, %c0_256] : memref<400x128xbf16, #tpu.memory_space<vmem>>, vector<16x32xbf16>
    %1083 = arith.truncf %557 : vector<10x16xf32> to vector<10x16xbf16>
    %cst_257 = arith.constant dense<0.000000e+00> : vector<10x32xf32>
    %1084 = tpu.matmul %1083, %1082, %cst_257 {dimension_numbers = #tpu.dot_dimension_numbers<[1], [0], [0], [1], [0, 0, 1, 1], [], []>} : vector<10x16xbf16>, vector<16x32xbf16>, vector<10x32xf32> -> vector<10x32xf32>
    %c208_258 = arith.constant 208 : index
    %c0_259 = arith.constant 0 : index
    %1085 = vector.load %arg3[%c208_258, %c0_259] : memref<224x128xf32, #tpu.memory_space<vmem>>, vector<1x32xf32>
    %1086 = vector.broadcast %1085 : vector<1x32xf32> to vector<10x32xf32>
    %1087 = arith.addf %1084, %1086 : vector<10x32xf32>
    %1088 = arith.truncf %1080 : vector<10x16xf32> to vector<10x16xbf16>
    %cst_260 = arith.constant dense<0.000000e+00> : vector<10x32xf32>
    %1089 = tpu.matmul %1088, %1082, %cst_260 {dimension_numbers = #tpu.dot_dimension_numbers<[1], [0], [0], [1], [0, 0, 1, 1], [], []>} : vector<10x16xbf16>, vector<16x32xbf16>, vector<10x32xf32> -> vector<10x32xf32>
    %1090 = vector.broadcast %1085 : vector<1x32xf32> to vector<10x32xf32>
    %1091 = arith.addf %1089, %1090 : vector<10x32xf32>
    %c0_261 = arith.constant 0 : index
    %c0_262 = arith.constant 0 : index
    %1092 = vector.load %arg1[%c0_261, %c0_262] : memref<2x32xf32, #tpu.memory_space<vmem>>, vector<2x32xf32>
    %1093 = vector.extract_strided_slice %1087 {offsets = [0, 0], sizes = [1, 32], strides = [1, 1]} : vector<10x32xf32> to vector<1x32xf32>
    %1094 = vector.extract_strided_slice %1091 {offsets = [0, 0], sizes = [1, 32], strides = [1, 1]} : vector<10x32xf32> to vector<1x32xf32>
    %1095 = tpu.concatenate %1093, %1094 in 0 : vector<1x32xf32>, vector<1x32xf32> -> vector<2x32xf32>
    %1096 = arith.truncf %1092 : vector<2x32xf32> to vector<2x32xbf16>
    %cst_263 = arith.constant dense<0.000000e+00> : vector<2x32xf32>
    %1097 = tpu.matmul %1096, %1081, %cst_263 {dimension_numbers = #tpu.dot_dimension_numbers<[1], [0], [0], [1], [0, 0, 1, 1], [], []>} : vector<2x32xbf16>, vector<32x32xbf16>, vector<2x32xf32> -> vector<2x32xf32>
    %1098 = arith.addf %1095, %1097 : vector<2x32xf32>
    %1099 = math.tanh %1098 : vector<2x32xf32>
    %1100 = vector.extract_strided_slice %1087 {offsets = [1, 0], sizes = [1, 32], strides = [1, 1]} : vector<10x32xf32> to vector<1x32xf32>
    %1101 = vector.extract_strided_slice %1091 {offsets = [1, 0], sizes = [1, 32], strides = [1, 1]} : vector<10x32xf32> to vector<1x32xf32>
    %1102 = tpu.concatenate %1100, %1101 in 0 : vector<1x32xf32>, vector<1x32xf32> -> vector<2x32xf32>
    %1103 = arith.truncf %1099 : vector<2x32xf32> to vector<2x32xbf16>
    %cst_264 = arith.constant dense<0.000000e+00> : vector<2x32xf32>
    %1104 = tpu.matmul %1103, %1081, %cst_264 {dimension_numbers = #tpu.dot_dimension_numbers<[1], [0], [0], [1], [0, 0, 1, 1], [], []>} : vector<2x32xbf16>, vector<32x32xbf16>, vector<2x32xf32> -> vector<2x32xf32>
    %1105 = arith.addf %1102, %1104 : vector<2x32xf32>
    %1106 = math.tanh %1105 : vector<2x32xf32>
    %1107 = vector.extract_strided_slice %1087 {offsets = [2, 0], sizes = [1, 32], strides = [1, 1]} : vector<10x32xf32> to vector<1x32xf32>
    %1108 = vector.extract_strided_slice %1091 {offsets = [2, 0], sizes = [1, 32], strides = [1, 1]} : vector<10x32xf32> to vector<1x32xf32>
    %1109 = tpu.concatenate %1107, %1108 in 0 : vector<1x32xf32>, vector<1x32xf32> -> vector<2x32xf32>
    %1110 = arith.truncf %1106 : vector<2x32xf32> to vector<2x32xbf16>
    %cst_265 = arith.constant dense<0.000000e+00> : vector<2x32xf32>
    %1111 = tpu.matmul %1110, %1081, %cst_265 {dimension_numbers = #tpu.dot_dimension_numbers<[1], [0], [0], [1], [0, 0, 1, 1], [], []>} : vector<2x32xbf16>, vector<32x32xbf16>, vector<2x32xf32> -> vector<2x32xf32>
    %1112 = arith.addf %1109, %1111 : vector<2x32xf32>
    %1113 = math.tanh %1112 : vector<2x32xf32>
    %1114 = vector.extract_strided_slice %1087 {offsets = [3, 0], sizes = [1, 32], strides = [1, 1]} : vector<10x32xf32> to vector<1x32xf32>
    %1115 = vector.extract_strided_slice %1091 {offsets = [3, 0], sizes = [1, 32], strides = [1, 1]} : vector<10x32xf32> to vector<1x32xf32>
    %1116 = tpu.concatenate %1114, %1115 in 0 : vector<1x32xf32>, vector<1x32xf32> -> vector<2x32xf32>
    %1117 = arith.truncf %1113 : vector<2x32xf32> to vector<2x32xbf16>
    %cst_266 = arith.constant dense<0.000000e+00> : vector<2x32xf32>
    %1118 = tpu.matmul %1117, %1081, %cst_266 {dimension_numbers = #tpu.dot_dimension_numbers<[1], [0], [0], [1], [0, 0, 1, 1], [], []>} : vector<2x32xbf16>, vector<32x32xbf16>, vector<2x32xf32> -> vector<2x32xf32>
    %1119 = arith.addf %1116, %1118 : vector<2x32xf32>
    %1120 = math.tanh %1119 : vector<2x32xf32>
    %1121 = vector.extract_strided_slice %1087 {offsets = [4, 0], sizes = [1, 32], strides = [1, 1]} : vector<10x32xf32> to vector<1x32xf32>
    %1122 = vector.extract_strided_slice %1091 {offsets = [4, 0], sizes = [1, 32], strides = [1, 1]} : vector<10x32xf32> to vector<1x32xf32>
    %1123 = tpu.concatenate %1121, %1122 in 0 : vector<1x32xf32>, vector<1x32xf32> -> vector<2x32xf32>
    %1124 = arith.truncf %1120 : vector<2x32xf32> to vector<2x32xbf16>
    %cst_267 = arith.constant dense<0.000000e+00> : vector<2x32xf32>
    %1125 = tpu.matmul %1124, %1081, %cst_267 {dimension_numbers = #tpu.dot_dimension_numbers<[1], [0], [0], [1], [0, 0, 1, 1], [], []>} : vector<2x32xbf16>, vector<32x32xbf16>, vector<2x32xf32> -> vector<2x32xf32>
    %1126 = arith.addf %1123, %1125 : vector<2x32xf32>
    %1127 = math.tanh %1126 : vector<2x32xf32>
    %1128 = vector.extract_strided_slice %1087 {offsets = [5, 0], sizes = [1, 32], strides = [1, 1]} : vector<10x32xf32> to vector<1x32xf32>
    %1129 = vector.extract_strided_slice %1091 {offsets = [5, 0], sizes = [1, 32], strides = [1, 1]} : vector<10x32xf32> to vector<1x32xf32>
    %1130 = tpu.concatenate %1128, %1129 in 0 : vector<1x32xf32>, vector<1x32xf32> -> vector<2x32xf32>
    %1131 = arith.truncf %1127 : vector<2x32xf32> to vector<2x32xbf16>
    %cst_268 = arith.constant dense<0.000000e+00> : vector<2x32xf32>
    %1132 = tpu.matmul %1131, %1081, %cst_268 {dimension_numbers = #tpu.dot_dimension_numbers<[1], [0], [0], [1], [0, 0, 1, 1], [], []>} : vector<2x32xbf16>, vector<32x32xbf16>, vector<2x32xf32> -> vector<2x32xf32>
    %1133 = arith.addf %1130, %1132 : vector<2x32xf32>
    %1134 = math.tanh %1133 : vector<2x32xf32>
    %1135 = vector.extract_strided_slice %1087 {offsets = [6, 0], sizes = [1, 32], strides = [1, 1]} : vector<10x32xf32> to vector<1x32xf32>
    %1136 = vector.extract_strided_slice %1091 {offsets = [6, 0], sizes = [1, 32], strides = [1, 1]} : vector<10x32xf32> to vector<1x32xf32>
    %1137 = tpu.concatenate %1135, %1136 in 0 : vector<1x32xf32>, vector<1x32xf32> -> vector<2x32xf32>
    %1138 = arith.truncf %1134 : vector<2x32xf32> to vector<2x32xbf16>
    %cst_269 = arith.constant dense<0.000000e+00> : vector<2x32xf32>
    %1139 = tpu.matmul %1138, %1081, %cst_269 {dimension_numbers = #tpu.dot_dimension_numbers<[1], [0], [0], [1], [0, 0, 1, 1], [], []>} : vector<2x32xbf16>, vector<32x32xbf16>, vector<2x32xf32> -> vector<2x32xf32>
    %1140 = arith.addf %1137, %1139 : vector<2x32xf32>
    %1141 = math.tanh %1140 : vector<2x32xf32>
    %1142 = vector.extract_strided_slice %1087 {offsets = [7, 0], sizes = [1, 32], strides = [1, 1]} : vector<10x32xf32> to vector<1x32xf32>
    %1143 = vector.extract_strided_slice %1091 {offsets = [7, 0], sizes = [1, 32], strides = [1, 1]} : vector<10x32xf32> to vector<1x32xf32>
    %1144 = tpu.concatenate %1142, %1143 in 0 : vector<1x32xf32>, vector<1x32xf32> -> vector<2x32xf32>
    %1145 = arith.truncf %1141 : vector<2x32xf32> to vector<2x32xbf16>
    %cst_270 = arith.constant dense<0.000000e+00> : vector<2x32xf32>
    %1146 = tpu.matmul %1145, %1081, %cst_270 {dimension_numbers = #tpu.dot_dimension_numbers<[1], [0], [0], [1], [0, 0, 1, 1], [], []>} : vector<2x32xbf16>, vector<32x32xbf16>, vector<2x32xf32> -> vector<2x32xf32>
    %1147 = arith.addf %1144, %1146 : vector<2x32xf32>
    %1148 = math.tanh %1147 : vector<2x32xf32>
    %1149 = vector.extract_strided_slice %1087 {offsets = [8, 0], sizes = [1, 32], strides = [1, 1]} : vector<10x32xf32> to vector<1x32xf32>
    %1150 = vector.extract_strided_slice %1091 {offsets = [8, 0], sizes = [1, 32], strides = [1, 1]} : vector<10x32xf32> to vector<1x32xf32>
    %1151 = tpu.concatenate %1149, %1150 in 0 : vector<1x32xf32>, vector<1x32xf32> -> vector<2x32xf32>
    %1152 = arith.truncf %1148 : vector<2x32xf32> to vector<2x32xbf16>
    %cst_271 = arith.constant dense<0.000000e+00> : vector<2x32xf32>
    %1153 = tpu.matmul %1152, %1081, %cst_271 {dimension_numbers = #tpu.dot_dimension_numbers<[1], [0], [0], [1], [0, 0, 1, 1], [], []>} : vector<2x32xbf16>, vector<32x32xbf16>, vector<2x32xf32> -> vector<2x32xf32>
    %1154 = arith.addf %1151, %1153 : vector<2x32xf32>
    %1155 = math.tanh %1154 : vector<2x32xf32>
    %1156 = vector.extract_strided_slice %1087 {offsets = [9, 0], sizes = [1, 32], strides = [1, 1]} : vector<10x32xf32> to vector<1x32xf32>
    %1157 = vector.extract_strided_slice %1091 {offsets = [9, 0], sizes = [1, 32], strides = [1, 1]} : vector<10x32xf32> to vector<1x32xf32>
    %1158 = tpu.concatenate %1156, %1157 in 0 : vector<1x32xf32>, vector<1x32xf32> -> vector<2x32xf32>
    %1159 = arith.truncf %1155 : vector<2x32xf32> to vector<2x32xbf16>
    %cst_272 = arith.constant dense<0.000000e+00> : vector<2x32xf32>
    %1160 = tpu.matmul %1159, %1081, %cst_272 {dimension_numbers = #tpu.dot_dimension_numbers<[1], [0], [0], [1], [0, 0, 1, 1], [], []>} : vector<2x32xbf16>, vector<32x32xbf16>, vector<2x32xf32> -> vector<2x32xf32>
    %1161 = arith.addf %1158, %1160 : vector<2x32xf32>
    %1162 = math.tanh %1161 : vector<2x32xf32>
    %c368 = arith.constant 368 : index
    %c0_273 = arith.constant 0 : index
    %1163 = vector.load %arg2[%c368, %c0_273] : memref<400x128xbf16, #tpu.memory_space<vmem>>, vector<32x2xbf16>
    %1164 = arith.truncf %1162 : vector<2x32xf32> to vector<2x32xbf16>
    %cst_274 = arith.constant dense<0.000000e+00> : vector<2x2xf32>
    %1165 = tpu.matmul %1164, %1163, %cst_274 {dimension_numbers = #tpu.dot_dimension_numbers<[1], [0], [0], [1], [0, 0, 1, 1], [], []>} : vector<2x32xbf16>, vector<32x2xbf16>, vector<2x2xf32> -> vector<2x2xf32>
    %c216 = arith.constant 216 : index
    %c0_275 = arith.constant 0 : index
    %1166 = vector.load %arg3[%c216, %c0_275] : memref<224x128xf32, #tpu.memory_space<vmem>>, vector<1x2xf32>
    %1167 = vector.broadcast %1166 : vector<1x2xf32> to vector<2x2xf32>
    %1168 = arith.addf %1165, %1167 : vector<2x2xf32>
    %cst_276 = arith.constant dense<0xFF800000> : vector<2xf32>
    %1169 = vector.multi_reduction <maximumf>, %1168, %cst_276 [1] : vector<2x2xf32> to vector<2xf32>
    %1170 = vector.shape_cast %1169 : vector<2xf32> to vector<2x1xf32>
    %1171 = vector.broadcast %1170 : vector<2x1xf32> to vector<2x2xf32>
    %1172 = arith.subf %1168, %1171 : vector<2x2xf32>
    %1173 = math.exp %1172 : vector<2x2xf32>
    %cst_277 = arith.constant dense<0.000000e+00> : vector<2xf32>
    %1174 = vector.multi_reduction <add>, %1173, %cst_277 [1] : vector<2x2xf32> to vector<2xf32>
    %1175 = vector.shape_cast %1174 : vector<2xf32> to vector<2x1xf32>
    %1176 = math.log %1175 : vector<2x1xf32>
    %1177 = arith.addf %1170, %1176 : vector<2x1xf32>
    %1178 = vector.broadcast %1177 : vector<2x1xf32> to vector<2x2xf32>
    %1179 = arith.subf %1168, %1178 : vector<2x2xf32>
    %c0_278 = arith.constant 0 : index
    %c0_279 = arith.constant 0 : index
    %1180 = vector.load %arg4[%c0_278, %c0_279] : memref<2x2xf32, #tpu.memory_space<vmem>>, vector<2x2xf32>
    tpu.vector_store %arg4[%c0_278, %c0_279], %1179 {strides = array<i32>} : memref<2x2xf32, #tpu.memory_space<vmem>>, vector<2x2xf32>,
    return
  }
}

</mosaic_0001>

<llo_original>
// kernel: tpu_custom_call.1
$region0: #{tpu_custom_call.1}
  #allocation0 [shape = 'u32[]', space=smem, size = 0x4, offset = 0x4, fixed_abs, tag = 'smem constant byte address 0x4 - core index']
  #allocation1 [shape = 'u32[72,128]{1,0:T(1,128)}', space=vmem, size = 0x9000, scoped, tag = 'internal scratch']
  %s0 = inlined_call_operand.vmem [shape: s32[2,18,1], index: 0, kind: input, shape index: {}]
  %s1 = inlined_call_operand.vmem [shape: f32[2,32], index: 1, kind: input, shape index: {}]
  %s2 = inlined_call_operand.hbm [shape: bf16[400,128], index: 2, kind: input, shape index: {}]
  %s3 = inlined_call_operand.hbm [shape: f32[224,128], index: 3, kind: input, shape index: {}]
  %s4 = inlined_call_operand.hbm [shape: f32[2,2], index: 4, kind: output, shape index: {}]
  %s5 = sld [smem:[#allocation0]]
  $region34: #{tpu_custom_call.1} parent=0
    _
  %s7 = ssub.s32 1, %s5
  %s8 = scalar_select 0, %s7, %s5
  $region1: #{tpu_custom_call.1} parent=0
    #allocation2 [shape = 'u8[102400]{0}', space=vmem, size = 0x19000, scoped, tag = 'input window, operand 2, single buffered']
    #allocation3 [shape = 's32[1]{0}', space=sflag, size = 0x4, scoped, tag = 'scoped memory for tpu_custom_call.1']
    #allocation4 [shape = 's32[1]{0}', space=sflag, size = 0x4, scoped, tag = 'scoped memory for tpu_custom_call.1']
    #allocation5 [shape = 'u8[114688]{0}', space=vmem, size = 0x1c000, scoped, tag = 'input window, operand 3, single buffered']
    #allocation6 [shape = 's32[1]{0}', space=sflag, size = 0x4, scoped, tag = 'scoped memory for tpu_custom_call.1']
    #allocation7 [shape = 'u8[1024]{0}', space=vmem, size = 0x400, scoped, tag = 'output window, operand 0, single buffered']
    %9 = vsyncpa [#allocation3], 0
    %10 = vsyncpa [#allocation6], 0
    %11 = vsyncpa [#allocation4], 0
    // Predicated region
    $region2: #{tpu_custom_call.1} parent=1 // pred_check
      _
    $region3: #{tpu_custom_call.1} parent=1 // pred_check_branch
      %13 = sbr.rel (0) target = $region5
    $region4: #{tpu_custom_call.1} parent=1 // pred_region
      _
    $region5: #{tpu_custom_call.1} parent=1 // pred_fallthru
      _
    // Predicated region
    $region6: #{tpu_custom_call.1} parent=1 // pred_check
      _
    $region7: #{tpu_custom_call.1} parent=1 // pred_check_branch
      %15 = sbr.rel (0) target = $region9
    $region8: #{tpu_custom_call.1} parent=1 // pred_region
      _
    $region9: #{tpu_custom_call.1} parent=1 // pred_fallthru
      _
    // Predicated region
    $region10: #{tpu_custom_call.1} parent=1 // pred_check
      _
    $region11: #{tpu_custom_call.1} parent=1 // pred_check_branch
      %17 = sbr.rel (0) target = $region13
    $region12: #{tpu_custom_call.1} parent=1 // pred_region
      %19 = vsyncadd [#allocation3], 0
      %s20 = sshll.u32 %s2, 4
      %s21 = int_to_ptr.hbm [resolvable:$true] %s20
      %s22 = sshll.u32 [#allocation2], 4
      %s23 = int_to_ptr.vmem [resolvable:$true] %s22
      %28 = dma.hbm_to_vmem [thread:$0]  %s21, 3200, %s23, [#allocation3], 64, 64, 4
    $region13: #{tpu_custom_call.1} parent=1 // pred_fallthru
      _
    // Predicated region
    $region14: #{tpu_custom_call.1} parent=1 // pred_check
      _
    $region15: #{tpu_custom_call.1} parent=1 // pred_check_branch
      %30 = sbr.rel (0) target = $region17
    $region16: #{tpu_custom_call.1} parent=1 // pred_region
      %32 = vsyncadd [#allocation6], 0
      %s33 = sshll.u32 %s3, 4
      %s34 = int_to_ptr.hbm [resolvable:$true] %s33
      %s35 = sshll.u32 [#allocation5], 4
      %s36 = int_to_ptr.vmem [resolvable:$true] %s35
      %41 = dma.hbm_to_vmem [thread:$0]  %s34, 3584, %s36, [#allocation6], 128, 128, 8
    $region17: #{tpu_custom_call.1} parent=1 // pred_fallthru
      _
    // Predicated region
    $region18: #{tpu_custom_call.1} parent=1 // pred_check
      _
    $region19: #{tpu_custom_call.1} parent=1 // pred_check_branch
      %43 = sbr.rel (0) target = $region21
    $region20: #{tpu_custom_call.1} parent=1 // pred_region
      %45 = dma.done [#allocation3], 3200
    $region21: #{tpu_custom_call.1} parent=1 // pred_fallthru
      _
    // Predicated region
    $region22: #{tpu_custom_call.1} parent=1 // pred_check
      _
    $region23: #{tpu_custom_call.1} parent=1 // pred_check_branch
      %47 = sbr.rel (0) target = $region25
    $region24: #{tpu_custom_call.1} parent=1 // pred_region
      %49 = dma.done [#allocation6], 3584
    $region25: #{tpu_custom_call.1} parent=1 // pred_fallthru
      _
    %v51 = vld [vmem:[%s0] sm:$0xff]
    %v52 = vld [vmem:[%s0 + $0x8] sm:$0xff]
    %v53 = vld [vmem:[%s0 + $0x10] sm:$0x3]
    %v54 = vlaneseq
    %v55 = vand.u32 %v54, 127
    %56 = vset.pattern.permute.xlu0 0
    %57 = vperm.xlu0 %56, %v51
    %v58 = vpop.permute.xlu0 %57
    %59 = vset.pattern.permute.xlu0 0
    %60 = vperm.xlu0 %59, %v52
    %v61 = vpop.permute.xlu0 %60
    %62 = vset.pattern.permute.xlu0 0
    %63 = vperm.xlu0 %62, %v53
    %v64 = vpop.permute.xlu0 %63
    %vm65 = vcmp.eq.s32.totalorder %v55, %v58
    %vm66 = vcmp.eq.s32.totalorder %v55, %v61
    %vm67 = vcmp.eq.s32.totalorder %v55, %v64
    %v68 = vld [vmem:[#allocation2] sm:$0xf]
    %v69 = vld [vmem:[#allocation2 + $0x4] sm:$0xf]
    %v70 = vld [vmem:[#allocation2 + $0x8] sm:$0xf]
    %v71 = vld [vmem:[#allocation2 + $0xc] sm:$0xf]
    %v72 = vld [vmem:[#allocation2 + $0x10] sm:$0xf]
    %v73 = vld [vmem:[#allocation2 + $0x14] sm:$0xf]
    %v74 = vld [vmem:[#allocation2 + $0x18] sm:$0xf]
    %v75 = vld [vmem:[#allocation2 + $0x1c] sm:$0xf]
    %v76 = vld [vmem:[#allocation2 + $0x20] sm:$0xf]
    %v77 = vld [vmem:[#allocation2 + $0x24] sm:$0xf]
    %v78 = vld [vmem:[#allocation2 + $0x28] sm:$0xf]
    %v79 = vld [vmem:[#allocation2 + $0x2c] sm:$0xf]
    %v80 = vld [vmem:[#allocation2 + $0x30] sm:$0x3]
    %v81 = vsel %vm65, 1, 0
    %v82 = vsel %vm66, 1, 0
    %v83 = vsel %vm67, 1, 0
    %v84 = vcvt.s32.f32 %v81
    %v85 = vcvt.s32.f32 %v82
    %v86 = vcvt.s32.f32 %v83
    %v87 = vpack.c.bf16 %v85, %v84
    %v88 = vpack.c.bf16 %v86, %v86
    %v102 = vunpack.c.l.b16 %v68
    %v103 = vunpack.c.l.b16 %v69
    %v104 = vunpack.c.l.b16 %v70
    %v105 = vunpack.c.l.b16 %v71
    %v106 = vunpack.c.l.b16 %v72
    %v107 = vunpack.c.l.b16 %v73
    %v108 = vunpack.c.l.b16 %v74
    %v109 = vunpack.c.l.b16 %v75
    %v110 = vunpack.c.l.b16 %v76
    %v111 = vunpack.c.l.b16 %v77
    %v112 = vunpack.c.l.b16 %v78
    %v113 = vunpack.c.l.b16 %v79
    %v114 = vunpack.c.l.b16 %v80
    %v115 = vpack.c.b16 %v103, %v102
    %v116 = vpack.c.b16 %v105, %v104
    %v117 = vpack.c.b16 %v107, %v106
    %v118 = vpack.c.b16 %v109, %v108
    %v119 = vpack.c.b16 %v111, %v110
    %v120 = vpack.c.b16 %v113, %v112
    %v121 = vpack.c.b16 %v114, %v114
    %vm128 = vcmask 818176
    %v130 = vsel %vm128, %v87, 0
    %v133 = vsel %vm128, %v88, 0
    %vm135 = vcmask 1041408
    %v137 = vsel %vm135, %v121, 0
    %139 = vmatpush.bf16.msra.mxu0 0
    %140 = vmatpush.bf16.msra.mxu0 %v137
    %141 = vmatpush.bf16.msra.mxu0 %v120
    %142 = vmatpush.bf16.msra.mxu0 %v119
    %143 = vmatpush.bf16.msra.mxu0 %v118
    %144 = vmatpush.bf16.msra.mxu0 %v117
    %145 = vmatpush.bf16.msra.mxu0 %v116
    %146 = vmatpush.bf16.msra.mxu0 %v115
    %147 = vmatmul.bf16.gmra.mxu0 %v130
    %v148 = vpop.f32.mrf.mxu0
    %v149 = vadd.f32 0.0, %v148
    %v150 = vpop.f32.mrf.mxu0
    %v151 = vadd.f32 0.0, %v150
    %152 = vmatmul.bf16.gmra.mxu0 %v133
    %v153 = vpop.f32.mrf.mxu0
    %v154 = vadd.f32 0.0, %v153
    %v155 = vpop.f32.mrf.mxu0
    %156 = vdwg.mxu0
    %v157 = vld [vmem:[#allocation2 + $0x38] sm:$0xf]
    %v158 = vld [vmem:[#allocation2 + $0x3c] sm:$0xf]
    %v159 = vpack.c.bf16 %v151, %v149
    %v160 = vpack.c.bf16 %v154, %v154
    %v161 = vld [vmem:[#allocation5] sm:$0x1]
    %v162 = vperm.slane %v161, 0
    %v165 = vunpack.c.l.b16 %v157
    %v166 = vunpack.c.l.b16 %v158
    %v167 = vpack.c.b16 %v166, %v165
    %vm169 = vcmask 130048
    %v171 = vsel %vm169, %v159, 0
    %v174 = vsel %vm169, %v160, 0
    %176 = vmatpush.bf16.msra.mxu0 0
    %177 = vmatpush.bf16.msra.mxu0 0
    %178 = vmatpush.bf16.msra.mxu0 0
    %179 = vmatpush.bf16.msra.mxu0 0
    %180 = vmatpush.bf16.msra.mxu0 0
    %181 = vmatpush.bf16.msra.mxu0 0
    %182 = vmatpush.bf16.msra.mxu0 0
    %183 = vmatpush.bf16.msra.mxu0 %v167
    %184 = vmatmul.bf16.gmra.mxu0 %v171
    %v185 = vpop.f32.mrf.mxu0
    %v186 = vadd.f32 %v162, %v185
    %v187 = vpop.f32.mrf.mxu0
    %v188 = vadd.f32 %v162, %v187
    %189 = vmatmul.bf16.gmra.mxu0 %v174
    %v190 = vpop.f32.mrf.mxu0
    %v191 = vadd.f32 %v162, %v190
    %v192 = vpop.f32.mrf.mxu0
    %193 = vdwg.mxu0
    %v194 = vld [vmem:[#allocation5 + $0x40] sm:$0xff]
    %v195 = vld [vmem:[#allocation5 + $0x48] sm:$0xff]
    %v196 = vld [vmem:[#allocation5 + $0x50] sm:$0x3]
    %v197 = vlaneseq
    %v198 = vshrl.u32 %v197, 7
    %v199 = vadd.s32 %v198, 8
    %v200 = vadd.s32 %v198, 16
    %vm201 = vcmp.eq.s32.totalorder %v198, %v55
    %vm202 = vcmp.eq.s32.totalorder %v199, %v55
    %vm203 = vcmp.eq.s32.totalorder %v200, %v55
    %v204 = vsel %vm201, 1, 0
    %v205 = vsel %vm202, 1, 0
    %v206 = vsel %vm203, 1, 0
    %v207 = vcvt.s32.f32 %v204
    %v208 = vcvt.s32.f32 %v205
    %v209 = vcvt.s32.f32 %v206
    %vm212 = vcmask 1040384
    %v213 = vrot.slane %v186, 7
    %v214 = vrot.slane %v188, 7
    %v215 = vsel %vm212, %v213, %v214
    %216 = vrot.lane.b32.xlu0 %v213, 120
    %v217 = vpop.permute.xlu0 %216
    %218 = vrot.lane.b32.xlu0 %v215, 120
    %v219 = vpop.permute.xlu0 %218
    %v222 = vsel %vm212, %v188, %v217
    %v223 = vpack.c.bf16 %v222, %v186
    %v224 = vpack.c.bf16 %v219, %v219
    %227 = vrot.lane.b32.xlu0 %v223, 112
    %v228 = vpop.permute.xlu0 %227
    %229 = vrot.lane.b32.xlu0 %v224, 112
    %v230 = vpop.permute.xlu0 %229
    %vm231 = vcmask 64512
    %v233 = vsel %vm231, %v223, 0
    %v236 = vsel %vm231, %v224, 0
    %v239 = vsel %vm231, %v228, 0
    %v242 = vsel %vm231, %v230, 0
    %244 = vmatpush.bf16.xpose.msra.mxu0 0
    %245 = vmatpush.bf16.xpose.msra.mxu0 0
    %246 = vmatpush.bf16.xpose.msra.mxu0 0
    %247 = vmatpush.bf16.xpose.msra.mxu0 0
    %248 = vmatpush.bf16.xpose.msra.mxu0 0
    %249 = vmatpush.bf16.xpose.msra.mxu0 0
    %250 = vmatpush.bf16.xpose.msra.mxu0 %v242
    %251 = vmatpush.bf16.xpose.msra.mxu0 %v239
    %252 = vmatmul.bf16.gmra.mxu0 %v233
    %v253 = vpop.f32.mrf.mxu0
    %v254 = vadd.f32 0.0, %v253
    %v255 = vpop.f32.mrf.mxu0
    %v256 = vadd.f32 0.0, %v255
    %257 = vmatmul.bf16.gmra.mxu0 %v236
    %v258 = vpop.f32.mrf.mxu0
    %v259 = vadd.f32 0.0, %v258
    %v260 = vpop.f32.mrf.mxu0
    %261 = vdwg.mxu0
    %v262 = vmul.f32 %v254, %v194
    %v263 = vmul.f32 %v256, %v195
    %v264 = vmul.f32 %v259, %v196
    %vm265 = vcmask 146432
    %v266 = vsel %vm265, %v262, 0.0
    %267 = vadd.xlane.f32.xlu0 %v266
    %v268 = vpop.xlane.xlu0 %267
    %v269 = vsel %vm265, %v263, 0.0
    %270 = vadd.xlane.f32.xlu0 %v269
    %v271 = vpop.xlane.xlu0 %270
    %vm272 = vcmask 140288
    %v273 = vsel %vm272, %v264, 0.0
    %274 = vadd.xlane.f32.xlu0 %v273
    %v275 = vpop.xlane.xlu0 %274
    %vm276 = vcmp.gt.f32.partialorder %v194, 0.0
    %vm277 = vcmp.gt.f32.partialorder %v195, 0.0
    %vm278 = vcmp.gt.f32.partialorder %v196, 0.0
    %v279 = vsel %vm276, %v254, -inf
    %v280 = vsel %vm277, %v256, -inf
    %v281 = vsel %vm278, %v259, -inf
    %v282 = vsel %vm265, %v279, -inf
    %283 = vmax.xlane.f32.xlu0 %v282
    %v284 = vpop.xlane.xlu0 %283
    %v285 = vsel %vm265, %v280, -inf
    %286 = vmax.xlane.f32.xlu0 %v285
    %v287 = vpop.xlane.xlu0 %286
    %v288 = vsel %vm272, %v281, -inf
    %289 = vmax.xlane.f32.xlu0 %v288
    %v290 = vpop.xlane.xlu0 %289
    %v291 = vmul.f32 %v268, 0.055555556
    %v292 = vmul.f32 %v271, 0.055555556
    %v293 = vmul.f32 %v275, 0.055555556
    %v294 = vsub.f32 %v284, %v291
    %v295 = vsub.f32 %v287, %v292
    %v296 = vsub.f32 %v290, %v293
    %v297 = vmul.f32 %v207, %v294
    %v298 = vmul.f32 %v208, %v295
    %v299 = vmul.f32 %v209, %v296
    %v300 = vsel %vm265, %v297, 0.0
    %v301 = vsel %vm265, %v298, 0.0
    %v302 = vadd.f32 %v300, %v301
    %v303 = vsel %vm272, %v299, 0.0
    %v304 = vadd.f32 %v302, %v303
    %v305 = vrot.slane %v304, 4
    %v306 = vadd.f32 %v304, %v305
    %v307 = vrot.slane %v306, 2
    %v308 = vadd.f32 %v306, %v307
    %v309 = vrot.slane %v308, 1
    %v310 = vadd.f32 %v308, %v309
    %vm311 = vcmp.gt.f32.partialorder %v310, %v294
    %vm312 = vcmp.gt.f32.partialorder %v310, %v295
    %vm313 = vcmp.gt.f32.partialorder %v310, %v296
    %vm314 = vcmp.ne.s32.totalorder %v55, %v198
    %vm315 = vcmp.ne.s32.totalorder %v55, %v199
    %vm316 = vcmp.ne.s32.totalorder %v55, %v200
    %vm317 = vmand %vm311, %vm314
    %vm318 = vmand %vm312, %vm315
    %vm319 = vmand %vm313, %vm316
    %vm320 = vcmp.eq.f32.partialorder %v310, %v294
    %vm321 = vcmp.eq.f32.partialorder %v310, %v295
    %vm322 = vcmp.eq.f32.partialorder %v310, %v296
    %vm323 = vcmp.lt.s32.totalorder %v55, %v198
    %vm324 = vcmp.lt.s32.totalorder %v55, %v199
    %vm325 = vcmp.lt.s32.totalorder %v55, %v200
    %vm326 = vmand %vm320, %vm323
    %vm327 = vmand %vm321, %vm324
    %vm328 = vmand %vm322, %vm325
    %vm329 = vmor %vm317, %vm326
    %vm330 = vmor %vm318, %vm327
    %vm331 = vmor %vm319, %vm328
    %v332 = vsel %vm329, 1, 0
    %v333 = vsel %vm330, 1, 0
    %v334 = vsel %vm331, 1, 0
    %v335 = vcvt.s32.f32 %v332
    %v336 = vcvt.s32.f32 %v333
    %v337 = vcvt.s32.f32 %v334
    %v338 = vsel %vm265, %v335, 0.0
    %339 = vadd.xlane.f32.xlu0 %v338
    %v340 = vpop.xlane.xlu0 %339
    %v341 = vsel %vm265, %v336, 0.0
    %342 = vadd.xlane.f32.xlu0 %v341
    %v343 = vpop.xlane.xlu0 %342
    %v344 = vsel %vm272, %v337, 0.0
    %345 = vadd.xlane.f32.xlu0 %v344
    %v346 = vpop.xlane.xlu0 %345
    %vm347 = vcmp.lt.f32.partialorder %v340, 6.0
    %vm348 = vcmp.lt.f32.partialorder %v343, 6.0
    %vm349 = vcmp.lt.f32.partialorder %v346, 6.0
    %vm350 = vcmask 326912
    %v351 = vsel %vm350, %v186, 0.0
    %v352 = vsel %vm350, %v222, 0.0
    %v353 = vadd.f32 %v351, %v352
    %vm354 = vcmask 320768
    %v355 = vsel %vm354, %v219, 0.0
    %v356 = vadd.f32 %v353, %v355
    %v357 = vrot.slane %v356, 4
    %v358 = vadd.f32 %v356, %v357
    %v359 = vrot.slane %v358, 2
    %v360 = vadd.f32 %v358, %v359
    %v361 = vrot.slane %v360, 1
    %v362 = vadd.f32 %v360, %v361
    %v363 = vmul.f32 %v254, 0.35355338
    %v364 = vmul.f32 %v256, 0.35355338
    %v365 = vmul.f32 %v259, 0.35355338
    %v366 = vsel %vm265, %v363, -inf
    %367 = vmax.xlane.f32.xlu0 %v366
    %v368 = vpop.xlane.xlu0 %367
    %v369 = vsel %vm265, %v364, -inf
    %370 = vmax.xlane.f32.xlu0 %v369
    %v371 = vpop.xlane.xlu0 %370
    %v372 = vsel %vm272, %v365, -inf
    %373 = vmax.xlane.f32.xlu0 %v372
    %v374 = vpop.xlane.xlu0 %373
    %v375 = vsub.f32 %v363, %v368
    %v376 = vsub.f32 %v364, %v371
    %v377 = vsub.f32 %v365, %v374
    %v378 = vmul.f32 %v375, 1.442695
    %v379 = vpow.pop %v378
    %v380 = vmul.f32 %v376, 1.442695
    %v381 = vpow.pop %v380
    %v382 = vmul.f32 %v377, 1.442695
    %v383 = vpow.pop %v382
    %v384 = vsel %vm265, %v379, 0.0
    %385 = vadd.xlane.f32.xlu0 %v384
    %v386 = vpop.xlane.xlu0 %385
    %v387 = vsel %vm265, %v381, 0.0
    %388 = vadd.xlane.f32.xlu0 %v387
    %v389 = vpop.xlane.xlu0 %388
    %v390 = vsel %vm272, %v383, 0.0
    %391 = vadd.xlane.f32.xlu0 %v390
    %v392 = vpop.xlane.xlu0 %391
    %v393 = vrcp.pop %v386
    %v394 = vmul.f32 %v386, %v393
    %v395 = vsub.f32 1.0, %v394
    %v396 = vmul.f32 %v393, %v395
    %v397 = vadd.f32 %v393, %v396
    %vm398 = vweird.f32 %v386
    %vm399 = vweird.f32 %v393
    %vm400 = vmor %vm398, %vm399
    %v401 = vsel %vm400, %v393, %v397
    %v402 = vand.u32 2147483647, %v386
    %vm403 = vcmp.eq.f32.partialorder %v402, 8.507059e+37
    %v404 = vand.u32 %v386, 2147483648
    %v405 = vor.u32 1.1754944e-38, %v404
    %v406 = vsel %vm403, %v405, %v401
    %v407 = vmul.f32 %v379, %v406
    %v408 = vrcp.pop %v389
    %v409 = vmul.f32 %v389, %v408
    %v410 = vsub.f32 1.0, %v409
    %v411 = vmul.f32 %v408, %v410
    %v412 = vadd.f32 %v408, %v411
    %vm413 = vweird.f32 %v389
    %vm414 = vweird.f32 %v408
    %vm415 = vmor %vm413, %vm414
    %v416 = vsel %vm415, %v408, %v412
    %v417 = vand.u32 2147483647, %v389
    %vm418 = vcmp.eq.f32.partialorder %v417, 8.507059e+37
    %v419 = vand.u32 %v389, 2147483648
    %v420 = vor.u32 1.1754944e-38, %v419
    %v421 = vsel %vm418, %v420, %v416
    %v422 = vmul.f32 %v381, %v421
    %v423 = vrcp.pop %v392
    %v424 = vmul.f32 %v392, %v423
    %v425 = vsub.f32 1.0, %v424
    %v426 = vmul.f32 %v423, %v425
    %v427 = vadd.f32 %v423, %v426
    %vm428 = vweird.f32 %v392
    %vm429 = vweird.f32 %v423
    %vm430 = vmor %vm428, %vm429
    %v431 = vsel %vm430, %v423, %v427
    %v432 = vand.u32 2147483647, %v392
    %vm433 = vcmp.eq.f32.partialorder %v432, 8.507059e+37
    %v434 = vand.u32 %v392, 2147483648
    %v435 = vor.u32 1.1754944e-38, %v434
    %v436 = vsel %vm433, %v435, %v431
    %v437 = vmul.f32 %v383, %v436
    %v438 = vpack.c.bf16 %v422, %v407
    %v439 = vpack.c.bf16 %v437, %v437
    %440 = vrot.lane.b32.xlu0 %v223, 96
    %v441 = vpop.permute.xlu0 %440
    %442 = vrot.lane.b32.xlu0 %v224, 96
    %v443 = vpop.permute.xlu0 %442
    %v446 = vsel %vm265, %v438, 0
    %v449 = vsel %vm265, %v439, 0
    %v452 = vsel %vm212, %v443, 0
    %454 = vmatpush.bf16.msra.mxu0 0
    %455 = vmatpush.bf16.msra.mxu0 0
    %456 = vmatpush.bf16.msra.mxu0 0
    %457 = vmatpush.bf16.msra.mxu0 0
    %458 = vmatpush.bf16.msra.mxu0 0
    %459 = vmatpush.bf16.msra.mxu0 0
    %460 = vmatpush.bf16.msra.mxu0 %v452
    %461 = vmatpush.bf16.msra.mxu0 %v441
    %462 = vmatmul.bf16.gmra.mxu0 %v446
    %v463 = vpop.f32.mrf.mxu0
    %v464 = vadd.f32 0.0, %v463
    %v465 = vpop.f32.mrf.mxu0
    %v466 = vadd.f32 0.0, %v465
    %467 = vmatmul.bf16.gmra.mxu0 %v449
    %v468 = vpop.f32.mrf.mxu0
    %v469 = vadd.f32 0.0, %v468
    %v470 = vpop.f32.mrf.mxu0
    %471 = vdwg.mxu0
    %v472 = vsel %vm347, 1, 0
    %v473 = vsel %vm348, 1, 0
    %v474 = vsel %vm349, 1, 0
    %vm475 = vcmp.eq.s32.totalorder %v472, 1
    %vm476 = vcmp.eq.s32.totalorder %v473, 1
    %vm477 = vcmp.eq.s32.totalorder %v474, 1
    %479 = vrot.lane.b32.xlu0 %v362, 96
    %v480 = vpop.permute.xlu0 %479
    %v482 = vsel %vm475, %v464, %v480
    %v483 = vsel %vm476, %v466, %v480
    %v484 = vsel %vm477, %v469, %v480
    %vm487 = vcmask 1046528
    %v488 = vrot.slane %v483, 1
    %v489 = vrot.slane %v484, 1
    %v490 = vsel %vm487, %v488, %v489
    %491 = vrot.lane.b32.xlu0 %v490, 8
    %v492 = vpop.permute.xlu0 %491
    %493 = vrot.lane.b32.xlu0 %v489, 8
    %v494 = vpop.permute.xlu0 %493
    %v497 = vsel %vm231, %v482, %v492
    %v498 = vsel %vm231, %v483, %v494
    %v500 = vrot.slane %v188, 1
    %v501 = vrot.slane %v191, 1
    %v502 = vsel %vm487, %v500, %v501
    %505 = vrot.lane.b32.xlu0 %v188, 120
    %v506 = vpop.permute.xlu0 %505
    %507 = vrot.lane.b32.xlu0 %v191, 120
    %v508 = vpop.permute.xlu0 %507
    %v511 = vsel %vm212, %v501, %v506
    %v512 = vpack.c.bf16 %v511, %v502
    %v513 = vpack.c.bf16 %v508, %v508
    %516 = vrot.lane.b32.xlu0 %v512, 112
    %v517 = vpop.permute.xlu0 %516
    %518 = vrot.lane.b32.xlu0 %v513, 112
    %v519 = vpop.permute.xlu0 %518
    %v521 = vsel %vm231, %v512, 0
    %v524 = vsel %vm231, %v513, 0
    %v527 = vsel %vm231, %v517, 0
    %v530 = vsel %vm231, %v519, 0
    %532 = vmatpush.bf16.xpose.msra.mxu0 0
    %533 = vmatpush.bf16.xpose.msra.mxu0 0
    %534 = vmatpush.bf16.xpose.msra.mxu0 0
    %535 = vmatpush.bf16.xpose.msra.mxu0 0
    %536 = vmatpush.bf16.xpose.msra.mxu0 0
    %537 = vmatpush.bf16.xpose.msra.mxu0 0
    %538 = vmatpush.bf16.xpose.msra.mxu0 %v530
    %539 = vmatpush.bf16.xpose.msra.mxu0 %v527
    %540 = vmatmul.bf16.gmra.mxu0 %v521
    %v541 = vpop.f32.mrf.mxu0
    %v542 = vadd.f32 0.0, %v541
    %v543 = vpop.f32.mrf.mxu0
    %v544 = vadd.f32 0.0, %v543
    %545 = vmatmul.bf16.gmra.mxu0 %v524
    %v546 = vpop.f32.mrf.mxu0
    %v547 = vadd.f32 0.0, %v546
    %v548 = vpop.f32.mrf.mxu0
    %549 = vdwg.mxu0
    %v550 = vmul.f32 %v542, %v194
    %v551 = vmul.f32 %v544, %v195
    %v552 = vmul.f32 %v547, %v196
    %v553 = vsel %vm265, %v550, 0.0
    %554 = vadd.xlane.f32.xlu0 %v553
    %v555 = vpop.xlane.xlu0 %554
    %v556 = vsel %vm265, %v551, 0.0
    %557 = vadd.xlane.f32.xlu0 %v556
    %v558 = vpop.xlane.xlu0 %557
    %v559 = vsel %vm272, %v552, 0.0
    %560 = vadd.xlane.f32.xlu0 %v559
    %v561 = vpop.xlane.xlu0 %560
    %v562 = vsel %vm276, %v542, -inf
    %v563 = vsel %vm277, %v544, -inf
    %v564 = vsel %vm278, %v547, -inf
    %v565 = vsel %vm265, %v562, -inf
    %566 = vmax.xlane.f32.xlu0 %v565
    %v567 = vpop.xlane.xlu0 %566
    %v568 = vsel %vm265, %v563, -inf
    %569 = vmax.xlane.f32.xlu0 %v568
    %v570 = vpop.xlane.xlu0 %569
    %v571 = vsel %vm272, %v564, -inf
    %572 = vmax.xlane.f32.xlu0 %v571
    %v573 = vpop.xlane.xlu0 %572
    %v574 = vmul.f32 %v555, 0.055555556
    %v575 = vmul.f32 %v558, 0.055555556
    %v576 = vmul.f32 %v561, 0.055555556
    %v577 = vsub.f32 %v567, %v574
    %v578 = vsub.f32 %v570, %v575
    %v579 = vsub.f32 %v573, %v576
    %v580 = vmul.f32 %v207, %v577
    %v581 = vmul.f32 %v208, %v578
    %v582 = vmul.f32 %v209, %v579
    %v583 = vsel %vm265, %v580, 0.0
    %v584 = vsel %vm265, %v581, 0.0
    %v585 = vadd.f32 %v583, %v584
    %v586 = vsel %vm272, %v582, 0.0
    %v587 = vadd.f32 %v585, %v586
    %v588 = vrot.slane %v587, 4
    %v589 = vadd.f32 %v587, %v588
    %v590 = vrot.slane %v589, 2
    %v591 = vadd.f32 %v589, %v590
    %v592 = vrot.slane %v591, 1
    %v593 = vadd.f32 %v591, %v592
    %vm594 = vcmp.gt.f32.partialorder %v593, %v577
    %vm595 = vcmp.gt.f32.partialorder %v593, %v578
    %vm596 = vcmp.gt.f32.partialorder %v593, %v579
    %vm597 = vmand %vm594, %vm314
    %vm598 = vmand %vm595, %vm315
    %vm599 = vmand %vm596, %vm316
    %vm600 = vcmp.eq.f32.partialorder %v593, %v577
    %vm601 = vcmp.eq.f32.partialorder %v593, %v578
    %vm602 = vcmp.eq.f32.partialorder %v593, %v579
    %vm603 = vmand %vm600, %vm323
    %vm604 = vmand %vm601, %vm324
    %vm605 = vmand %vm602, %vm325
    %vm606 = vmor %vm597, %vm603
    %vm607 = vmor %vm598, %vm604
    %vm608 = vmor %vm599, %vm605
    %v609 = vsel %vm606, 1, 0
    %v610 = vsel %vm607, 1, 0
    %v611 = vsel %vm608, 1, 0
    %v612 = vcvt.s32.f32 %v609
    %v613 = vcvt.s32.f32 %v610
    %v614 = vcvt.s32.f32 %v611
    %v615 = vsel %vm265, %v612, 0.0
    %616 = vadd.xlane.f32.xlu0 %v615
    %v617 = vpop.xlane.xlu0 %616
    %v618 = vsel %vm265, %v613, 0.0
    %619 = vadd.xlane.f32.xlu0 %v618
    %v620 = vpop.xlane.xlu0 %619
    %v621 = vsel %vm272, %v614, 0.0
    %622 = vadd.xlane.f32.xlu0 %v621
    %v623 = vpop.xlane.xlu0 %622
    %vm624 = vcmp.lt.f32.partialorder %v617, 6.0
    %vm625 = vcmp.lt.f32.partialorder %v620, 6.0
    %vm626 = vcmp.lt.f32.partialorder %v623, 6.0
    %v627 = vsel %vm350, %v502, 0.0
    %v628 = vsel %vm350, %v511, 0.0
    %v629 = vadd.f32 %v627, %v628
    %v630 = vsel %vm354, %v508, 0.0
    %v631 = vadd.f32 %v629, %v630
    %v632 = vrot.slane %v631, 4
    %v633 = vadd.f32 %v631, %v632
    %v634 = vrot.slane %v633, 2
    %v635 = vadd.f32 %v633, %v634
    %v636 = vrot.slane %v635, 1
    %v637 = vadd.f32 %v635, %v636
    %v638 = vmul.f32 %v542, 0.35355338
    %v639 = vmul.f32 %v544, 0.35355338
    %v640 = vmul.f32 %v547, 0.35355338
    %v641 = vsel %vm265, %v638, -inf
    %642 = vmax.xlane.f32.xlu0 %v641
    %v643 = vpop.xlane.xlu0 %642
    %v644 = vsel %vm265, %v639, -inf
    %645 = vmax.xlane.f32.xlu0 %v644
    %v646 = vpop.xlane.xlu0 %645
    %v647 = vsel %vm272, %v640, -inf
    %648 = vmax.xlane.f32.xlu0 %v647
    %v649 = vpop.xlane.xlu0 %648
    %v650 = vsub.f32 %v638, %v643
    %v651 = vsub.f32 %v639, %v646
    %v652 = vsub.f32 %v640, %v649
    %v653 = vmul.f32 %v650, 1.442695
    %v654 = vpow.pop %v653
    %v655 = vmul.f32 %v651, 1.442695
    %v656 = vpow.pop %v655
    %v657 = vmul.f32 %v652, 1.442695
    %v658 = vpow.pop %v657
    %v659 = vsel %vm265, %v654, 0.0
    %660 = vadd.xlane.f32.xlu0 %v659
    %v661 = vpop.xlane.xlu0 %660
    %v662 = vsel %vm265, %v656, 0.0
    %663 = vadd.xlane.f32.xlu0 %v662
    %v664 = vpop.xlane.xlu0 %663
    %v665 = vsel %vm272, %v658, 0.0
    %666 = vadd.xlane.f32.xlu0 %v665
    %v667 = vpop.xlane.xlu0 %666
    %v668 = vrcp.pop %v661
    %v669 = vmul.f32 %v661, %v668
    %v670 = vsub.f32 1.0, %v669
    %v671 = vmul.f32 %v668, %v670
    %v672 = vadd.f32 %v668, %v671
    %vm673 = vweird.f32 %v661
    %vm674 = vweird.f32 %v668
    %vm675 = vmor %vm673, %vm674
    %v676 = vsel %vm675, %v668, %v672
    %v677 = vand.u32 2147483647, %v661
    %vm678 = vcmp.eq.f32.partialorder %v677, 8.507059e+37
    %v679 = vand.u32 %v661, 2147483648
    %v680 = vor.u32 1.1754944e-38, %v679
    %v681 = vsel %vm678, %v680, %v676
    %v682 = vmul.f32 %v654, %v681
    %v683 = vrcp.pop %v664
    %v684 = vmul.f32 %v664, %v683
    %v685 = vsub.f32 1.0, %v684
    %v686 = vmul.f32 %v683, %v685
    %v687 = vadd.f32 %v683, %v686
    %vm688 = vweird.f32 %v664
    %vm689 = vweird.f32 %v683
    %vm690 = vmor %vm688, %vm689
    %v691 = vsel %vm690, %v683, %v687
    %v692 = vand.u32 2147483647, %v664
    %vm693 = vcmp.eq.f32.partialorder %v692, 8.507059e+37
    %v694 = vand.u32 %v664, 2147483648
    %v695 = vor.u32 1.1754944e-38, %v694
    %v696 = vsel %vm693, %v695, %v691
    %v697 = vmul.f32 %v656, %v696
    %v698 = vrcp.pop %v667
    %v699 = vmul.f32 %v667, %v698
    %v700 = vsub.f32 1.0, %v699
    %v701 = vmul.f32 %v698, %v700
    %v702 = vadd.f32 %v698, %v701
    %vm703 = vweird.f32 %v667
    %vm704 = vweird.f32 %v698
    %vm705 = vmor %vm703, %vm704
    %v706 = vsel %vm705, %v698, %v702
    %v707 = vand.u32 2147483647, %v667
    %vm708 = vcmp.eq.f32.partialorder %v707, 8.507059e+37
    %v709 = vand.u32 %v667, 2147483648
    %v710 = vor.u32 1.1754944e-38, %v709
    %v711 = vsel %vm708, %v710, %v706
    %v712 = vmul.f32 %v658, %v711
    %v713 = vpack.c.bf16 %v697, %v682
    %v714 = vpack.c.bf16 %v712, %v712
    %715 = vrot.lane.b32.xlu0 %v512, 96
    %v716 = vpop.permute.xlu0 %715
    %717 = vrot.lane.b32.xlu0 %v513, 96
    %v718 = vpop.permute.xlu0 %717
    %v721 = vsel %vm265, %v713, 0
    %v724 = vsel %vm265, %v714, 0
    %v727 = vsel %vm212, %v718, 0
    %729 = vmatpush.bf16.msra.mxu0 0
    %730 = vmatpush.bf16.msra.mxu0 0
    %731 = vmatpush.bf16.msra.mxu0 0
    %732 = vmatpush.bf16.msra.mxu0 0
    %733 = vmatpush.bf16.msra.mxu0 0
    %734 = vmatpush.bf16.msra.mxu0 0
    %735 = vmatpush.bf16.msra.mxu0 %v727
    %736 = vmatpush.bf16.msra.mxu0 %v716
    %737 = vmatmul.bf16.gmra.mxu0 %v721
    %v738 = vpop.f32.mrf.mxu0
    %v739 = vadd.f32 0.0, %v738
    %v740 = vpop.f32.mrf.mxu0
    %v741 = vadd.f32 0.0, %v740
    %742 = vmatmul.bf16.gmra.mxu0 %v724
    %v743 = vpop.f32.mrf.mxu0
    %v744 = vadd.f32 0.0, %v743
    %v745 = vpop.f32.mrf.mxu0
    %746 = vdwg.mxu0
    %v747 = vsel %vm624, 1, 0
    %v748 = vsel %vm625, 1, 0
    %v749 = vsel %vm626, 1, 0
    %vm750 = vcmp.eq.s32.totalorder %v747, 1
    %vm751 = vcmp.eq.s32.totalorder %v748, 1
    %vm752 = vcmp.eq.s32.totalorder %v749, 1
    %754 = vrot.lane.b32.xlu0 %v637, 96
    %v755 = vpop.permute.xlu0 %754
    %v757 = vsel %vm750, %v739, %v755
    %v758 = vsel %vm751, %v741, %v755
    %v759 = vsel %vm752, %v744, %v755
    %v762 = vrot.slane %v758, 1
    %v763 = vrot.slane %v759, 1
    %v764 = vsel %vm487, %v762, %v763
    %765 = vrot.lane.b32.xlu0 %v764, 8
    %v766 = vpop.permute.xlu0 %765
    %767 = vrot.lane.b32.xlu0 %v763, 8
    %v768 = vpop.permute.xlu0 %767
    %v771 = vsel %vm231, %v757, %v766
    %v772 = vsel %vm231, %v758, %v768
    %v775 = vrot.slane %v771, 7
    %v776 = vrot.slane %v772, 7
    %v777 = vsel %vm212, %v775, %v776
    %v780 = vsel %vm212, %v498, %v775
    %v781 = vld [vmem:[#allocation2 + $0x40] sm:$0xf]
    %v782 = vld [vmem:[#allocation2 + $0x44] sm:$0xf]
    %v783 = vpack.c.bf16 %v780, %v497
    %v784 = vpack.c.bf16 %v777, %v777
    %v787 = vunpack.c.l.b16 %v781
    %v788 = vunpack.c.l.b16 %v782
    %v789 = vpack.c.b16 %v788, %v787
    %v792 = vsel %vm169, %v783, 0
    %v795 = vsel %vm169, %v784, 0
    %797 = vmatpush.bf16.msra.mxu0 0
    %798 = vmatpush.bf16.msra.mxu0 0
    %799 = vmatpush.bf16.msra.mxu0 0
    %800 = vmatpush.bf16.msra.mxu0 0
    %801 = vmatpush.bf16.msra.mxu0 0
    %802 = vmatpush.bf16.msra.mxu0 0
    %803 = vmatpush.bf16.msra.mxu0 0
    %804 = vmatpush.bf16.msra.mxu0 %v789
    %805 = vmatmul.bf16.gmra.mxu0 %v792
    %v806 = vpop.f32.mrf.mxu0
    %v807 = vadd.f32 0.0, %v806
    %v808 = vpop.f32.mrf.mxu0
    %v809 = vadd.f32 0.0, %v808
    %810 = vmatmul.bf16.gmra.mxu0 %v795
    %v811 = vpop.f32.mrf.mxu0
    %v812 = vadd.f32 0.0, %v811
    %v813 = vpop.f32.mrf.mxu0
    %814 = vdwg.mxu0
    %v815 = vadd.f32 %v149, %v807
    %v816 = vadd.f32 %v151, %v809
    %v817 = vadd.f32 %v154, %v812
    %v818 = vld [vmem:[#allocation5 + $0x8] sm:$0x1]
    %v819 = vperm.slane %v818, 0
    %v820 = vadd.f32 %v815, %v819
    %v821 = vadd.f32 %v816, %v819
    %v822 = vadd.f32 %v817, %v819
    %v823 = vld [vmem:[#allocation5 + $0x10] sm:$0x1]
    %v824 = vld [vmem:[#allocation5 + $0x18] sm:$0x1]
    %v825 = vsel %vm169, %v820, 0.0
    %826 = vadd.xlane.f32.xlu0 %v825
    %v827 = vpop.xlane.xlu0 %826
    %v828 = vsel %vm169, %v821, 0.0
    %829 = vadd.xlane.f32.xlu0 %v828
    %v830 = vpop.xlane.xlu0 %829
    %vm831 = vcmask 123904
    %v832 = vsel %vm831, %v822, 0.0
    %833 = vadd.xlane.f32.xlu0 %v832
    %v834 = vpop.xlane.xlu0 %833
    %v835 = vrcp.pop 16.0
    %v836 = vmul.f32 16.0, %v835
    %v837 = vsub.f32 1.0, %v836
    %v838 = vmul.f32 %v835, %v837
    %v839 = vadd.f32 %v835, %v838
    %vm840 = vweird.f32 %v835
    %v841 = vsel %vm840, %v835, %v839
    %v842 = vmul.f32 %v827, %v841
    %v843 = vmul.f32 %v830, %v841
    %v844 = vmul.f32 %v834, %v841
    %v845 = vsub.f32 %v820, %v842
    %v846 = vsub.f32 %v821, %v843
    %v847 = vsub.f32 %v822, %v844
    %v848 = vmul.f32 %v845, %v845
    %v849 = vmul.f32 %v846, %v846
    %v850 = vmul.f32 %v847, %v847
    %v851 = vsel %vm169, %v848, 0.0
    %852 = vadd.xlane.f32.xlu0 %v851
    %v853 = vpop.xlane.xlu0 %852
    %v854 = vsel %vm169, %v849, 0.0
    %855 = vadd.xlane.f32.xlu0 %v854
    %v856 = vpop.xlane.xlu0 %855
    %v857 = vsel %vm831, %v850, 0.0
    %858 = vadd.xlane.f32.xlu0 %v857
    %v859 = vpop.xlane.xlu0 %858
    %v860 = vmul.f32 %v853, %v841
    %v861 = vmul.f32 %v856, %v841
    %v862 = vmul.f32 %v859, %v841
    %v863 = vadd.f32 %v860, 1e-05
    %v864 = vadd.f32 %v861, 1e-05
    %v865 = vadd.f32 %v862, 1e-05
    %v866 = vrsqrt.pop %v863
    %v867 = vmul.f32 %v866, %v863
    %v868 = vmul.f32 %v867, %v866
    %v869 = vmul.f32 0.5, %v868
    %v870 = vsub.f32 1.5, %v869
    %v871 = vmul.f32 %v866, %v870
    %vm872 = vweird.f32 %v863
    %vm873 = vweird.f32 %v866
    %vm874 = vmor %vm872, %vm873
    %v875 = vsel %vm874, %v866, %v871
    %v876 = vrsqrt.pop %v864
    %v877 = vmul.f32 %v876, %v864
    %v878 = vmul.f32 %v877, %v876
    %v879 = vmul.f32 0.5, %v878
    %v880 = vsub.f32 1.5, %v879
    %v881 = vmul.f32 %v876, %v880
    %vm882 = vweird.f32 %v864
    %vm883 = vweird.f32 %v876
    %vm884 = vmor %vm882, %vm883
    %v885 = vsel %vm884, %v876, %v881
    %v886 = vrsqrt.pop %v865
    %v887 = vmul.f32 %v886, %v865
    %v888 = vmul.f32 %v887, %v886
    %v889 = vmul.f32 0.5, %v888
    %v890 = vsub.f32 1.5, %v889
    %v891 = vmul.f32 %v886, %v890
    %vm892 = vweird.f32 %v865
    %vm893 = vweird.f32 %v886
    %vm894 = vmor %vm892, %vm893
    %v895 = vsel %vm894, %v886, %v891
    %v896 = vmul.f32 %v845, %v875
    %v897 = vmul.f32 %v846, %v885
    %v898 = vmul.f32 %v847, %v895
    %v899 = vperm.slane %v823, 0
    %v900 = vmul.f32 %v896, %v899
    %v901 = vmul.f32 %v897, %v899
    %v902 = vmul.f32 %v898, %v899
    %v903 = vperm.slane %v824, 0
    %v904 = vadd.f32 %v900, %v903
    %v905 = vadd.f32 %v901, %v903
    %v906 = vadd.f32 %v902, %v903
    %v907 = vld [vmem:[#allocation2 + $0x48] sm:$0xf]
    %v908 = vld [vmem:[#allocation2 + $0x4c] sm:$0xf]
    %v909 = vpack.c.bf16 %v905, %v904
    %v910 = vpack.c.bf16 %v906, %v906
    %v911 = vld [vmem:[#allocation5 + $0x20] sm:$0x1]
    %v912 = vperm.slane %v911, 0
    %v915 = vunpack.c.l.b16 %v907
    %v916 = vunpack.c.l.b16 %v908
    %v917 = vpack.c.b16 %v916, %v915
    %v920 = vsel %vm169, %v909, 0
    %v923 = vsel %vm169, %v910, 0
    %925 = vmatpush.bf16.msra.mxu0 0
    %926 = vmatpush.bf16.msra.mxu0 0
    %927 = vmatpush.bf16.msra.mxu0 0
    %928 = vmatpush.bf16.msra.mxu0 0
    %929 = vmatpush.bf16.msra.mxu0 0
    %930 = vmatpush.bf16.msra.mxu0 0
    %931 = vmatpush.bf16.msra.mxu0 0
    %932 = vmatpush.bf16.msra.mxu0 %v917
    %933 = vmatmul.bf16.gmra.mxu0 %v920
    %v934 = vpop.f32.mrf.mxu0
    %v935 = vadd.f32 %v912, %v934
    %v936 = vpop.f32.mrf.mxu0
    %v937 = vadd.f32 %v912, %v936
    %938 = vmatmul.bf16.gmra.mxu0 %v923
    %v939 = vpop.f32.mrf.mxu0
    %v940 = vadd.f32 %v912, %v939
    %v941 = vpop.f32.mrf.mxu0
    %942 = vdwg.mxu0
    %v943 = vmul.f32 %v935, 0.5
    %v944 = vmul.f32 %v937, 0.5
    %v945 = vmul.f32 %v940, 0.5
    %v946 = vmul.f32 %v935, 0.044715
    %v947 = vmul.f32 %v937, 0.044715
    %v948 = vmul.f32 %v940, 0.044715
    %v949 = vmul.f32 %v946, %v935
    %v950 = vmul.f32 %v947, %v937
    %v951 = vmul.f32 %v948, %v940
    %v952 = vmul.f32 %v949, %v935
    %v953 = vmul.f32 %v950, %v937
    %v954 = vmul.f32 %v951, %v940
    %v955 = vadd.f32 %v935, %v952
    %v956 = vadd.f32 %v937, %v953
    %v957 = vadd.f32 %v940, %v954
    %v958 = vmul.f32 %v955, 0.7978846
    %v959 = vmul.f32 %v956, 0.7978846
    %v960 = vmul.f32 %v957, 0.7978846
    %v961 = vtanh.pop %v958
    %v962 = vtanh.pop %v959
    %v963 = vtanh.pop %v960
    %v964 = vadd.f32 %v961, 1.0
    %v965 = vadd.f32 %v962, 1.0
    %v966 = vadd.f32 %v963, 1.0
    %v967 = vmul.f32 %v943, %v964
    %v968 = vmul.f32 %v944, %v965
    %v969 = vmul.f32 %v945, %v966
    %v970 = vld [vmem:[#allocation2 + $0x50] sm:$0xf]
    %v971 = vld [vmem:[#allocation2 + $0x54] sm:$0xf]
    %v972 = vld [vmem:[#allocation2 + $0x58] sm:$0xf]
    %v973 = vld [vmem:[#allocation2 + $0x5c] sm:$0xf]
    %v974 = vpack.c.bf16 %v968, %v967
    %v975 = vpack.c.bf16 %v969, %v969
    %v976 = vld [vmem:[#allocation5 + $0x28] sm:$0x1]
    %v977 = vperm.slane %v976, 0
    %v982 = vunpack.c.l.b16 %v970
    %v983 = vunpack.c.l.b16 %v971
    %v984 = vunpack.c.l.b16 %v972
    %v985 = vunpack.c.l.b16 %v973
    %v986 = vpack.c.b16 %v983, %v982
    %v987 = vpack.c.b16 %v985, %v984
    %vm990 = vcmask 261120
    %v992 = vsel %vm990, %v974, 0
    %v995 = vsel %vm990, %v975, 0
    %997 = vmatpush.bf16.msra.mxu0 0
    %998 = vmatpush.bf16.msra.mxu0 0
    %999 = vmatpush.bf16.msra.mxu0 0
    %1000 = vmatpush.bf16.msra.mxu0 0
    %1001 = vmatpush.bf16.msra.mxu0 0
    %1002 = vmatpush.bf16.msra.mxu0 0
    %1003 = vmatpush.bf16.msra.mxu0 %v987
    %1004 = vmatpush.bf16.msra.mxu0 %v986
    %1005 = vmatmul.bf16.gmra.mxu0 %v992
    %v1006 = vpop.f32.mrf.mxu0
    %v1007 = vadd.f32 %v977, %v1006
    %v1008 = vpop.f32.mrf.mxu0
    %v1009 = vadd.f32 %v977, %v1008
    %1010 = vmatmul.bf16.gmra.mxu0 %v995
    %v1011 = vpop.f32.mrf.mxu0
    %v1012 = vadd.f32 %v977, %v1011
    %v1013 = vpop.f32.mrf.mxu0
    %1014 = vdwg.mxu0
    %v1015 = vadd.f32 %v904, %v1007
    %v1016 = vadd.f32 %v905, %v1009
    %v1017 = vadd.f32 %v906, %v1012
    %v1018 = vld [vmem:[#allocation5 + $0x30] sm:$0x1]
    %v1019 = vld [vmem:[#allocation5 + $0x38] sm:$0x1]
    %v1020 = vsel %vm169, %v1015, 0.0
    %1021 = vadd.xlane.f32.xlu0 %v1020
    %v1022 = vpop.xlane.xlu0 %1021
    %v1023 = vsel %vm169, %v1016, 0.0
    %1024 = vadd.xlane.f32.xlu0 %v1023
    %v1025 = vpop.xlane.xlu0 %1024
    %v1026 = vsel %vm831, %v1017, 0.0
    %1027 = vadd.xlane.f32.xlu0 %v1026
    %v1028 = vpop.xlane.xlu0 %1027
    %v1029 = vmul.f32 %v1022, %v841
    %v1030 = vmul.f32 %v1025, %v841
    %v1031 = vmul.f32 %v1028, %v841
    %v1032 = vsub.f32 %v1015, %v1029
    %v1033 = vsub.f32 %v1016, %v1030
    %v1034 = vsub.f32 %v1017, %v1031
    %v1035 = vmul.f32 %v1032, %v1032
    %v1036 = vmul.f32 %v1033, %v1033
    %v1037 = vmul.f32 %v1034, %v1034
    %v1038 = vsel %vm169, %v1035, 0.0
    %1039 = vadd.xlane.f32.xlu0 %v1038
    %v1040 = vpop.xlane.xlu0 %1039
    %v1041 = vsel %vm169, %v1036, 0.0
    %1042 = vadd.xlane.f32.xlu0 %v1041
    %v1043 = vpop.xlane.xlu0 %1042
    %v1044 = vsel %vm831, %v1037, 0.0
    %1045 = vadd.xlane.f32.xlu0 %v1044
    %v1046 = vpop.xlane.xlu0 %1045
    %v1047 = vmul.f32 %v1040, %v841
    %v1048 = vmul.f32 %v1043, %v841
    %v1049 = vmul.f32 %v1046, %v841
    %v1050 = vadd.f32 %v1047, 1e-05
    %v1051 = vadd.f32 %v1048, 1e-05
    %v1052 = vadd.f32 %v1049, 1e-05
    %v1053 = vrsqrt.pop %v1050
    %v1054 = vmul.f32 %v1053, %v1050
    %v1055 = vmul.f32 %v1054, %v1053
    %v1056 = vmul.f32 0.5, %v1055
    %v1057 = vsub.f32 1.5, %v1056
    %v1058 = vmul.f32 %v1053, %v1057
    %vm1059 = vweird.f32 %v1050
    %vm1060 = vweird.f32 %v1053
    %vm1061 = vmor %vm1059, %vm1060
    %v1062 = vsel %vm1061, %v1053, %v1058
    %v1063 = vrsqrt.pop %v1051
    %v1064 = vmul.f32 %v1063, %v1051
    %v1065 = vmul.f32 %v1064, %v1063
    %v1066 = vmul.f32 0.5, %v1065
    %v1067 = vsub.f32 1.5, %v1066
    %v1068 = vmul.f32 %v1063, %v1067
    %vm1069 = vweird.f32 %v1051
    %vm1070 = vweird.f32 %v1063
    %vm1071 = vmor %vm1069, %vm1070
    %v1072 = vsel %vm1071, %v1063, %v1068
    %v1073 = vrsqrt.pop %v1052
    %v1074 = vmul.f32 %v1073, %v1052
    %v1075 = vmul.f32 %v1074, %v1073
    %v1076 = vmul.f32 0.5, %v1075
    %v1077 = vsub.f32 1.5, %v1076
    %v1078 = vmul.f32 %v1073, %v1077
    %vm1079 = vweird.f32 %v1052
    %vm1080 = vweird.f32 %v1073
    %vm1081 = vmor %vm1079, %vm1080
    %v1082 = vsel %vm1081, %v1073, %v1078
    %v1083 = vmul.f32 %v1032, %v1062
    %v1084 = vmul.f32 %v1033, %v1072
    %v1085 = vmul.f32 %v1034, %v1082
    %v1086 = vperm.slane %v1018, 0
    %v1087 = vmul.f32 %v1083, %v1086
    %v1088 = vmul.f32 %v1084, %v1086
    %v1089 = vmul.f32 %v1085, %v1086
    %v1090 = vperm.slane %v1019, 0
    %v1091 = vadd.f32 %v1087, %v1090
    %v1092 = vadd.f32 %v1088, %v1090
    %v1093 = vadd.f32 %v1089, %v1090
    %v1096 = vrot.slane %v1091, 6
    %v1097 = vrot.slane %v1092, 6
    %v1098 = vsel %vm135, %v1096, %v1097
    %v1102 = vsel %vm135, %v1093, %v1096
    %v1103 = vld [vmem:[#allocation2 + $0x88] sm:$0xf]
    %v1104 = vld [vmem:[#allocation2 + $0x8c] sm:$0xf]
    %v1105 = vpack.c.bf16 %v1098, %v1102
    %v1106 = vpack.c.bf16 %v1097, %v1097
    %v1108 = vrot.slane %v1093, 1
    %v1110 = vrot.slane %v1091, 7
    %v1111 = vrot.slane %v1092, 7
    %v1112 = vsel %vm212, %v1110, %v1111
    %v1113 = vrot.slane %v1093, 7
    %v1114 = vsel %vm212, %v1111, %v1113
    %v1118 = vsel %vm212, %v1108, %v1110
    %v1119 = vld [vmem:[#allocation2 + $0x90] sm:$0xf]
    %v1120 = vld [vmem:[#allocation2 + $0x94] sm:$0xf]
    %v1121 = vpack.c.bf16 %v1112, %v1118
    %v1122 = vpack.c.bf16 %v1114, %v1114
    %v1125 = vunpack.c.l.b16 %v1119
    %v1126 = vunpack.c.l.b16 %v1120
    %v1127 = vpack.c.b16 %v1126, %v1125
    %v1130 = vsel %vm169, %v1121, 0
    %v1133 = vsel %vm169, %v1122, 0
    %1135 = vmatpush.bf16.msra.mxu0 0
    %1136 = vmatpush.bf16.msra.mxu0 0
    %1137 = vmatpush.bf16.msra.mxu0 0
    %1138 = vmatpush.bf16.msra.mxu0 0
    %1139 = vmatpush.bf16.msra.mxu0 0
    %1140 = vmatpush.bf16.msra.mxu0 0
    %1141 = vmatpush.bf16.msra.mxu0 0
    %1142 = vmatpush.bf16.msra.mxu0 %v1127
    %1143 = vmatmul.bf16.gmra.mxu0 %v1130
    %v1144 = vpop.f32.mrf.mxu0
    %v1145 = vadd.f32 0.0, %v1144
    %v1146 = vpop.f32.mrf.mxu0
    %v1147 = vadd.f32 0.0, %v1146
    %1148 = vmatmul.bf16.gmra.mxu0 %v1133
    %v1149 = vpop.f32.mrf.mxu0
    %v1150 = vadd.f32 0.0, %v1149
    %v1151 = vpop.f32.mrf.mxu0
    %1152 = vdwg.mxu0
    %v1155 = vunpack.c.l.b16 %v1103
    %v1156 = vunpack.c.l.b16 %v1104
    %v1157 = vpack.c.b16 %v1156, %v1155
    %v1160 = vsel %vm169, %v1105, 0
    %v1163 = vsel %vm169, %v1106, 0
    %1165 = vmatpush.bf16.msra.mxu0 0
    %1166 = vmatpush.bf16.msra.mxu0 0
    %1167 = vmatpush.bf16.msra.mxu0 0
    %1168 = vmatpush.bf16.msra.mxu0 0
    %1169 = vmatpush.bf16.msra.mxu0 0
    %1170 = vmatpush.bf16.msra.mxu0 0
    %1171 = vmatpush.bf16.msra.mxu0 0
    %1172 = vmatpush.bf16.msra.mxu0 %v1157
    %1173 = vmatmul.bf16.gmra.mxu0 %v1160
    %v1174 = vpop.f32.mrf.mxu0
    %v1175 = vadd.f32 %v1145, %v1174
    %v1176 = vpop.f32.mrf.mxu0
    %v1177 = vadd.f32 %v1147, %v1176
    %1178 = vmatmul.bf16.gmra.mxu0 %v1163
    %v1179 = vpop.f32.mrf.mxu0
    %v1180 = vadd.f32 %v1150, %v1179
    %v1181 = vpop.f32.mrf.mxu0
    %1182 = vdwg.mxu0
    %v1183 = vld [vmem:[#allocation2 + $0x98] sm:$0xf]
    %v1184 = vld [vmem:[#allocation2 + $0x9c] sm:$0xf]
    %v1185 = vpack.c.bf16 %v1092, %v1091
    %v1186 = vpack.c.bf16 %v1093, %v1093
    %v1189 = vunpack.c.l.b16 %v1183
    %v1190 = vunpack.c.l.b16 %v1184
    %v1191 = vpack.c.b16 %v1190, %v1189
    %v1194 = vsel %vm169, %v1185, 0
    %v1197 = vsel %vm169, %v1186, 0
    %1199 = vmatpush.bf16.msra.mxu0 0
    %1200 = vmatpush.bf16.msra.mxu0 0
    %1201 = vmatpush.bf16.msra.mxu0 0
    %1202 = vmatpush.bf16.msra.mxu0 0
    %1203 = vmatpush.bf16.msra.mxu0 0
    %1204 = vmatpush.bf16.msra.mxu0 0
    %1205 = vmatpush.bf16.msra.mxu0 0
    %1206 = vmatpush.bf16.msra.mxu0 %v1191
    %1207 = vmatmul.bf16.gmra.mxu0 %v1194
    %v1208 = vpop.f32.mrf.mxu0
    %v1209 = vadd.f32 0.0, %v1208
    %v1210 = vpop.f32.mrf.mxu0
    %v1211 = vadd.f32 0.0, %v1210
    %1212 = vmatmul.bf16.gmra.mxu0 %v1197
    %v1213 = vpop.f32.mrf.mxu0
    %v1214 = vadd.f32 0.0, %v1213
    %v1215 = vpop.f32.mrf.mxu0
    %1216 = vdwg.mxu0
    %v1217 = vadd.f32 %v1175, %v1209
    %v1218 = vadd.f32 %v1177, %v1211
    %v1219 = vadd.f32 %v1180, %v1214
    %v1220 = vld [vmem:[#allocation5 + $0xa8] sm:$0x1]
    %v1221 = vperm.slane %v1220, 0
    %v1222 = vadd.f32 %v1217, %v1221
    %v1223 = vadd.f32 %v1218, %v1221
    %v1224 = vadd.f32 %v1219, %v1221
    %v1225 = vld [vmem:[#allocation5 + $0xb0] sm:$0x1]
    %v1226 = vperm.slane %v1225, 0
    %v1227 = vmul.f32 %v1222, %v1226
    %v1228 = vmul.f32 %v1223, %v1226
    %v1229 = vmul.f32 %v1224, %v1226
    %v1230 = vld [vmem:[#allocation5 + $0xb8] sm:$0x1]
    %v1231 = vperm.slane %v1230, 0
    %v1232 = vadd.f32 %v1227, %v1231
    %v1233 = vadd.f32 %v1228, %v1231
    %v1234 = vadd.f32 %v1229, %v1231
    %vm1235 = vcmp.gt.f32.partialorder %v1232, 0.0
    %vm1236 = vcmp.gt.f32.partialorder %v1233, 0.0
    %vm1237 = vcmp.gt.f32.partialorder %v1234, 0.0
    %v1238 = vmin.f32 %v1232, 0.0
    %v1239 = vmin.f32 %v1233, 0.0
    %v1240 = vmin.f32 %v1234, 0.0
    %v1241 = vmul.f32 %v1238, 1.442695
    %v1242 = vpow.pop %v1241
    %v1243 = vmul.f32 %v1239, 1.442695
    %v1244 = vpow.pop %v1243
    %v1245 = vmul.f32 %v1240, 1.442695
    %v1246 = vpow.pop %v1245
    %v1247 = vsub.f32 %v1242, 1.0
    %v1248 = vsub.f32 %v1244, 1.0
    %v1249 = vsub.f32 %v1246, 1.0
    %v1250 = vsel %vm1235, %v1232, %v1247
    %v1251 = vsel %vm1236, %v1233, %v1248
    %v1252 = vsel %vm1237, %v1234, %v1249
    %v1254 = vrot.slane %v1250, 6
    %v1256 = vsel %vm135, %v1252, %v1254
    %v1258 = vrot.slane %v1256, 3
    %v1261 = vrot.slane %v1250, 7
    %v1262 = vrot.slane %v1251, 7
    %v1263 = vsel %vm212, %v1261, %v1262
    %v1264 = vrot.slane %v1256, 7
    %v1265 = vsel %vm212, %v1262, %v1264
    %v1269 = vsel %vm212, %v1258, %v1261
    %v1270 = vrot.slane %v1250, 1
    %v1271 = vrot.slane %v1251, 1
    %v1272 = vsel %vm487, %v1270, %v1271
    %v1273 = vrot.slane %v1256, 1
    %v1274 = vsel %vm487, %v1271, %v1273
    %v1278 = vrot.slane %v1250, 5
    %vm1280 = vcmask 1042432
    %v1281 = vsel %vm1280, %v1273, %v1278
    %v1282 = vmax.f32 %v1269, %v1272
    %v1283 = vmax.f32 %v1263, %v1274
    %v1284 = vmax.f32 %v1265, %v1281
    %v1285 = vmax.f32 %v1250, %v1282
    %v1286 = vmax.f32 %v1251, %v1283
    %v1287 = vmax.f32 %v1256, %v1284
    %v1288 = vmul.u32 %v198, 2
    %v1289 = vmul.u32 %v199, 2
    %vm1290 = vcmp.eq.s32.totalorder %v55, %v1288
    %vm1291 = vcmp.eq.s32.totalorder %v55, %v1289
    %v1292 = vsel %vm1290, 1, 0
    %v1293 = vsel %vm1291, 1, 0
    %v1294 = vcvt.s32.f32 %v1292
    %v1295 = vcvt.s32.f32 %v1293
    %vm1296 = vcmask 162816
    %v1298 = vsel %vm1296, %v1294, 0
    %v1301 = vsel %vm1296, %v1295, 0
    %vm1303 = vcmask 1043456
    %v1305 = vsel %vm1303, %v1287, 0
    %1307 = vmatpush.msra.mxu0 0.0
    %1308 = vmatpush.msra.mxu0 0.0
    %1309 = vmatpush.msra.mxu0 0.0
    %1310 = vmatpush.msra.mxu0 0.0
    %1311 = vmatpush.msra.mxu0 0.0
    %1312 = vmatpush.msra.mxu0 0.0
    %1313 = vmatpush.msra.mxu0 0.0
    %1314 = vmatpush.msra.mxu0 0.0
    %1315 = vmatpush.msra.mxu0 0.0
    %1316 = vmatpush.msra.mxu0 0.0
    %1317 = vmatpush.msra.mxu0 0.0
    %1318 = vmatpush.msra.mxu0 0.0
    %1319 = vmatpush.msra.mxu0 0.0
    %1320 = vmatpush.msra.mxu0 %v1305
    %1321 = vmatpush.msra.mxu0 %v1286
    %1322 = vmatpush.msra.mxu0 %v1285
    %1323 = vmatmul.f32.gmra.mxu0 %v1298
    %v1324 = vpop.f32.mrf.mxu0
    %v1325 = vadd.f32 0.0, %v1324
    %1326 = vmatmul.f32.gmra.mxu0 %v1301
    %v1327 = vpop.f32.mrf.mxu0
    %v1328 = vadd.f32 0.0, %v1327
    %1329 = vdwg.mxu0
    %v1330 = vld [vmem:[#allocation2 + $0x60] sm:$0xf]
    %v1331 = vld [vmem:[#allocation2 + $0x64] sm:$0xf]
    %v1332 = vpack.c.bf16 %v1328, %v1325
    %v1333 = vld [vmem:[#allocation5 + $0x58] sm:$0x1]
    %v1334 = vperm.slane %v1333, 0
    %v1337 = vunpack.c.l.b16 %v1330
    %v1338 = vunpack.c.l.b16 %v1331
    %v1339 = vpack.c.b16 %v1338, %v1337
    %v1342 = vsel %vm169, %v1332, 0
    %1344 = vmatpush.bf16.msra.mxu0 0
    %1345 = vmatpush.bf16.msra.mxu0 0
    %1346 = vmatpush.bf16.msra.mxu0 0
    %1347 = vmatpush.bf16.msra.mxu0 0
    %1348 = vmatpush.bf16.msra.mxu0 0
    %1349 = vmatpush.bf16.msra.mxu0 0
    %1350 = vmatpush.bf16.msra.mxu0 0
    %1351 = vmatpush.bf16.msra.mxu0 %v1339
    %1352 = vmatmul.bf16.gmra.mxu0 %v1342
    %v1353 = vpop.f32.mrf.mxu0
    %v1354 = vadd.f32 %v1334, %v1353
    %v1355 = vpop.f32.mrf.mxu0
    %v1356 = vadd.f32 %v1334, %v1355
    %1357 = vdwg.mxu0
    %v1358 = vld [vmem:[#allocation5 + $0x98] sm:$0xff]
    %v1359 = vld [vmem:[#allocation5 + $0xa0] sm:$0x3]
    %v1361 = vrot.slane %v1354, 3
    %1362 = vrot.lane.b32.xlu0 %v1361, 120
    %v1363 = vpop.permute.xlu0 %1362
    %vm1365 = vcmask 1044480
    %v1366 = vsel %vm1365, %v1354, %v1363
    %v1367 = vpack.c.bf16 %v1363, %v1366
    %1369 = vrot.lane.b32.xlu0 %v1367, 112
    %v1370 = vpop.permute.xlu0 %1369
    %v1372 = vsel %vm231, %v1367, 0
    %v1375 = vsel %vm231, %v1370, 0
    %1377 = vmatpush.bf16.xpose.msra.mxu0 0
    %1378 = vmatpush.bf16.xpose.msra.mxu0 0
    %1379 = vmatpush.bf16.xpose.msra.mxu0 0
    %1380 = vmatpush.bf16.xpose.msra.mxu0 0
    %1381 = vmatpush.bf16.xpose.msra.mxu0 0
    %1382 = vmatpush.bf16.xpose.msra.mxu0 0
    %1383 = vmatpush.bf16.xpose.msra.mxu0 0
    %1384 = vmatpush.bf16.xpose.msra.mxu0 %v1375
    %1385 = vmatmul.bf16.gmra.mxu0 %v1372
    %v1386 = vpop.f32.mrf.mxu0
    %v1387 = vadd.f32 0.0, %v1386
    %v1388 = vpop.f32.mrf.mxu0
    %v1389 = vadd.f32 0.0, %v1388
    %1390 = vdwg.mxu0
    %v1391 = vmul.f32 %v1387, %v1358
    %v1392 = vmul.f32 %v1389, %v1359
    %vm1393 = vcmask 80896
    %v1394 = vsel %vm1393, %v1391, 0.0
    %1395 = vadd.xlane.f32.xlu0 %v1394
    %v1396 = vpop.xlane.xlu0 %1395
    %vm1397 = vcmask 74752
    %v1398 = vsel %vm1397, %v1392, 0.0
    %1399 = vadd.xlane.f32.xlu0 %v1398
    %v1400 = vpop.xlane.xlu0 %1399
    %vm1401 = vcmp.gt.f32.partialorder %v1358, 0.0
    %vm1402 = vcmp.gt.f32.partialorder %v1359, 0.0
    %v1403 = vsel %vm1401, %v1387, -inf
    %v1404 = vsel %vm1402, %v1389, -inf
    %v1405 = vsel %vm1393, %v1403, -inf
    %1406 = vmax.xlane.f32.xlu0 %v1405
    %v1407 = vpop.xlane.xlu0 %1406
    %v1408 = vsel %vm1397, %v1404, -inf
    %1409 = vmax.xlane.f32.xlu0 %v1408
    %v1410 = vpop.xlane.xlu0 %1409
    %v1411 = vmul.f32 %v1396, 0.1
    %v1412 = vmul.f32 %v1400, 0.1
    %v1413 = vsub.f32 %v1407, %v1411
    %v1414 = vsub.f32 %v1410, %v1412
    %v1415 = vmul.f32 %v207, %v1413
    %v1416 = vmul.f32 %v208, %v1414
    %v1417 = vsel %vm1393, %v1415, 0.0
    %v1418 = vsel %vm1397, %v1416, 0.0
    %v1419 = vadd.f32 %v1417, %v1418
    %v1420 = vrot.slane %v1419, 4
    %v1421 = vadd.f32 %v1419, %v1420
    %v1422 = vrot.slane %v1421, 2
    %v1423 = vadd.f32 %v1421, %v1422
    %v1424 = vrot.slane %v1423, 1
    %v1425 = vadd.f32 %v1423, %v1424
    %vm1426 = vcmp.gt.f32.partialorder %v1425, %v1413
    %vm1427 = vcmp.gt.f32.partialorder %v1425, %v1414
    %vm1428 = vmand %vm1426, %vm314
    %vm1429 = vmand %vm1427, %vm315
    %vm1430 = vcmp.eq.f32.partialorder %v1425, %v1413
    %vm1431 = vcmp.eq.f32.partialorder %v1425, %v1414
    %vm1432 = vmand %vm1430, %vm323
    %vm1433 = vmand %vm1431, %vm324
    %vm1434 = vmor %vm1428, %vm1432
    %vm1435 = vmor %vm1429, %vm1433
    %v1436 = vsel %vm1434, 1, 0
    %v1437 = vsel %vm1435, 1, 0
    %v1438 = vcvt.s32.f32 %v1436
    %v1439 = vcvt.s32.f32 %v1437
    %v1440 = vsel %vm1393, %v1438, 0.0
    %1441 = vadd.xlane.f32.xlu0 %v1440
    %v1442 = vpop.xlane.xlu0 %1441
    %v1443 = vsel %vm1397, %v1439, 0.0
    %1444 = vadd.xlane.f32.xlu0 %v1443
    %v1445 = vpop.xlane.xlu0 %1444
    %vm1446 = vcmp.lt.f32.partialorder %v1442, 6.0
    %vm1447 = vcmp.lt.f32.partialorder %v1445, 6.0
    %v1448 = vsel %vm350, %v1366, 0.0
    %v1449 = vsel %vm354, %v1363, 0.0
    %v1450 = vadd.f32 %v1448, %v1449
    %v1451 = vrot.slane %v1450, 4
    %v1452 = vadd.f32 %v1450, %v1451
    %v1453 = vrot.slane %v1452, 2
    %v1454 = vadd.f32 %v1452, %v1453
    %v1455 = vrot.slane %v1454, 1
    %v1456 = vadd.f32 %v1454, %v1455
    %v1457 = vmul.f32 %v1387, 0.35355338
    %v1458 = vmul.f32 %v1389, 0.35355338
    %v1459 = vsel %vm1393, %v1457, -inf
    %1460 = vmax.xlane.f32.xlu0 %v1459
    %v1461 = vpop.xlane.xlu0 %1460
    %v1462 = vsel %vm1397, %v1458, -inf
    %1463 = vmax.xlane.f32.xlu0 %v1462
    %v1464 = vpop.xlane.xlu0 %1463
    %v1465 = vsub.f32 %v1457, %v1461
    %v1466 = vsub.f32 %v1458, %v1464
    %v1467 = vmul.f32 %v1465, 1.442695
    %v1468 = vpow.pop %v1467
    %v1469 = vmul.f32 %v1466, 1.442695
    %v1470 = vpow.pop %v1469
    %v1471 = vsel %vm1393, %v1468, 0.0
    %1472 = vadd.xlane.f32.xlu0 %v1471
    %v1473 = vpop.xlane.xlu0 %1472
    %v1474 = vsel %vm1397, %v1470, 0.0
    %1475 = vadd.xlane.f32.xlu0 %v1474
    %v1476 = vpop.xlane.xlu0 %1475
    %v1477 = vrcp.pop %v1473
    %v1478 = vmul.f32 %v1473, %v1477
    %v1479 = vsub.f32 1.0, %v1478
    %v1480 = vmul.f32 %v1477, %v1479
    %v1481 = vadd.f32 %v1477, %v1480
    %vm1482 = vweird.f32 %v1473
    %vm1483 = vweird.f32 %v1477
    %vm1484 = vmor %vm1482, %vm1483
    %v1485 = vsel %vm1484, %v1477, %v1481
    %v1486 = vand.u32 2147483647, %v1473
    %vm1487 = vcmp.eq.f32.partialorder %v1486, 8.507059e+37
    %v1488 = vand.u32 %v1473, 2147483648
    %v1489 = vor.u32 1.1754944e-38, %v1488
    %v1490 = vsel %vm1487, %v1489, %v1485
    %v1491 = vmul.f32 %v1468, %v1490
    %v1492 = vrcp.pop %v1476
    %v1493 = vmul.f32 %v1476, %v1492
    %v1494 = vsub.f32 1.0, %v1493
    %v1495 = vmul.f32 %v1492, %v1494
    %v1496 = vadd.f32 %v1492, %v1495
    %vm1497 = vweird.f32 %v1476
    %vm1498 = vweird.f32 %v1492
    %vm1499 = vmor %vm1497, %vm1498
    %v1500 = vsel %vm1499, %v1492, %v1496
    %v1501 = vand.u32 2147483647, %v1476
    %vm1502 = vcmp.eq.f32.partialorder %v1501, 8.507059e+37
    %v1503 = vand.u32 %v1476, 2147483648
    %v1504 = vor.u32 1.1754944e-38, %v1503
    %v1505 = vsel %vm1502, %v1504, %v1500
    %v1506 = vmul.f32 %v1470, %v1505
    %v1507 = vpack.c.bf16 %v1506, %v1491
    %1508 = vrot.lane.b32.xlu0 %v1367, 96
    %v1509 = vpop.permute.xlu0 %1508
    %v1511 = vsel %vm1393, %v1507, 0
    %v1514 = vsel %vm1365, %v1509, 0
    %1516 = vmatpush.bf16.msra.mxu0 0
    %1517 = vmatpush.bf16.msra.mxu0 0
    %1518 = vmatpush.bf16.msra.mxu0 0
    %1519 = vmatpush.bf16.msra.mxu0 0
    %1520 = vmatpush.bf16.msra.mxu0 0
    %1521 = vmatpush.bf16.msra.mxu0 0
    %1522 = vmatpush.bf16.msra.mxu0 0
    %1523 = vmatpush.bf16.msra.mxu0 %v1514
    %1524 = vmatmul.bf16.gmra.mxu0 %v1511
    %v1525 = vpop.f32.mrf.mxu0
    %v1526 = vadd.f32 0.0, %v1525
    %v1527 = vpop.f32.mrf.mxu0
    %v1528 = vadd.f32 0.0, %v1527
    %1529 = vdwg.mxu0
    %v1530 = vsel %vm1446, 1, 0
    %v1531 = vsel %vm1447, 1, 0
    %vm1532 = vcmp.eq.s32.totalorder %v1530, 1
    %vm1533 = vcmp.eq.s32.totalorder %v1531, 1
    %1535 = vrot.lane.b32.xlu0 %v1456, 96
    %v1536 = vpop.permute.xlu0 %1535
    %v1538 = vsel %vm1532, %v1526, %v1536
    %v1539 = vsel %vm1533, %v1528, %v1536
    %v1542 = vrot.slane %v1538, 5
    %v1543 = vrot.slane %v1539, 5
    %v1544 = vsel %vm1280, %v1542, %v1543
    %1545 = vrot.lane.b32.xlu0 %v1544, 8
    %v1546 = vpop.permute.xlu0 %1545
    %v1548 = vsel %vm231, %v1538, %v1546
    %v1550 = vrot.slane %v1354, 5
    %v1551 = vrot.slane %v1356, 5
    %v1552 = vsel %vm1280, %v1550, %v1551
    %1554 = vrot.lane.b32.xlu0 %v1354, 120
    %v1555 = vpop.permute.xlu0 %1554
    %1556 = vrot.lane.b32.xlu0 %v1356, 120
    %v1557 = vpop.permute.xlu0 %1556
    %v1560 = vsel %vm1365, %v1552, %v1555
    %v1561 = vpack.c.bf16 %v1557, %v1560
    %1563 = vrot.lane.b32.xlu0 %v1561, 112
    %v1564 = vpop.permute.xlu0 %1563
    %v1566 = vsel %vm231, %v1561, 0
    %v1569 = vsel %vm231, %v1564, 0
    %1571 = vmatpush.bf16.xpose.msra.mxu0 0
    %1572 = vmatpush.bf16.xpose.msra.mxu0 0
    %1573 = vmatpush.bf16.xpose.msra.mxu0 0
    %1574 = vmatpush.bf16.xpose.msra.mxu0 0
    %1575 = vmatpush.bf16.xpose.msra.mxu0 0
    %1576 = vmatpush.bf16.xpose.msra.mxu0 0
    %1577 = vmatpush.bf16.xpose.msra.mxu0 0
    %1578 = vmatpush.bf16.xpose.msra.mxu0 %v1569
    %1579 = vmatmul.bf16.gmra.mxu0 %v1566
    %v1580 = vpop.f32.mrf.mxu0
    %v1581 = vadd.f32 0.0, %v1580
    %v1582 = vpop.f32.mrf.mxu0
    %v1583 = vadd.f32 0.0, %v1582
    %1584 = vdwg.mxu0
    %v1585 = vmul.f32 %v1581, %v1358
    %v1586 = vmul.f32 %v1583, %v1359
    %v1587 = vsel %vm1393, %v1585, 0.0
    %1588 = vadd.xlane.f32.xlu0 %v1587
    %v1589 = vpop.xlane.xlu0 %1588
    %v1590 = vsel %vm1397, %v1586, 0.0
    %1591 = vadd.xlane.f32.xlu0 %v1590
    %v1592 = vpop.xlane.xlu0 %1591
    %v1593 = vsel %vm1401, %v1581, -inf
    %v1594 = vsel %vm1402, %v1583, -inf
    %v1595 = vsel %vm1393, %v1593, -inf
    %1596 = vmax.xlane.f32.xlu0 %v1595
    %v1597 = vpop.xlane.xlu0 %1596
    %v1598 = vsel %vm1397, %v1594, -inf
    %1599 = vmax.xlane.f32.xlu0 %v1598
    %v1600 = vpop.xlane.xlu0 %1599
    %v1601 = vmul.f32 %v1589, 0.1
    %v1602 = vmul.f32 %v1592, 0.1
    %v1603 = vsub.f32 %v1597, %v1601
    %v1604 = vsub.f32 %v1600, %v1602
    %v1605 = vmul.f32 %v207, %v1603
    %v1606 = vmul.f32 %v208, %v1604
    %v1607 = vsel %vm1393, %v1605, 0.0
    %v1608 = vsel %vm1397, %v1606, 0.0
    %v1609 = vadd.f32 %v1607, %v1608
    %v1610 = vrot.slane %v1609, 4
    %v1611 = vadd.f32 %v1609, %v1610
    %v1612 = vrot.slane %v1611, 2
    %v1613 = vadd.f32 %v1611, %v1612
    %v1614 = vrot.slane %v1613, 1
    %v1615 = vadd.f32 %v1613, %v1614
    %vm1616 = vcmp.gt.f32.partialorder %v1615, %v1603
    %vm1617 = vcmp.gt.f32.partialorder %v1615, %v1604
    %vm1618 = vmand %vm1616, %vm314
    %vm1619 = vmand %vm1617, %vm315
    %vm1620 = vcmp.eq.f32.partialorder %v1615, %v1603
    %vm1621 = vcmp.eq.f32.partialorder %v1615, %v1604
    %vm1622 = vmand %vm1620, %vm323
    %vm1623 = vmand %vm1621, %vm324
    %vm1624 = vmor %vm1618, %vm1622
    %vm1625 = vmor %vm1619, %vm1623
    %v1626 = vsel %vm1624, 1, 0
    %v1627 = vsel %vm1625, 1, 0
    %v1628 = vcvt.s32.f32 %v1626
    %v1629 = vcvt.s32.f32 %v1627
    %v1630 = vsel %vm1393, %v1628, 0.0
    %1631 = vadd.xlane.f32.xlu0 %v1630
    %v1632 = vpop.xlane.xlu0 %1631
    %v1633 = vsel %vm1397, %v1629, 0.0
    %1634 = vadd.xlane.f32.xlu0 %v1633
    %v1635 = vpop.xlane.xlu0 %1634
    %vm1636 = vcmp.lt.f32.partialorder %v1632, 6.0
    %vm1637 = vcmp.lt.f32.partialorder %v1635, 6.0
    %v1638 = vsel %vm350, %v1560, 0.0
    %v1639 = vsel %vm354, %v1557, 0.0
    %v1640 = vadd.f32 %v1638, %v1639
    %v1641 = vrot.slane %v1640, 4
    %v1642 = vadd.f32 %v1640, %v1641
    %v1643 = vrot.slane %v1642, 2
    %v1644 = vadd.f32 %v1642, %v1643
    %v1645 = vrot.slane %v1644, 1
    %v1646 = vadd.f32 %v1644, %v1645
    %v1647 = vmul.f32 %v1581, 0.35355338
    %v1648 = vmul.f32 %v1583, 0.35355338
    %v1649 = vsel %vm1393, %v1647, -inf
    %1650 = vmax.xlane.f32.xlu0 %v1649
    %v1651 = vpop.xlane.xlu0 %1650
    %v1652 = vsel %vm1397, %v1648, -inf
    %1653 = vmax.xlane.f32.xlu0 %v1652
    %v1654 = vpop.xlane.xlu0 %1653
    %v1655 = vsub.f32 %v1647, %v1651
    %v1656 = vsub.f32 %v1648, %v1654
    %v1657 = vmul.f32 %v1655, 1.442695
    %v1658 = vpow.pop %v1657
    %v1659 = vmul.f32 %v1656, 1.442695
    %v1660 = vpow.pop %v1659
    %v1661 = vsel %vm1393, %v1658, 0.0
    %1662 = vadd.xlane.f32.xlu0 %v1661
    %v1663 = vpop.xlane.xlu0 %1662
    %v1664 = vsel %vm1397, %v1660, 0.0
    %1665 = vadd.xlane.f32.xlu0 %v1664
    %v1666 = vpop.xlane.xlu0 %1665
    %v1667 = vrcp.pop %v1663
    %v1668 = vmul.f32 %v1663, %v1667
    %v1669 = vsub.f32 1.0, %v1668
    %v1670 = vmul.f32 %v1667, %v1669
    %v1671 = vadd.f32 %v1667, %v1670
    %vm1672 = vweird.f32 %v1663
    %vm1673 = vweird.f32 %v1667
    %vm1674 = vmor %vm1672, %vm1673
    %v1675 = vsel %vm1674, %v1667, %v1671
    %v1676 = vand.u32 2147483647, %v1663
    %vm1677 = vcmp.eq.f32.partialorder %v1676, 8.507059e+37
    %v1678 = vand.u32 %v1663, 2147483648
    %v1679 = vor.u32 1.1754944e-38, %v1678
    %v1680 = vsel %vm1677, %v1679, %v1675
    %v1681 = vmul.f32 %v1658, %v1680
    %v1682 = vrcp.pop %v1666
    %v1683 = vmul.f32 %v1666, %v1682
    %v1684 = vsub.f32 1.0, %v1683
    %v1685 = vmul.f32 %v1682, %v1684
    %v1686 = vadd.f32 %v1682, %v1685
    %vm1687 = vweird.f32 %v1666
    %vm1688 = vweird.f32 %v1682
    %vm1689 = vmor %vm1687, %vm1688
    %v1690 = vsel %vm1689, %v1682, %v1686
    %v1691 = vand.u32 2147483647, %v1666
    %vm1692 = vcmp.eq.f32.partialorder %v1691, 8.507059e+37
    %v1693 = vand.u32 %v1666, 2147483648
    %v1694 = vor.u32 1.1754944e-38, %v1693
    %v1695 = vsel %vm1692, %v1694, %v1690
    %v1696 = vmul.f32 %v1660, %v1695
    %v1697 = vpack.c.bf16 %v1696, %v1681
    %1698 = vrot.lane.b32.xlu0 %v1561, 96
    %v1699 = vpop.permute.xlu0 %1698
    %v1701 = vsel %vm1393, %v1697, 0
    %v1704 = vsel %vm1365, %v1699, 0
    %1706 = vmatpush.bf16.msra.mxu0 0
    %1707 = vmatpush.bf16.msra.mxu0 0
    %1708 = vmatpush.bf16.msra.mxu0 0
    %1709 = vmatpush.bf16.msra.mxu0 0
    %1710 = vmatpush.bf16.msra.mxu0 0
    %1711 = vmatpush.bf16.msra.mxu0 0
    %1712 = vmatpush.bf16.msra.mxu0 0
    %1713 = vmatpush.bf16.msra.mxu0 %v1704
    %1714 = vmatmul.bf16.gmra.mxu0 %v1701
    %v1715 = vpop.f32.mrf.mxu0
    %v1716 = vadd.f32 0.0, %v1715
    %v1717 = vpop.f32.mrf.mxu0
    %v1718 = vadd.f32 0.0, %v1717
    %1719 = vdwg.mxu0
    %v1720 = vsel %vm1636, 1, 0
    %v1721 = vsel %vm1637, 1, 0
    %vm1722 = vcmp.eq.s32.totalorder %v1720, 1
    %vm1723 = vcmp.eq.s32.totalorder %v1721, 1
    %1725 = vrot.lane.b32.xlu0 %v1646, 96
    %v1726 = vpop.permute.xlu0 %1725
    %v1728 = vsel %vm1722, %v1716, %v1726
    %v1729 = vsel %vm1723, %v1718, %v1726
    %v1732 = vrot.slane %v1728, 5
    %v1733 = vrot.slane %v1729, 5
    %v1734 = vsel %vm1280, %v1732, %v1733
    %1735 = vrot.lane.b32.xlu0 %v1734, 8
    %v1736 = vpop.permute.xlu0 %1735
    %v1738 = vsel %vm231, %v1728, %v1736
    %v1740 = vrot.slane %v1738, 3
    %v1742 = vsel %vm1365, %v1548, %v1740
    %v1743 = vld [vmem:[#allocation2 + $0x68] sm:$0xf]
    %v1744 = vld [vmem:[#allocation2 + $0x6c] sm:$0xf]
    %v1745 = vpack.c.bf16 %v1740, %v1742
    %v1748 = vunpack.c.l.b16 %v1743
    %v1749 = vunpack.c.l.b16 %v1744
    %v1750 = vpack.c.b16 %v1749, %v1748
    %v1753 = vsel %vm169, %v1745, 0
    %1755 = vmatpush.bf16.msra.mxu0 0
    %1756 = vmatpush.bf16.msra.mxu0 0
    %1757 = vmatpush.bf16.msra.mxu0 0
    %1758 = vmatpush.bf16.msra.mxu0 0
    %1759 = vmatpush.bf16.msra.mxu0 0
    %1760 = vmatpush.bf16.msra.mxu0 0
    %1761 = vmatpush.bf16.msra.mxu0 0
    %1762 = vmatpush.bf16.msra.mxu0 %v1750
    %1763 = vmatmul.bf16.gmra.mxu0 %v1753
    %v1764 = vpop.f32.mrf.mxu0
    %v1765 = vadd.f32 0.0, %v1764
    %v1766 = vpop.f32.mrf.mxu0
    %v1767 = vadd.f32 0.0, %v1766
    %1768 = vdwg.mxu0
    %v1769 = vadd.f32 %v1325, %v1765
    %v1770 = vadd.f32 %v1328, %v1767
    %v1771 = vld [vmem:[#allocation5 + $0x60] sm:$0x1]
    %v1772 = vperm.slane %v1771, 0
    %v1773 = vadd.f32 %v1769, %v1772
    %v1774 = vadd.f32 %v1770, %v1772
    %v1775 = vld [vmem:[#allocation5 + $0x68] sm:$0x1]
    %v1776 = vld [vmem:[#allocation5 + $0x70] sm:$0x1]
    %v1777 = vsel %vm169, %v1773, 0.0
    %1778 = vadd.xlane.f32.xlu0 %v1777
    %v1779 = vpop.xlane.xlu0 %1778
    %v1780 = vsel %vm831, %v1774, 0.0
    %1781 = vadd.xlane.f32.xlu0 %v1780
    %v1782 = vpop.xlane.xlu0 %1781
    %v1783 = vmul.f32 %v1779, %v841
    %v1784 = vmul.f32 %v1782, %v841
    %v1785 = vsub.f32 %v1773, %v1783
    %v1786 = vsub.f32 %v1774, %v1784
    %v1787 = vmul.f32 %v1785, %v1785
    %v1788 = vmul.f32 %v1786, %v1786
    %v1789 = vsel %vm169, %v1787, 0.0
    %1790 = vadd.xlane.f32.xlu0 %v1789
    %v1791 = vpop.xlane.xlu0 %1790
    %v1792 = vsel %vm831, %v1788, 0.0
    %1793 = vadd.xlane.f32.xlu0 %v1792
    %v1794 = vpop.xlane.xlu0 %1793
    %v1795 = vmul.f32 %v1791, %v841
    %v1796 = vmul.f32 %v1794, %v841
    %v1797 = vadd.f32 %v1795, 1e-05
    %v1798 = vadd.f32 %v1796, 1e-05
    %v1799 = vrsqrt.pop %v1797
    %v1800 = vmul.f32 %v1799, %v1797
    %v1801 = vmul.f32 %v1800, %v1799
    %v1802 = vmul.f32 0.5, %v1801
    %v1803 = vsub.f32 1.5, %v1802
    %v1804 = vmul.f32 %v1799, %v1803
    %vm1805 = vweird.f32 %v1797
    %vm1806 = vweird.f32 %v1799
    %vm1807 = vmor %vm1805, %vm1806
    %v1808 = vsel %vm1807, %v1799, %v1804
    %v1809 = vrsqrt.pop %v1798
    %v1810 = vmul.f32 %v1809, %v1798
    %v1811 = vmul.f32 %v1810, %v1809
    %v1812 = vmul.f32 0.5, %v1811
    %v1813 = vsub.f32 1.5, %v1812
    %v1814 = vmul.f32 %v1809, %v1813
    %vm1815 = vweird.f32 %v1798
    %vm1816 = vweird.f32 %v1809
    %vm1817 = vmor %vm1815, %vm1816
    %v1818 = vsel %vm1817, %v1809, %v1814
    %v1819 = vmul.f32 %v1785, %v1808
    %v1820 = vmul.f32 %v1786, %v1818
    %v1821 = vperm.slane %v1775, 0
    %v1822 = vmul.f32 %v1819, %v1821
    %v1823 = vmul.f32 %v1820, %v1821
    %v1824 = vperm.slane %v1776, 0
    %v1825 = vadd.f32 %v1822, %v1824
    %v1826 = vadd.f32 %v1823, %v1824
    %v1827 = vld [vmem:[#allocation2 + $0x70] sm:$0xf]
    %v1828 = vld [vmem:[#allocation2 + $0x74] sm:$0xf]
    %v1829 = vpack.c.bf16 %v1826, %v1825
    %v1830 = vld [vmem:[#allocation5 + $0x78] sm:$0x1]
    %v1831 = vperm.slane %v1830, 0
    %v1834 = vunpack.c.l.b16 %v1827
    %v1835 = vunpack.c.l.b16 %v1828
    %v1836 = vpack.c.b16 %v1835, %v1834
    %v1839 = vsel %vm169, %v1829, 0
    %1841 = vmatpush.bf16.msra.mxu0 0
    %1842 = vmatpush.bf16.msra.mxu0 0
    %1843 = vmatpush.bf16.msra.mxu0 0
    %1844 = vmatpush.bf16.msra.mxu0 0
    %1845 = vmatpush.bf16.msra.mxu0 0
    %1846 = vmatpush.bf16.msra.mxu0 0
    %1847 = vmatpush.bf16.msra.mxu0 0
    %1848 = vmatpush.bf16.msra.mxu0 %v1836
    %1849 = vmatmul.bf16.gmra.mxu0 %v1839
    %v1850 = vpop.f32.mrf.mxu0
    %v1851 = vadd.f32 %v1831, %v1850
    %v1852 = vpop.f32.mrf.mxu0
    %v1853 = vadd.f32 %v1831, %v1852
    %1854 = vdwg.mxu0
    %v1855 = vmul.f32 %v1851, 0.5
    %v1856 = vmul.f32 %v1853, 0.5
    %v1857 = vmul.f32 %v1851, 0.044715
    %v1858 = vmul.f32 %v1853, 0.044715
    %v1859 = vmul.f32 %v1857, %v1851
    %v1860 = vmul.f32 %v1858, %v1853
    %v1861 = vmul.f32 %v1859, %v1851
    %v1862 = vmul.f32 %v1860, %v1853
    %v1863 = vadd.f32 %v1851, %v1861
    %v1864 = vadd.f32 %v1853, %v1862
    %v1865 = vmul.f32 %v1863, 0.7978846
    %v1866 = vmul.f32 %v1864, 0.7978846
    %v1867 = vtanh.pop %v1865
    %v1868 = vtanh.pop %v1866
    %v1869 = vadd.f32 %v1867, 1.0
    %v1870 = vadd.f32 %v1868, 1.0
    %v1871 = vmul.f32 %v1855, %v1869
    %v1872 = vmul.f32 %v1856, %v1870
    %v1873 = vld [vmem:[#allocation2 + $0x78] sm:$0xf]
    %v1874 = vld [vmem:[#allocation2 + $0x7c] sm:$0xf]
    %v1875 = vld [vmem:[#allocation2 + $0x80] sm:$0xf]
    %v1876 = vld [vmem:[#allocation2 + $0x84] sm:$0xf]
    %v1877 = vpack.c.bf16 %v1872, %v1871
    %v1878 = vld [vmem:[#allocation5 + $0x80] sm:$0x1]
    %v1879 = vperm.slane %v1878, 0
    %v1884 = vunpack.c.l.b16 %v1873
    %v1885 = vunpack.c.l.b16 %v1874
    %v1886 = vunpack.c.l.b16 %v1875
    %v1887 = vunpack.c.l.b16 %v1876
    %v1888 = vpack.c.b16 %v1885, %v1884
    %v1889 = vpack.c.b16 %v1887, %v1886
    %v1893 = vsel %vm990, %v1877, 0
    %1895 = vmatpush.bf16.msra.mxu0 0
    %1896 = vmatpush.bf16.msra.mxu0 0
    %1897 = vmatpush.bf16.msra.mxu0 0
    %1898 = vmatpush.bf16.msra.mxu0 0
    %1899 = vmatpush.bf16.msra.mxu0 0
    %1900 = vmatpush.bf16.msra.mxu0 0
    %1901 = vmatpush.bf16.msra.mxu0 %v1889
    %1902 = vmatpush.bf16.msra.mxu0 %v1888
    %1903 = vmatmul.bf16.gmra.mxu0 %v1893
    %v1904 = vpop.f32.mrf.mxu0
    %v1905 = vadd.f32 %v1879, %v1904
    %v1906 = vpop.f32.mrf.mxu0
    %v1907 = vadd.f32 %v1879, %v1906
    %1908 = vdwg.mxu0
    %v1909 = vadd.f32 %v1825, %v1905
    %v1910 = vadd.f32 %v1826, %v1907
    %v1911 = vld [vmem:[#allocation5 + $0x88] sm:$0x1]
    %v1912 = vld [vmem:[#allocation5 + $0x90] sm:$0x1]
    %v1913 = vsel %vm169, %v1909, 0.0
    %1914 = vadd.xlane.f32.xlu0 %v1913
    %v1915 = vpop.xlane.xlu0 %1914
    %v1916 = vsel %vm831, %v1910, 0.0
    %1917 = vadd.xlane.f32.xlu0 %v1916
    %v1918 = vpop.xlane.xlu0 %1917
    %v1919 = vmul.f32 %v1915, %v841
    %v1920 = vmul.f32 %v1918, %v841
    %v1921 = vsub.f32 %v1909, %v1919
    %v1922 = vsub.f32 %v1910, %v1920
    %v1923 = vmul.f32 %v1921, %v1921
    %v1924 = vmul.f32 %v1922, %v1922
    %v1925 = vsel %vm169, %v1923, 0.0
    %1926 = vadd.xlane.f32.xlu0 %v1925
    %v1927 = vpop.xlane.xlu0 %1926
    %v1928 = vsel %vm831, %v1924, 0.0
    %1929 = vadd.xlane.f32.xlu0 %v1928
    %v1930 = vpop.xlane.xlu0 %1929
    %v1931 = vmul.f32 %v1927, %v841
    %v1932 = vmul.f32 %v1930, %v841
    %v1933 = vadd.f32 %v1931, 1e-05
    %v1934 = vadd.f32 %v1932, 1e-05
    %v1935 = vrsqrt.pop %v1933
    %v1936 = vmul.f32 %v1935, %v1933
    %v1937 = vmul.f32 %v1936, %v1935
    %v1938 = vmul.f32 0.5, %v1937
    %v1939 = vsub.f32 1.5, %v1938
    %v1940 = vmul.f32 %v1935, %v1939
    %vm1941 = vweird.f32 %v1933
    %vm1942 = vweird.f32 %v1935
    %vm1943 = vmor %vm1941, %vm1942
    %v1944 = vsel %vm1943, %v1935, %v1940
    %v1945 = vrsqrt.pop %v1934
    %v1946 = vmul.f32 %v1945, %v1934
    %v1947 = vmul.f32 %v1946, %v1945
    %v1948 = vmul.f32 0.5, %v1947
    %v1949 = vsub.f32 1.5, %v1948
    %v1950 = vmul.f32 %v1945, %v1949
    %vm1951 = vweird.f32 %v1934
    %vm1952 = vweird.f32 %v1945
    %vm1953 = vmor %vm1951, %vm1952
    %v1954 = vsel %vm1953, %v1945, %v1950
    %v1955 = vmul.f32 %v1921, %v1944
    %v1956 = vmul.f32 %v1922, %v1954
    %v1957 = vperm.slane %v1911, 0
    %v1958 = vmul.f32 %v1955, %v1957
    %v1959 = vmul.f32 %v1956, %v1957
    %v1960 = vperm.slane %v1912, 0
    %v1961 = vadd.f32 %v1958, %v1960
    %v1962 = vadd.f32 %v1959, %v1960
    %v1963 = vld [vmem:[#allocation5 + $0xc0] sm:$0x1]
    %v1964 = vld [vmem:[#allocation5 + $0xc8] sm:$0x1]
    %v1965 = vsel %vm169, %v1961, 0.0
    %1966 = vadd.xlane.f32.xlu0 %v1965
    %v1967 = vpop.xlane.xlu0 %1966
    %v1968 = vsel %vm831, %v1962, 0.0
    %1969 = vadd.xlane.f32.xlu0 %v1968
    %v1970 = vpop.xlane.xlu0 %1969
    %v1971 = vmul.f32 %v1967, %v841
    %v1972 = vmul.f32 %v1970, %v841
    %v1973 = vsub.f32 %v1961, %v1971
    %v1974 = vsub.f32 %v1962, %v1972
    %v1975 = vmul.f32 %v1973, %v1973
    %v1976 = vmul.f32 %v1974, %v1974
    %v1977 = vsel %vm169, %v1975, 0.0
    %1978 = vadd.xlane.f32.xlu0 %v1977
    %v1979 = vpop.xlane.xlu0 %1978
    %v1980 = vsel %vm831, %v1976, 0.0
    %1981 = vadd.xlane.f32.xlu0 %v1980
    %v1982 = vpop.xlane.xlu0 %1981
    %v1983 = vmul.f32 %v1979, %v841
    %v1984 = vmul.f32 %v1982, %v841
    %v1985 = vadd.f32 %v1983, 1e-05
    %v1986 = vadd.f32 %v1984, 1e-05
    %v1987 = vrsqrt.pop %v1985
    %v1988 = vmul.f32 %v1987, %v1985
    %v1989 = vmul.f32 %v1988, %v1987
    %v1990 = vmul.f32 0.5, %v1989
    %v1991 = vsub.f32 1.5, %v1990
    %v1992 = vmul.f32 %v1987, %v1991
    %vm1993 = vweird.f32 %v1985
    %vm1994 = vweird.f32 %v1987
    %vm1995 = vmor %vm1993, %vm1994
    %v1996 = vsel %vm1995, %v1987, %v1992
    %v1997 = vrsqrt.pop %v1986
    %v1998 = vmul.f32 %v1997, %v1986
    %v1999 = vmul.f32 %v1998, %v1997
    %v2000 = vmul.f32 0.5, %v1999
    %v2001 = vsub.f32 1.5, %v2000
    %v2002 = vmul.f32 %v1997, %v2001
    %vm2003 = vweird.f32 %v1986
    %vm2004 = vweird.f32 %v1997
    %vm2005 = vmor %vm2003, %vm2004
    %v2006 = vsel %vm2005, %v1997, %v2002
    %v2007 = vmul.f32 %v1973, %v1996
    %v2008 = vmul.f32 %v1974, %v2006
    %v2009 = vperm.slane %v1963, 0
    %v2010 = vmul.f32 %v2007, %v2009
    %v2011 = vmul.f32 %v2008, %v2009
    %v2012 = vperm.slane %v1964, 0
    %v2013 = vadd.f32 %v2010, %v2012
    %v2014 = vadd.f32 %v2011, %v2012
    %s2015 = scalar_lea.vmem %s0, 24
    %v2016 = vld [vmem:[%s2015] sm:$0xff]
    %v2017 = vld [vmem:[%s2015 + $0x8] sm:$0xff]
    %v2018 = vld [vmem:[%s2015 + $0x10] sm:$0x3]
    %2019 = vset.pattern.permute.xlu0 0
    %2020 = vperm.xlu0 %2019, %v2016
    %v2021 = vpop.permute.xlu0 %2020
    %2022 = vset.pattern.permute.xlu0 0
    %2023 = vperm.xlu0 %2022, %v2017
    %v2024 = vpop.permute.xlu0 %2023
    %2025 = vset.pattern.permute.xlu0 0
    %2026 = vperm.xlu0 %2025, %v2018
    %v2027 = vpop.permute.xlu0 %2026
    %vm2028 = vcmp.eq.s32.totalorder %v55, %v2021
    %vm2029 = vcmp.eq.s32.totalorder %v55, %v2024
    %vm2030 = vcmp.eq.s32.totalorder %v55, %v2027
    %v2031 = vsel %vm2028, 1, 0
    %v2032 = vsel %vm2029, 1, 0
    %v2033 = vsel %vm2030, 1, 0
    %v2034 = vcvt.s32.f32 %v2031
    %v2035 = vcvt.s32.f32 %v2032
    %v2036 = vcvt.s32.f32 %v2033
    %v2037 = vpack.c.bf16 %v2035, %v2034
    %v2038 = vpack.c.bf16 %v2036, %v2036
    %v2040 = vsel %vm128, %v2037, 0
    %v2043 = vsel %vm128, %v2038, 0
    %2045 = vmatpush.bf16.msra.mxu0 0
    %2046 = vmatpush.bf16.msra.mxu0 %v137
    %2047 = vmatpush.bf16.msra.mxu0 %v120
    %2048 = vmatpush.bf16.msra.mxu0 %v119
    %2049 = vmatpush.bf16.msra.mxu0 %v118
    %2050 = vmatpush.bf16.msra.mxu0 %v117
    %2051 = vmatpush.bf16.msra.mxu0 %v116
    %2052 = vmatpush.bf16.msra.mxu0 %v115
    %2053 = vmatmul.bf16.gmra.mxu0 %v2040
    %v2054 = vpop.f32.mrf.mxu0
    %v2055 = vadd.f32 0.0, %v2054
    %v2056 = vpop.f32.mrf.mxu0
    %v2057 = vadd.f32 0.0, %v2056
    %2058 = vmatmul.bf16.gmra.mxu0 %v2043
    %v2059 = vpop.f32.mrf.mxu0
    %v2060 = vadd.f32 0.0, %v2059
    %v2061 = vpop.f32.mrf.mxu0
    %2062 = vdwg.mxu0
    %v2063 = vpack.c.bf16 %v2057, %v2055
    %v2064 = vpack.c.bf16 %v2060, %v2060
    %v2066 = vsel %vm169, %v2063, 0
    %v2069 = vsel %vm169, %v2064, 0
    %2071 = vmatpush.bf16.msra.mxu0 0
    %2072 = vmatpush.bf16.msra.mxu0 0
    %2073 = vmatpush.bf16.msra.mxu0 0
    %2074 = vmatpush.bf16.msra.mxu0 0
    %2075 = vmatpush.bf16.msra.mxu0 0
    %2076 = vmatpush.bf16.msra.mxu0 0
    %2077 = vmatpush.bf16.msra.mxu0 0
    %2078 = vmatpush.bf16.msra.mxu0 %v167
    %2079 = vmatmul.bf16.gmra.mxu0 %v2066
    %v2080 = vpop.f32.mrf.mxu0
    %v2081 = vadd.f32 %v162, %v2080
    %v2082 = vpop.f32.mrf.mxu0
    %v2083 = vadd.f32 %v162, %v2082
    %2084 = vmatmul.bf16.gmra.mxu0 %v2069
    %v2085 = vpop.f32.mrf.mxu0
    %v2086 = vadd.f32 %v162, %v2085
    %v2087 = vpop.f32.mrf.mxu0
    %2088 = vdwg.mxu0
    %v2091 = vrot.slane %v2081, 7
    %v2092 = vrot.slane %v2083, 7
    %v2093 = vsel %vm212, %v2091, %v2092
    %2094 = vrot.lane.b32.xlu0 %v2091, 120
    %v2095 = vpop.permute.xlu0 %2094
    %2096 = vrot.lane.b32.xlu0 %v2093, 120
    %v2097 = vpop.permute.xlu0 %2096
    %v2100 = vsel %vm212, %v2083, %v2095
    %v2101 = vpack.c.bf16 %v2100, %v2081
    %v2102 = vpack.c.bf16 %v2097, %v2097
    %2105 = vrot.lane.b32.xlu0 %v2101, 112
    %v2106 = vpop.permute.xlu0 %2105
    %2107 = vrot.lane.b32.xlu0 %v2102, 112
    %v2108 = vpop.permute.xlu0 %2107
    %v2110 = vsel %vm231, %v2101, 0
    %v2113 = vsel %vm231, %v2102, 0
    %v2116 = vsel %vm231, %v2106, 0
    %v2119 = vsel %vm231, %v2108, 0
    %2121 = vmatpush.bf16.xpose.msra.mxu0 0
    %2122 = vmatpush.bf16.xpose.msra.mxu0 0
    %2123 = vmatpush.bf16.xpose.msra.mxu0 0
    %2124 = vmatpush.bf16.xpose.msra.mxu0 0
    %2125 = vmatpush.bf16.xpose.msra.mxu0 0
    %2126 = vmatpush.bf16.xpose.msra.mxu0 0
    %2127 = vmatpush.bf16.xpose.msra.mxu0 %v2119
    %2128 = vmatpush.bf16.xpose.msra.mxu0 %v2116
    %2129 = vmatmul.bf16.gmra.mxu0 %v2110
    %v2130 = vpop.f32.mrf.mxu0
    %v2131 = vadd.f32 0.0, %v2130
    %v2132 = vpop.f32.mrf.mxu0
    %v2133 = vadd.f32 0.0, %v2132
    %2134 = vmatmul.bf16.gmra.mxu0 %v2113
    %v2135 = vpop.f32.mrf.mxu0
    %v2136 = vadd.f32 0.0, %v2135
    %v2137 = vpop.f32.mrf.mxu0
    %2138 = vdwg.mxu0
    %v2139 = vmul.f32 %v2131, %v194
    %v2140 = vmul.f32 %v2133, %v195
    %v2141 = vmul.f32 %v2136, %v196
    %v2142 = vsel %vm265, %v2139, 0.0
    %2143 = vadd.xlane.f32.xlu0 %v2142
    %v2144 = vpop.xlane.xlu0 %2143
    %v2145 = vsel %vm265, %v2140, 0.0
    %2146 = vadd.xlane.f32.xlu0 %v2145
    %v2147 = vpop.xlane.xlu0 %2146
    %v2148 = vsel %vm272, %v2141, 0.0
    %2149 = vadd.xlane.f32.xlu0 %v2148
    %v2150 = vpop.xlane.xlu0 %2149
    %v2151 = vsel %vm276, %v2131, -inf
    %v2152 = vsel %vm277, %v2133, -inf
    %v2153 = vsel %vm278, %v2136, -inf
    %v2154 = vsel %vm265, %v2151, -inf
    %2155 = vmax.xlane.f32.xlu0 %v2154
    %v2156 = vpop.xlane.xlu0 %2155
    %v2157 = vsel %vm265, %v2152, -inf
    %2158 = vmax.xlane.f32.xlu0 %v2157
    %v2159 = vpop.xlane.xlu0 %2158
    %v2160 = vsel %vm272, %v2153, -inf
    %2161 = vmax.xlane.f32.xlu0 %v2160
    %v2162 = vpop.xlane.xlu0 %2161
    %v2163 = vmul.f32 %v2144, 0.055555556
    %v2164 = vmul.f32 %v2147, 0.055555556
    %v2165 = vmul.f32 %v2150, 0.055555556
    %v2166 = vsub.f32 %v2156, %v2163
    %v2167 = vsub.f32 %v2159, %v2164
    %v2168 = vsub.f32 %v2162, %v2165
    %v2169 = vmul.f32 %v207, %v2166
    %v2170 = vmul.f32 %v208, %v2167
    %v2171 = vmul.f32 %v209, %v2168
    %v2172 = vsel %vm265, %v2169, 0.0
    %v2173 = vsel %vm265, %v2170, 0.0
    %v2174 = vadd.f32 %v2172, %v2173
    %v2175 = vsel %vm272, %v2171, 0.0
    %v2176 = vadd.f32 %v2174, %v2175
    %v2177 = vrot.slane %v2176, 4
    %v2178 = vadd.f32 %v2176, %v2177
    %v2179 = vrot.slane %v2178, 2
    %v2180 = vadd.f32 %v2178, %v2179
    %v2181 = vrot.slane %v2180, 1
    %v2182 = vadd.f32 %v2180, %v2181
    %vm2183 = vcmp.gt.f32.partialorder %v2182, %v2166
    %vm2184 = vcmp.gt.f32.partialorder %v2182, %v2167
    %vm2185 = vcmp.gt.f32.partialorder %v2182, %v2168
    %vm2186 = vmand %vm2183, %vm314
    %vm2187 = vmand %vm2184, %vm315
    %vm2188 = vmand %vm2185, %vm316
    %vm2189 = vcmp.eq.f32.partialorder %v2182, %v2166
    %vm2190 = vcmp.eq.f32.partialorder %v2182, %v2167
    %vm2191 = vcmp.eq.f32.partialorder %v2182, %v2168
    %vm2192 = vmand %vm2189, %vm323
    %vm2193 = vmand %vm2190, %vm324
    %vm2194 = vmand %vm2191, %vm325
    %vm2195 = vmor %vm2186, %vm2192
    %vm2196 = vmor %vm2187, %vm2193
    %vm2197 = vmor %vm2188, %vm2194
    %v2198 = vsel %vm2195, 1, 0
    %v2199 = vsel %vm2196, 1, 0
    %v2200 = vsel %vm2197, 1, 0
    %v2201 = vcvt.s32.f32 %v2198
    %v2202 = vcvt.s32.f32 %v2199
    %v2203 = vcvt.s32.f32 %v2200
    %v2204 = vsel %vm265, %v2201, 0.0
    %2205 = vadd.xlane.f32.xlu0 %v2204
    %v2206 = vpop.xlane.xlu0 %2205
    %v2207 = vsel %vm265, %v2202, 0.0
    %2208 = vadd.xlane.f32.xlu0 %v2207
    %v2209 = vpop.xlane.xlu0 %2208
    %v2210 = vsel %vm272, %v2203, 0.0
    %2211 = vadd.xlane.f32.xlu0 %v2210
    %v2212 = vpop.xlane.xlu0 %2211
    %vm2213 = vcmp.lt.f32.partialorder %v2206, 6.0
    %vm2214 = vcmp.lt.f32.partialorder %v2209, 6.0
    %vm2215 = vcmp.lt.f32.partialorder %v2212, 6.0
    %v2216 = vsel %vm350, %v2081, 0.0
    %v2217 = vsel %vm350, %v2100, 0.0
    %v2218 = vadd.f32 %v2216, %v2217
    %v2219 = vsel %vm354, %v2097, 0.0
    %v2220 = vadd.f32 %v2218, %v2219
    %v2221 = vrot.slane %v2220, 4
    %v2222 = vadd.f32 %v2220, %v2221
    %v2223 = vrot.slane %v2222, 2
    %v2224 = vadd.f32 %v2222, %v2223
    %v2225 = vrot.slane %v2224, 1
    %v2226 = vadd.f32 %v2224, %v2225
    %v2227 = vmul.f32 %v2131, 0.35355338
    %v2228 = vmul.f32 %v2133, 0.35355338
    %v2229 = vmul.f32 %v2136, 0.35355338
    %v2230 = vsel %vm265, %v2227, -inf
    %2231 = vmax.xlane.f32.xlu0 %v2230
    %v2232 = vpop.xlane.xlu0 %2231
    %v2233 = vsel %vm265, %v2228, -inf
    %2234 = vmax.xlane.f32.xlu0 %v2233
    %v2235 = vpop.xlane.xlu0 %2234
    %v2236 = vsel %vm272, %v2229, -inf
    %2237 = vmax.xlane.f32.xlu0 %v2236
    %v2238 = vpop.xlane.xlu0 %2237
    %v2239 = vsub.f32 %v2227, %v2232
    %v2240 = vsub.f32 %v2228, %v2235
    %v2241 = vsub.f32 %v2229, %v2238
    %v2242 = vmul.f32 %v2239, 1.442695
    %v2243 = vpow.pop %v2242
    %v2244 = vmul.f32 %v2240, 1.442695
    %v2245 = vpow.pop %v2244
    %v2246 = vmul.f32 %v2241, 1.442695
    %v2247 = vpow.pop %v2246
    %v2248 = vsel %vm265, %v2243, 0.0
    %2249 = vadd.xlane.f32.xlu0 %v2248
    %v2250 = vpop.xlane.xlu0 %2249
    %v2251 = vsel %vm265, %v2245, 0.0
    %2252 = vadd.xlane.f32.xlu0 %v2251
    %v2253 = vpop.xlane.xlu0 %2252
    %v2254 = vsel %vm272, %v2247, 0.0
    %2255 = vadd.xlane.f32.xlu0 %v2254
    %v2256 = vpop.xlane.xlu0 %2255
    %v2257 = vrcp.pop %v2250
    %v2258 = vmul.f32 %v2250, %v2257
    %v2259 = vsub.f32 1.0, %v2258
    %v2260 = vmul.f32 %v2257, %v2259
    %v2261 = vadd.f32 %v2257, %v2260
    %vm2262 = vweird.f32 %v2250
    %vm2263 = vweird.f32 %v2257
    %vm2264 = vmor %vm2262, %vm2263
    %v2265 = vsel %vm2264, %v2257, %v2261
    %v2266 = vand.u32 2147483647, %v2250
    %vm2267 = vcmp.eq.f32.partialorder %v2266, 8.507059e+37
    %v2268 = vand.u32 %v2250, 2147483648
    %v2269 = vor.u32 1.1754944e-38, %v2268
    %v2270 = vsel %vm2267, %v2269, %v2265
    %v2271 = vmul.f32 %v2243, %v2270
    %v2272 = vrcp.pop %v2253
    %v2273 = vmul.f32 %v2253, %v2272
    %v2274 = vsub.f32 1.0, %v2273
    %v2275 = vmul.f32 %v2272, %v2274
    %v2276 = vadd.f32 %v2272, %v2275
    %vm2277 = vweird.f32 %v2253
    %vm2278 = vweird.f32 %v2272
    %vm2279 = vmor %vm2277, %vm2278
    %v2280 = vsel %vm2279, %v2272, %v2276
    %v2281 = vand.u32 2147483647, %v2253
    %vm2282 = vcmp.eq.f32.partialorder %v2281, 8.507059e+37
    %v2283 = vand.u32 %v2253, 2147483648
    %v2284 = vor.u32 1.1754944e-38, %v2283
    %v2285 = vsel %vm2282, %v2284, %v2280
    %v2286 = vmul.f32 %v2245, %v2285
    %v2287 = vrcp.pop %v2256
    %v2288 = vmul.f32 %v2256, %v2287
    %v2289 = vsub.f32 1.0, %v2288
    %v2290 = vmul.f32 %v2287, %v2289
    %v2291 = vadd.f32 %v2287, %v2290
    %vm2292 = vweird.f32 %v2256
    %vm2293 = vweird.f32 %v2287
    %vm2294 = vmor %vm2292, %vm2293
    %v2295 = vsel %vm2294, %v2287, %v2291
    %v2296 = vand.u32 2147483647, %v2256
    %vm2297 = vcmp.eq.f32.partialorder %v2296, 8.507059e+37
    %v2298 = vand.u32 %v2256, 2147483648
    %v2299 = vor.u32 1.1754944e-38, %v2298
    %v2300 = vsel %vm2297, %v2299, %v2295
    %v2301 = vmul.f32 %v2247, %v2300
    %v2302 = vpack.c.bf16 %v2286, %v2271
    %v2303 = vpack.c.bf16 %v2301, %v2301
    %2304 = vrot.lane.b32.xlu0 %v2101, 96
    %v2305 = vpop.permute.xlu0 %2304
    %2306 = vrot.lane.b32.xlu0 %v2102, 96
    %v2307 = vpop.permute.xlu0 %2306
    %v2310 = vsel %vm265, %v2302, 0
    %v2313 = vsel %vm265, %v2303, 0
    %v2316 = vsel %vm212, %v2307, 0
    %2318 = vmatpush.bf16.msra.mxu0 0
    %2319 = vmatpush.bf16.msra.mxu0 0
    %2320 = vmatpush.bf16.msra.mxu0 0
    %2321 = vmatpush.bf16.msra.mxu0 0
    %2322 = vmatpush.bf16.msra.mxu0 0
    %2323 = vmatpush.bf16.msra.mxu0 0
    %2324 = vmatpush.bf16.msra.mxu0 %v2316
    %2325 = vmatpush.bf16.msra.mxu0 %v2305
    %2326 = vmatmul.bf16.gmra.mxu0 %v2310
    %v2327 = vpop.f32.mrf.mxu0
    %v2328 = vadd.f32 0.0, %v2327
    %v2329 = vpop.f32.mrf.mxu0
    %v2330 = vadd.f32 0.0, %v2329
    %2331 = vmatmul.bf16.gmra.mxu0 %v2313
    %v2332 = vpop.f32.mrf.mxu0
    %v2333 = vadd.f32 0.0, %v2332
    %v2334 = vpop.f32.mrf.mxu0
    %2335 = vdwg.mxu0
    %v2336 = vsel %vm2213, 1, 0
    %v2337 = vsel %vm2214, 1, 0
    %v2338 = vsel %vm2215, 1, 0
    %vm2339 = vcmp.eq.s32.totalorder %v2336, 1
    %vm2340 = vcmp.eq.s32.totalorder %v2337, 1
    %vm2341 = vcmp.eq.s32.totalorder %v2338, 1
    %2343 = vrot.lane.b32.xlu0 %v2226, 96
    %v2344 = vpop.permute.xlu0 %2343
    %v2346 = vsel %vm2339, %v2328, %v2344
    %v2347 = vsel %vm2340, %v2330, %v2344
    %v2348 = vsel %vm2341, %v2333, %v2344
    %v2351 = vrot.slane %v2347, 1
    %v2352 = vrot.slane %v2348, 1
    %v2353 = vsel %vm487, %v2351, %v2352
    %2354 = vrot.lane.b32.xlu0 %v2353, 8
    %v2355 = vpop.permute.xlu0 %2354
    %2356 = vrot.lane.b32.xlu0 %v2352, 8
    %v2357 = vpop.permute.xlu0 %2356
    %v2360 = vsel %vm231, %v2346, %v2355
    %v2361 = vsel %vm231, %v2347, %v2357
    %v2363 = vrot.slane %v2083, 1
    %v2364 = vrot.slane %v2086, 1
    %v2365 = vsel %vm487, %v2363, %v2364
    %2368 = vrot.lane.b32.xlu0 %v2083, 120
    %v2369 = vpop.permute.xlu0 %2368
    %2370 = vrot.lane.b32.xlu0 %v2086, 120
    %v2371 = vpop.permute.xlu0 %2370
    %v2374 = vsel %vm212, %v2364, %v2369
    %v2375 = vpack.c.bf16 %v2374, %v2365
    %v2376 = vpack.c.bf16 %v2371, %v2371
    %2379 = vrot.lane.b32.xlu0 %v2375, 112
    %v2380 = vpop.permute.xlu0 %2379
    %2381 = vrot.lane.b32.xlu0 %v2376, 112
    %v2382 = vpop.permute.xlu0 %2381
    %v2384 = vsel %vm231, %v2375, 0
    %v2387 = vsel %vm231, %v2376, 0
    %v2390 = vsel %vm231, %v2380, 0
    %v2393 = vsel %vm231, %v2382, 0
    %2395 = vmatpush.bf16.xpose.msra.mxu0 0
    %2396 = vmatpush.bf16.xpose.msra.mxu0 0
    %2397 = vmatpush.bf16.xpose.msra.mxu0 0
    %2398 = vmatpush.bf16.xpose.msra.mxu0 0
    %2399 = vmatpush.bf16.xpose.msra.mxu0 0
    %2400 = vmatpush.bf16.xpose.msra.mxu0 0
    %2401 = vmatpush.bf16.xpose.msra.mxu0 %v2393
    %2402 = vmatpush.bf16.xpose.msra.mxu0 %v2390
    %2403 = vmatmul.bf16.gmra.mxu0 %v2384
    %v2404 = vpop.f32.mrf.mxu0
    %v2405 = vadd.f32 0.0, %v2404
    %v2406 = vpop.f32.mrf.mxu0
    %v2407 = vadd.f32 0.0, %v2406
    %2408 = vmatmul.bf16.gmra.mxu0 %v2387
    %v2409 = vpop.f32.mrf.mxu0
    %v2410 = vadd.f32 0.0, %v2409
    %v2411 = vpop.f32.mrf.mxu0
    %2412 = vdwg.mxu0
    %v2413 = vmul.f32 %v2405, %v194
    %v2414 = vmul.f32 %v2407, %v195
    %v2415 = vmul.f32 %v2410, %v196
    %v2416 = vsel %vm265, %v2413, 0.0
    %2417 = vadd.xlane.f32.xlu0 %v2416
    %v2418 = vpop.xlane.xlu0 %2417
    %v2419 = vsel %vm265, %v2414, 0.0
    %2420 = vadd.xlane.f32.xlu0 %v2419
    %v2421 = vpop.xlane.xlu0 %2420
    %v2422 = vsel %vm272, %v2415, 0.0
    %2423 = vadd.xlane.f32.xlu0 %v2422
    %v2424 = vpop.xlane.xlu0 %2423
    %v2425 = vsel %vm276, %v2405, -inf
    %v2426 = vsel %vm277, %v2407, -inf
    %v2427 = vsel %vm278, %v2410, -inf
    %v2428 = vsel %vm265, %v2425, -inf
    %2429 = vmax.xlane.f32.xlu0 %v2428
    %v2430 = vpop.xlane.xlu0 %2429
    %v2431 = vsel %vm265, %v2426, -inf
    %2432 = vmax.xlane.f32.xlu0 %v2431
    %v2433 = vpop.xlane.xlu0 %2432
    %v2434 = vsel %vm272, %v2427, -inf
    %2435 = vmax.xlane.f32.xlu0 %v2434
    %v2436 = vpop.xlane.xlu0 %2435
    %v2437 = vmul.f32 %v2418, 0.055555556
    %v2438 = vmul.f32 %v2421, 0.055555556
    %v2439 = vmul.f32 %v2424, 0.055555556
    %v2440 = vsub.f32 %v2430, %v2437
    %v2441 = vsub.f32 %v2433, %v2438
    %v2442 = vsub.f32 %v2436, %v2439
    %v2443 = vmul.f32 %v207, %v2440
    %v2444 = vmul.f32 %v208, %v2441
    %v2445 = vmul.f32 %v209, %v2442
    %v2446 = vsel %vm265, %v2443, 0.0
    %v2447 = vsel %vm265, %v2444, 0.0
    %v2448 = vadd.f32 %v2446, %v2447
    %v2449 = vsel %vm272, %v2445, 0.0
    %v2450 = vadd.f32 %v2448, %v2449
    %v2451 = vrot.slane %v2450, 4
    %v2452 = vadd.f32 %v2450, %v2451
    %v2453 = vrot.slane %v2452, 2
    %v2454 = vadd.f32 %v2452, %v2453
    %v2455 = vrot.slane %v2454, 1
    %v2456 = vadd.f32 %v2454, %v2455
    %vm2457 = vcmp.gt.f32.partialorder %v2456, %v2440
    %vm2458 = vcmp.gt.f32.partialorder %v2456, %v2441
    %vm2459 = vcmp.gt.f32.partialorder %v2456, %v2442
    %vm2460 = vmand %vm2457, %vm314
    %vm2461 = vmand %vm2458, %vm315
    %vm2462 = vmand %vm2459, %vm316
    %vm2463 = vcmp.eq.f32.partialorder %v2456, %v2440
    %vm2464 = vcmp.eq.f32.partialorder %v2456, %v2441
    %vm2465 = vcmp.eq.f32.partialorder %v2456, %v2442
    %vm2466 = vmand %vm2463, %vm323
    %vm2467 = vmand %vm2464, %vm324
    %vm2468 = vmand %vm2465, %vm325
    %vm2469 = vmor %vm2460, %vm2466
    %vm2470 = vmor %vm2461, %vm2467
    %vm2471 = vmor %vm2462, %vm2468
    %v2472 = vsel %vm2469, 1, 0
    %v2473 = vsel %vm2470, 1, 0
    %v2474 = vsel %vm2471, 1, 0
    %v2475 = vcvt.s32.f32 %v2472
    %v2476 = vcvt.s32.f32 %v2473
    %v2477 = vcvt.s32.f32 %v2474
    %v2478 = vsel %vm265, %v2475, 0.0
    %2479 = vadd.xlane.f32.xlu0 %v2478
    %v2480 = vpop.xlane.xlu0 %2479
    %v2481 = vsel %vm265, %v2476, 0.0
    %2482 = vadd.xlane.f32.xlu0 %v2481
    %v2483 = vpop.xlane.xlu0 %2482
    %v2484 = vsel %vm272, %v2477, 0.0
    %2485 = vadd.xlane.f32.xlu0 %v2484
    %v2486 = vpop.xlane.xlu0 %2485
    %vm2487 = vcmp.lt.f32.partialorder %v2480, 6.0
    %vm2488 = vcmp.lt.f32.partialorder %v2483, 6.0
    %vm2489 = vcmp.lt.f32.partialorder %v2486, 6.0
    %v2490 = vsel %vm350, %v2365, 0.0
    %v2491 = vsel %vm350, %v2374, 0.0
    %v2492 = vadd.f32 %v2490, %v2491
    %v2493 = vsel %vm354, %v2371, 0.0
    %v2494 = vadd.f32 %v2492, %v2493
    %v2495 = vrot.slane %v2494, 4
    %v2496 = vadd.f32 %v2494, %v2495
    %v2497 = vrot.slane %v2496, 2
    %v2498 = vadd.f32 %v2496, %v2497
    %v2499 = vrot.slane %v2498, 1
    %v2500 = vadd.f32 %v2498, %v2499
    %v2501 = vmul.f32 %v2405, 0.35355338
    %v2502 = vmul.f32 %v2407, 0.35355338
    %v2503 = vmul.f32 %v2410, 0.35355338
    %v2504 = vsel %vm265, %v2501, -inf
    %2505 = vmax.xlane.f32.xlu0 %v2504
    %v2506 = vpop.xlane.xlu0 %2505
    %v2507 = vsel %vm265, %v2502, -inf
    %2508 = vmax.xlane.f32.xlu0 %v2507
    %v2509 = vpop.xlane.xlu0 %2508
    %v2510 = vsel %vm272, %v2503, -inf
    %2511 = vmax.xlane.f32.xlu0 %v2510
    %v2512 = vpop.xlane.xlu0 %2511
    %v2513 = vsub.f32 %v2501, %v2506
    %v2514 = vsub.f32 %v2502, %v2509
    %v2515 = vsub.f32 %v2503, %v2512
    %v2516 = vmul.f32 %v2513, 1.442695
    %v2517 = vpow.pop %v2516
    %v2518 = vmul.f32 %v2514, 1.442695
    %v2519 = vpow.pop %v2518
    %v2520 = vmul.f32 %v2515, 1.442695
    %v2521 = vpow.pop %v2520
    %v2522 = vsel %vm265, %v2517, 0.0
    %2523 = vadd.xlane.f32.xlu0 %v2522
    %v2524 = vpop.xlane.xlu0 %2523
    %v2525 = vsel %vm265, %v2519, 0.0
    %2526 = vadd.xlane.f32.xlu0 %v2525
    %v2527 = vpop.xlane.xlu0 %2526
    %v2528 = vsel %vm272, %v2521, 0.0
    %2529 = vadd.xlane.f32.xlu0 %v2528
    %v2530 = vpop.xlane.xlu0 %2529
    %v2531 = vrcp.pop %v2524
    %v2532 = vmul.f32 %v2524, %v2531
    %v2533 = vsub.f32 1.0, %v2532
    %v2534 = vmul.f32 %v2531, %v2533
    %v2535 = vadd.f32 %v2531, %v2534
    %vm2536 = vweird.f32 %v2524
    %vm2537 = vweird.f32 %v2531
    %vm2538 = vmor %vm2536, %vm2537
    %v2539 = vsel %vm2538, %v2531, %v2535
    %v2540 = vand.u32 2147483647, %v2524
    %vm2541 = vcmp.eq.f32.partialorder %v2540, 8.507059e+37
    %v2542 = vand.u32 %v2524, 2147483648
    %v2543 = vor.u32 1.1754944e-38, %v2542
    %v2544 = vsel %vm2541, %v2543, %v2539
    %v2545 = vmul.f32 %v2517, %v2544
    %v2546 = vrcp.pop %v2527
    %v2547 = vmul.f32 %v2527, %v2546
    %v2548 = vsub.f32 1.0, %v2547
    %v2549 = vmul.f32 %v2546, %v2548
    %v2550 = vadd.f32 %v2546, %v2549
    %vm2551 = vweird.f32 %v2527
    %vm2552 = vweird.f32 %v2546
    %vm2553 = vmor %vm2551, %vm2552
    %v2554 = vsel %vm2553, %v2546, %v2550
    %v2555 = vand.u32 2147483647, %v2527
    %vm2556 = vcmp.eq.f32.partialorder %v2555, 8.507059e+37
    %v2557 = vand.u32 %v2527, 2147483648
    %v2558 = vor.u32 1.1754944e-38, %v2557
    %v2559 = vsel %vm2556, %v2558, %v2554
    %v2560 = vmul.f32 %v2519, %v2559
    %v2561 = vrcp.pop %v2530
    %v2562 = vmul.f32 %v2530, %v2561
    %v2563 = vsub.f32 1.0, %v2562
    %v2564 = vmul.f32 %v2561, %v2563
    %v2565 = vadd.f32 %v2561, %v2564
    %vm2566 = vweird.f32 %v2530
    %vm2567 = vweird.f32 %v2561
    %vm2568 = vmor %vm2566, %vm2567
    %v2569 = vsel %vm2568, %v2561, %v2565
    %v2570 = vand.u32 2147483647, %v2530
    %vm2571 = vcmp.eq.f32.partialorder %v2570, 8.507059e+37
    %v2572 = vand.u32 %v2530, 2147483648
    %v2573 = vor.u32 1.1754944e-38, %v2572
    %v2574 = vsel %vm2571, %v2573, %v2569
    %v2575 = vmul.f32 %v2521, %v2574
    %v2576 = vpack.c.bf16 %v2560, %v2545
    %v2577 = vpack.c.bf16 %v2575, %v2575
    %2578 = vrot.lane.b32.xlu0 %v2375, 96
    %v2579 = vpop.permute.xlu0 %2578
    %2580 = vrot.lane.b32.xlu0 %v2376, 96
    %v2581 = vpop.permute.xlu0 %2580
    %v2584 = vsel %vm265, %v2576, 0
    %v2587 = vsel %vm265, %v2577, 0
    %v2590 = vsel %vm212, %v2581, 0
    %2592 = vmatpush.bf16.msra.mxu0 0
    %2593 = vmatpush.bf16.msra.mxu0 0
    %2594 = vmatpush.bf16.msra.mxu0 0
    %2595 = vmatpush.bf16.msra.mxu0 0
    %2596 = vmatpush.bf16.msra.mxu0 0
    %2597 = vmatpush.bf16.msra.mxu0 0
    %2598 = vmatpush.bf16.msra.mxu0 %v2590
    %2599 = vmatpush.bf16.msra.mxu0 %v2579
    %2600 = vmatmul.bf16.gmra.mxu0 %v2584
    %v2601 = vpop.f32.mrf.mxu0
    %v2602 = vadd.f32 0.0, %v2601
    %v2603 = vpop.f32.mrf.mxu0
    %v2604 = vadd.f32 0.0, %v2603
    %2605 = vmatmul.bf16.gmra.mxu0 %v2587
    %v2606 = vpop.f32.mrf.mxu0
    %v2607 = vadd.f32 0.0, %v2606
    %v2608 = vpop.f32.mrf.mxu0
    %2609 = vdwg.mxu0
    %v2610 = vsel %vm2487, 1, 0
    %v2611 = vsel %vm2488, 1, 0
    %v2612 = vsel %vm2489, 1, 0
    %vm2613 = vcmp.eq.s32.totalorder %v2610, 1
    %vm2614 = vcmp.eq.s32.totalorder %v2611, 1
    %vm2615 = vcmp.eq.s32.totalorder %v2612, 1
    %2617 = vrot.lane.b32.xlu0 %v2500, 96
    %v2618 = vpop.permute.xlu0 %2617
    %v2620 = vsel %vm2613, %v2602, %v2618
    %v2621 = vsel %vm2614, %v2604, %v2618
    %v2622 = vsel %vm2615, %v2607, %v2618
    %v2625 = vrot.slane %v2621, 1
    %v2626 = vrot.slane %v2622, 1
    %v2627 = vsel %vm487, %v2625, %v2626
    %2628 = vrot.lane.b32.xlu0 %v2627, 8
    %v2629 = vpop.permute.xlu0 %2628
    %2630 = vrot.lane.b32.xlu0 %v2626, 8
    %v2631 = vpop.permute.xlu0 %2630
    %v2634 = vsel %vm231, %v2620, %v2629
    %v2635 = vsel %vm231, %v2621, %v2631
    %v2638 = vrot.slane %v2634, 7
    %v2639 = vrot.slane %v2635, 7
    %v2640 = vsel %vm212, %v2638, %v2639
    %v2643 = vsel %vm212, %v2361, %v2638
    %v2644 = vpack.c.bf16 %v2643, %v2360
    %v2645 = vpack.c.bf16 %v2640, %v2640
    %v2647 = vsel %vm169, %v2644, 0
    %v2650 = vsel %vm169, %v2645, 0
    %2652 = vmatpush.bf16.msra.mxu0 0
    %2653 = vmatpush.bf16.msra.mxu0 0
    %2654 = vmatpush.bf16.msra.mxu0 0
    %2655 = vmatpush.bf16.msra.mxu0 0
    %2656 = vmatpush.bf16.msra.mxu0 0
    %2657 = vmatpush.bf16.msra.mxu0 0
    %2658 = vmatpush.bf16.msra.mxu0 0
    %2659 = vmatpush.bf16.msra.mxu0 %v789
    %2660 = vmatmul.bf16.gmra.mxu0 %v2647
    %v2661 = vpop.f32.mrf.mxu0
    %v2662 = vadd.f32 0.0, %v2661
    %v2663 = vpop.f32.mrf.mxu0
    %v2664 = vadd.f32 0.0, %v2663
    %2665 = vmatmul.bf16.gmra.mxu0 %v2650
    %v2666 = vpop.f32.mrf.mxu0
    %v2667 = vadd.f32 0.0, %v2666
    %v2668 = vpop.f32.mrf.mxu0
    %2669 = vdwg.mxu0
    %v2670 = vadd.f32 %v2055, %v2662
    %v2671 = vadd.f32 %v2057, %v2664
    %v2672 = vadd.f32 %v2060, %v2667
    %v2673 = vadd.f32 %v2670, %v819
    %v2674 = vadd.f32 %v2671, %v819
    %v2675 = vadd.f32 %v2672, %v819
    %v2676 = vsel %vm169, %v2673, 0.0
    %2677 = vadd.xlane.f32.xlu0 %v2676
    %v2678 = vpop.xlane.xlu0 %2677
    %v2679 = vsel %vm169, %v2674, 0.0
    %2680 = vadd.xlane.f32.xlu0 %v2679
    %v2681 = vpop.xlane.xlu0 %2680
    %v2682 = vsel %vm831, %v2675, 0.0
    %2683 = vadd.xlane.f32.xlu0 %v2682
    %v2684 = vpop.xlane.xlu0 %2683
    %v2685 = vmul.f32 %v2678, %v841
    %v2686 = vmul.f32 %v2681, %v841
    %v2687 = vmul.f32 %v2684, %v841
    %v2688 = vsub.f32 %v2673, %v2685
    %v2689 = vsub.f32 %v2674, %v2686
    %v2690 = vsub.f32 %v2675, %v2687
    %v2691 = vmul.f32 %v2688, %v2688
    %v2692 = vmul.f32 %v2689, %v2689
    %v2693 = vmul.f32 %v2690, %v2690
    %v2694 = vsel %vm169, %v2691, 0.0
    %2695 = vadd.xlane.f32.xlu0 %v2694
    %v2696 = vpop.xlane.xlu0 %2695
    %v2697 = vsel %vm169, %v2692, 0.0
    %2698 = vadd.xlane.f32.xlu0 %v2697
    %v2699 = vpop.xlane.xlu0 %2698
    %v2700 = vsel %vm831, %v2693, 0.0
    %2701 = vadd.xlane.f32.xlu0 %v2700
    %v2702 = vpop.xlane.xlu0 %2701
    %v2703 = vmul.f32 %v2696, %v841
    %v2704 = vmul.f32 %v2699, %v841
    %v2705 = vmul.f32 %v2702, %v841
    %v2706 = vadd.f32 %v2703, 1e-05
    %v2707 = vadd.f32 %v2704, 1e-05
    %v2708 = vadd.f32 %v2705, 1e-05
    %v2709 = vrsqrt.pop %v2706
    %v2710 = vmul.f32 %v2709, %v2706
    %v2711 = vmul.f32 %v2710, %v2709
    %v2712 = vmul.f32 0.5, %v2711
    %v2713 = vsub.f32 1.5, %v2712
    %v2714 = vmul.f32 %v2709, %v2713
    %vm2715 = vweird.f32 %v2706
    %vm2716 = vweird.f32 %v2709
    %vm2717 = vmor %vm2715, %vm2716
    %v2718 = vsel %vm2717, %v2709, %v2714
    %v2719 = vrsqrt.pop %v2707
    %v2720 = vmul.f32 %v2719, %v2707
    %v2721 = vmul.f32 %v2720, %v2719
    %v2722 = vmul.f32 0.5, %v2721
    %v2723 = vsub.f32 1.5, %v2722
    %v2724 = vmul.f32 %v2719, %v2723
    %vm2725 = vweird.f32 %v2707
    %vm2726 = vweird.f32 %v2719
    %vm2727 = vmor %vm2725, %vm2726
    %v2728 = vsel %vm2727, %v2719, %v2724
    %v2729 = vrsqrt.pop %v2708
    %v2730 = vmul.f32 %v2729, %v2708
    %v2731 = vmul.f32 %v2730, %v2729
    %v2732 = vmul.f32 0.5, %v2731
    %v2733 = vsub.f32 1.5, %v2732
    %v2734 = vmul.f32 %v2729, %v2733
    %vm2735 = vweird.f32 %v2708
    %vm2736 = vweird.f32 %v2729
    %vm2737 = vmor %vm2735, %vm2736
    %v2738 = vsel %vm2737, %v2729, %v2734
    %v2739 = vmul.f32 %v2688, %v2718
    %v2740 = vmul.f32 %v2689, %v2728
    %v2741 = vmul.f32 %v2690, %v2738
    %v2742 = vmul.f32 %v2739, %v899
    %v2743 = vmul.f32 %v2740, %v899
    %v2744 = vmul.f32 %v2741, %v899
    %v2745 = vadd.f32 %v2742, %v903
    %v2746 = vadd.f32 %v2743, %v903
    %v2747 = vadd.f32 %v2744, %v903
    %v2748 = vpack.c.bf16 %v2746, %v2745
    %v2749 = vpack.c.bf16 %v2747, %v2747
    %v2751 = vsel %vm169, %v2748, 0
    %v2754 = vsel %vm169, %v2749, 0
    %2756 = vmatpush.bf16.msra.mxu0 0
    %2757 = vmatpush.bf16.msra.mxu0 0
    %2758 = vmatpush.bf16.msra.mxu0 0
    %2759 = vmatpush.bf16.msra.mxu0 0
    %2760 = vmatpush.bf16.msra.mxu0 0
    %2761 = vmatpush.bf16.msra.mxu0 0
    %2762 = vmatpush.bf16.msra.mxu0 0
    %2763 = vmatpush.bf16.msra.mxu0 %v917
    %2764 = vmatmul.bf16.gmra.mxu0 %v2751
    %v2765 = vpop.f32.mrf.mxu0
    %v2766 = vadd.f32 %v912, %v2765
    %v2767 = vpop.f32.mrf.mxu0
    %v2768 = vadd.f32 %v912, %v2767
    %2769 = vmatmul.bf16.gmra.mxu0 %v2754
    %v2770 = vpop.f32.mrf.mxu0
    %v2771 = vadd.f32 %v912, %v2770
    %v2772 = vpop.f32.mrf.mxu0
    %2773 = vdwg.mxu0
    %v2774 = vmul.f32 %v2766, 0.5
    %v2775 = vmul.f32 %v2768, 0.5
    %v2776 = vmul.f32 %v2771, 0.5
    %v2777 = vmul.f32 %v2766, 0.044715
    %v2778 = vmul.f32 %v2768, 0.044715
    %v2779 = vmul.f32 %v2771, 0.044715
    %v2780 = vmul.f32 %v2777, %v2766
    %v2781 = vmul.f32 %v2778, %v2768
    %v2782 = vmul.f32 %v2779, %v2771
    %v2783 = vmul.f32 %v2780, %v2766
    %v2784 = vmul.f32 %v2781, %v2768
    %v2785 = vmul.f32 %v2782, %v2771
    %v2786 = vadd.f32 %v2766, %v2783
    %v2787 = vadd.f32 %v2768, %v2784
    %v2788 = vadd.f32 %v2771, %v2785
    %v2789 = vmul.f32 %v2786, 0.7978846
    %v2790 = vmul.f32 %v2787, 0.7978846
    %v2791 = vmul.f32 %v2788, 0.7978846
    %v2792 = vtanh.pop %v2789
    %v2793 = vtanh.pop %v2790
    %v2794 = vtanh.pop %v2791
    %v2795 = vadd.f32 %v2792, 1.0
    %v2796 = vadd.f32 %v2793, 1.0
    %v2797 = vadd.f32 %v2794, 1.0
    %v2798 = vmul.f32 %v2774, %v2795
    %v2799 = vmul.f32 %v2775, %v2796
    %v2800 = vmul.f32 %v2776, %v2797
    %v2801 = vpack.c.bf16 %v2799, %v2798
    %v2802 = vpack.c.bf16 %v2800, %v2800
    %v2804 = vsel %vm990, %v2801, 0
    %v2807 = vsel %vm990, %v2802, 0
    %2809 = vmatpush.bf16.msra.mxu0 0
    %2810 = vmatpush.bf16.msra.mxu0 0
    %2811 = vmatpush.bf16.msra.mxu0 0
    %2812 = vmatpush.bf16.msra.mxu0 0
    %2813 = vmatpush.bf16.msra.mxu0 0
    %2814 = vmatpush.bf16.msra.mxu0 0
    %2815 = vmatpush.bf16.msra.mxu0 %v987
    %2816 = vmatpush.bf16.msra.mxu0 %v986
    %2817 = vmatmul.bf16.gmra.mxu0 %v2804
    %v2818 = vpop.f32.mrf.mxu0
    %v2819 = vadd.f32 %v977, %v2818
    %v2820 = vpop.f32.mrf.mxu0
    %v2821 = vadd.f32 %v977, %v2820
    %2822 = vmatmul.bf16.gmra.mxu0 %v2807
    %v2823 = vpop.f32.mrf.mxu0
    %v2824 = vadd.f32 %v977, %v2823
    %v2825 = vpop.f32.mrf.mxu0
    %2826 = vdwg.mxu0
    %v2827 = vadd.f32 %v2745, %v2819
    %v2828 = vadd.f32 %v2746, %v2821
    %v2829 = vadd.f32 %v2747, %v2824
    %v2830 = vsel %vm169, %v2827, 0.0
    %2831 = vadd.xlane.f32.xlu0 %v2830
    %v2832 = vpop.xlane.xlu0 %2831
    %v2833 = vsel %vm169, %v2828, 0.0
    %2834 = vadd.xlane.f32.xlu0 %v2833
    %v2835 = vpop.xlane.xlu0 %2834
    %v2836 = vsel %vm831, %v2829, 0.0
    %2837 = vadd.xlane.f32.xlu0 %v2836
    %v2838 = vpop.xlane.xlu0 %2837
    %v2839 = vmul.f32 %v2832, %v841
    %v2840 = vmul.f32 %v2835, %v841
    %v2841 = vmul.f32 %v2838, %v841
    %v2842 = vsub.f32 %v2827, %v2839
    %v2843 = vsub.f32 %v2828, %v2840
    %v2844 = vsub.f32 %v2829, %v2841
    %v2845 = vmul.f32 %v2842, %v2842
    %v2846 = vmul.f32 %v2843, %v2843
    %v2847 = vmul.f32 %v2844, %v2844
    %v2848 = vsel %vm169, %v2845, 0.0
    %2849 = vadd.xlane.f32.xlu0 %v2848
    %v2850 = vpop.xlane.xlu0 %2849
    %v2851 = vsel %vm169, %v2846, 0.0
    %2852 = vadd.xlane.f32.xlu0 %v2851
    %v2853 = vpop.xlane.xlu0 %2852
    %v2854 = vsel %vm831, %v2847, 0.0
    %2855 = vadd.xlane.f32.xlu0 %v2854
    %v2856 = vpop.xlane.xlu0 %2855
    %v2857 = vmul.f32 %v2850, %v841
    %v2858 = vmul.f32 %v2853, %v841
    %v2859 = vmul.f32 %v2856, %v841
    %v2860 = vadd.f32 %v2857, 1e-05
    %v2861 = vadd.f32 %v2858, 1e-05
    %v2862 = vadd.f32 %v2859, 1e-05
    %v2863 = vrsqrt.pop %v2860
    %v2864 = vmul.f32 %v2863, %v2860
    %v2865 = vmul.f32 %v2864, %v2863
    %v2866 = vmul.f32 0.5, %v2865
    %v2867 = vsub.f32 1.5, %v2866
    %v2868 = vmul.f32 %v2863, %v2867
    %vm2869 = vweird.f32 %v2860
    %vm2870 = vweird.f32 %v2863
    %vm2871 = vmor %vm2869, %vm2870
    %v2872 = vsel %vm2871, %v2863, %v2868
    %v2873 = vrsqrt.pop %v2861
    %v2874 = vmul.f32 %v2873, %v2861
    %v2875 = vmul.f32 %v2874, %v2873
    %v2876 = vmul.f32 0.5, %v2875
    %v2877 = vsub.f32 1.5, %v2876
    %v2878 = vmul.f32 %v2873, %v2877
    %vm2879 = vweird.f32 %v2861
    %vm2880 = vweird.f32 %v2873
    %vm2881 = vmor %vm2879, %vm2880
    %v2882 = vsel %vm2881, %v2873, %v2878
    %v2883 = vrsqrt.pop %v2862
    %v2884 = vmul.f32 %v2883, %v2862
    %v2885 = vmul.f32 %v2884, %v2883
    %v2886 = vmul.f32 0.5, %v2885
    %v2887 = vsub.f32 1.5, %v2886
    %v2888 = vmul.f32 %v2883, %v2887
    %vm2889 = vweird.f32 %v2862
    %vm2890 = vweird.f32 %v2883
    %vm2891 = vmor %vm2889, %vm2890
    %v2892 = vsel %vm2891, %v2883, %v2888
    %v2893 = vmul.f32 %v2842, %v2872
    %v2894 = vmul.f32 %v2843, %v2882
    %v2895 = vmul.f32 %v2844, %v2892
    %v2896 = vmul.f32 %v2893, %v1086
    %v2897 = vmul.f32 %v2894, %v1086
    %v2898 = vmul.f32 %v2895, %v1086
    %v2899 = vadd.f32 %v2896, %v1090
    %v2900 = vadd.f32 %v2897, %v1090
    %v2901 = vadd.f32 %v2898, %v1090
    %v2904 = vrot.slane %v2899, 6
    %v2905 = vrot.slane %v2900, 6
    %v2906 = vsel %vm135, %v2904, %v2905
    %v2910 = vsel %vm135, %v2901, %v2904
    %v2911 = vpack.c.bf16 %v2906, %v2910
    %v2912 = vpack.c.bf16 %v2905, %v2905
    %v2914 = vrot.slane %v2901, 1
    %v2916 = vrot.slane %v2899, 7
    %v2917 = vrot.slane %v2900, 7
    %v2918 = vsel %vm212, %v2916, %v2917
    %v2919 = vrot.slane %v2901, 7
    %v2920 = vsel %vm212, %v2917, %v2919
    %v2924 = vsel %vm212, %v2914, %v2916
    %v2925 = vpack.c.bf16 %v2918, %v2924
    %v2926 = vpack.c.bf16 %v2920, %v2920
    %v2928 = vsel %vm169, %v2925, 0
    %v2931 = vsel %vm169, %v2926, 0
    %2933 = vmatpush.bf16.msra.mxu0 0
    %2934 = vmatpush.bf16.msra.mxu0 0
    %2935 = vmatpush.bf16.msra.mxu0 0
    %2936 = vmatpush.bf16.msra.mxu0 0
    %2937 = vmatpush.bf16.msra.mxu0 0
    %2938 = vmatpush.bf16.msra.mxu0 0
    %2939 = vmatpush.bf16.msra.mxu0 0
    %2940 = vmatpush.bf16.msra.mxu0 %v1127
    %2941 = vmatmul.bf16.gmra.mxu0 %v2928
    %v2942 = vpop.f32.mrf.mxu0
    %v2943 = vadd.f32 0.0, %v2942
    %v2944 = vpop.f32.mrf.mxu0
    %v2945 = vadd.f32 0.0, %v2944
    %2946 = vmatmul.bf16.gmra.mxu0 %v2931
    %v2947 = vpop.f32.mrf.mxu0
    %v2948 = vadd.f32 0.0, %v2947
    %v2949 = vpop.f32.mrf.mxu0
    %2950 = vdwg.mxu0
    %v2952 = vsel %vm169, %v2911, 0
    %v2955 = vsel %vm169, %v2912, 0
    %2957 = vmatpush.bf16.msra.mxu0 0
    %2958 = vmatpush.bf16.msra.mxu0 0
    %2959 = vmatpush.bf16.msra.mxu0 0
    %2960 = vmatpush.bf16.msra.mxu0 0
    %2961 = vmatpush.bf16.msra.mxu0 0
    %2962 = vmatpush.bf16.msra.mxu0 0
    %2963 = vmatpush.bf16.msra.mxu0 0
    %2964 = vmatpush.bf16.msra.mxu0 %v1157
    %2965 = vmatmul.bf16.gmra.mxu0 %v2952
    %v2966 = vpop.f32.mrf.mxu0
    %v2967 = vadd.f32 %v2943, %v2966
    %v2968 = vpop.f32.mrf.mxu0
    %v2969 = vadd.f32 %v2945, %v2968
    %2970 = vmatmul.bf16.gmra.mxu0 %v2955
    %v2971 = vpop.f32.mrf.mxu0
    %v2972 = vadd.f32 %v2948, %v2971
    %v2973 = vpop.f32.mrf.mxu0
    %2974 = vdwg.mxu0
    %v2975 = vpack.c.bf16 %v2900, %v2899
    %v2976 = vpack.c.bf16 %v2901, %v2901
    %v2978 = vsel %vm169, %v2975, 0
    %v2981 = vsel %vm169, %v2976, 0
    %2983 = vmatpush.bf16.msra.mxu0 0
    %2984 = vmatpush.bf16.msra.mxu0 0
    %2985 = vmatpush.bf16.msra.mxu0 0
    %2986 = vmatpush.bf16.msra.mxu0 0
    %2987 = vmatpush.bf16.msra.mxu0 0
    %2988 = vmatpush.bf16.msra.mxu0 0
    %2989 = vmatpush.bf16.msra.mxu0 0
    %2990 = vmatpush.bf16.msra.mxu0 %v1191
    %2991 = vmatmul.bf16.gmra.mxu0 %v2978
    %v2992 = vpop.f32.mrf.mxu0
    %v2993 = vadd.f32 0.0, %v2992
    %v2994 = vpop.f32.mrf.mxu0
    %v2995 = vadd.f32 0.0, %v2994
    %2996 = vmatmul.bf16.gmra.mxu0 %v2981
    %v2997 = vpop.f32.mrf.mxu0
    %v2998 = vadd.f32 0.0, %v2997
    %v2999 = vpop.f32.mrf.mxu0
    %3000 = vdwg.mxu0
    %v3001 = vadd.f32 %v2967, %v2993
    %v3002 = vadd.f32 %v2969, %v2995
    %v3003 = vadd.f32 %v2972, %v2998
    %v3004 = vadd.f32 %v3001, %v1221
    %v3005 = vadd.f32 %v3002, %v1221
    %v3006 = vadd.f32 %v3003, %v1221
    %v3007 = vmul.f32 %v3004, %v1226
    %v3008 = vmul.f32 %v3005, %v1226
    %v3009 = vmul.f32 %v3006, %v1226
    %v3010 = vadd.f32 %v3007, %v1231
    %v3011 = vadd.f32 %v3008, %v1231
    %v3012 = vadd.f32 %v3009, %v1231
    %vm3013 = vcmp.gt.f32.partialorder %v3010, 0.0
    %vm3014 = vcmp.gt.f32.partialorder %v3011, 0.0
    %vm3015 = vcmp.gt.f32.partialorder %v3012, 0.0
    %v3016 = vmin.f32 %v3010, 0.0
    %v3017 = vmin.f32 %v3011, 0.0
    %v3018 = vmin.f32 %v3012, 0.0
    %v3019 = vmul.f32 %v3016, 1.442695
    %v3020 = vpow.pop %v3019
    %v3021 = vmul.f32 %v3017, 1.442695
    %v3022 = vpow.pop %v3021
    %v3023 = vmul.f32 %v3018, 1.442695
    %v3024 = vpow.pop %v3023
    %v3025 = vsub.f32 %v3020, 1.0
    %v3026 = vsub.f32 %v3022, 1.0
    %v3027 = vsub.f32 %v3024, 1.0
    %v3028 = vsel %vm3013, %v3010, %v3025
    %v3029 = vsel %vm3014, %v3011, %v3026
    %v3030 = vsel %vm3015, %v3012, %v3027
    %v3032 = vrot.slane %v3028, 6
    %v3034 = vsel %vm135, %v3030, %v3032
    %v3036 = vrot.slane %v3034, 3
    %v3039 = vrot.slane %v3028, 7
    %v3040 = vrot.slane %v3029, 7
    %v3041 = vsel %vm212, %v3039, %v3040
    %v3042 = vrot.slane %v3034, 7
    %v3043 = vsel %vm212, %v3040, %v3042
    %v3047 = vsel %vm212, %v3036, %v3039
    %v3048 = vrot.slane %v3028, 1
    %v3049 = vrot.slane %v3029, 1
    %v3050 = vsel %vm487, %v3048, %v3049
    %v3051 = vrot.slane %v3034, 1
    %v3052 = vsel %vm487, %v3049, %v3051
    %v3056 = vrot.slane %v3028, 5
    %v3058 = vsel %vm1280, %v3051, %v3056
    %v3059 = vmax.f32 %v3047, %v3050
    %v3060 = vmax.f32 %v3041, %v3052
    %v3061 = vmax.f32 %v3043, %v3058
    %v3062 = vmax.f32 %v3028, %v3059
    %v3063 = vmax.f32 %v3029, %v3060
    %v3064 = vmax.f32 %v3034, %v3061
    %v3066 = vsel %vm1303, %v3064, 0
    %3068 = vmatpush.msra.mxu0 0.0
    %3069 = vmatpush.msra.mxu0 0.0
    %3070 = vmatpush.msra.mxu0 0.0
    %3071 = vmatpush.msra.mxu0 0.0
    %3072 = vmatpush.msra.mxu0 0.0
    %3073 = vmatpush.msra.mxu0 0.0
    %3074 = vmatpush.msra.mxu0 0.0
    %3075 = vmatpush.msra.mxu0 0.0
    %3076 = vmatpush.msra.mxu0 0.0
    %3077 = vmatpush.msra.mxu0 0.0
    %3078 = vmatpush.msra.mxu0 0.0
    %3079 = vmatpush.msra.mxu0 0.0
    %3080 = vmatpush.msra.mxu0 0.0
    %3081 = vmatpush.msra.mxu0 %v3066
    %3082 = vmatpush.msra.mxu0 %v3063
    %3083 = vmatpush.msra.mxu0 %v3062
    %3084 = vmatmul.f32.gmra.mxu0 %v1298
    %v3085 = vpop.f32.mrf.mxu0
    %v3086 = vadd.f32 0.0, %v3085
    %3087 = vmatmul.f32.gmra.mxu0 %v1301
    %v3088 = vpop.f32.mrf.mxu0
    %v3089 = vadd.f32 0.0, %v3088
    %3090 = vdwg.mxu0
    %v3091 = vpack.c.bf16 %v3089, %v3086
    %v3093 = vsel %vm169, %v3091, 0
    %3095 = vmatpush.bf16.msra.mxu0 0
    %3096 = vmatpush.bf16.msra.mxu0 0
    %3097 = vmatpush.bf16.msra.mxu0 0
    %3098 = vmatpush.bf16.msra.mxu0 0
    %3099 = vmatpush.bf16.msra.mxu0 0
    %3100 = vmatpush.bf16.msra.mxu0 0
    %3101 = vmatpush.bf16.msra.mxu0 0
    %3102 = vmatpush.bf16.msra.mxu0 %v1339
    %3103 = vmatmul.bf16.gmra.mxu0 %v3093
    %v3104 = vpop.f32.mrf.mxu0
    %v3105 = vadd.f32 %v1334, %v3104
    %v3106 = vpop.f32.mrf.mxu0
    %v3107 = vadd.f32 %v1334, %v3106
    %3108 = vdwg.mxu0
    %v3110 = vrot.slane %v3105, 3
    %3111 = vrot.lane.b32.xlu0 %v3110, 120
    %v3112 = vpop.permute.xlu0 %3111
    %v3114 = vsel %vm1365, %v3105, %v3112
    %v3115 = vpack.c.bf16 %v3112, %v3114
    %3117 = vrot.lane.b32.xlu0 %v3115, 112
    %v3118 = vpop.permute.xlu0 %3117
    %v3120 = vsel %vm231, %v3115, 0
    %v3123 = vsel %vm231, %v3118, 0
    %3125 = vmatpush.bf16.xpose.msra.mxu0 0
    %3126 = vmatpush.bf16.xpose.msra.mxu0 0
    %3127 = vmatpush.bf16.xpose.msra.mxu0 0
    %3128 = vmatpush.bf16.xpose.msra.mxu0 0
    %3129 = vmatpush.bf16.xpose.msra.mxu0 0
    %3130 = vmatpush.bf16.xpose.msra.mxu0 0
    %3131 = vmatpush.bf16.xpose.msra.mxu0 0
    %3132 = vmatpush.bf16.xpose.msra.mxu0 %v3123
    %3133 = vmatmul.bf16.gmra.mxu0 %v3120
    %v3134 = vpop.f32.mrf.mxu0
    %v3135 = vadd.f32 0.0, %v3134
    %v3136 = vpop.f32.mrf.mxu0
    %v3137 = vadd.f32 0.0, %v3136
    %3138 = vdwg.mxu0
    %v3139 = vmul.f32 %v3135, %v1358
    %v3140 = vmul.f32 %v3137, %v1359
    %v3141 = vsel %vm1393, %v3139, 0.0
    %3142 = vadd.xlane.f32.xlu0 %v3141
    %v3143 = vpop.xlane.xlu0 %3142
    %v3144 = vsel %vm1397, %v3140, 0.0
    %3145 = vadd.xlane.f32.xlu0 %v3144
    %v3146 = vpop.xlane.xlu0 %3145
    %v3147 = vsel %vm1401, %v3135, -inf
    %v3148 = vsel %vm1402, %v3137, -inf
    %v3149 = vsel %vm1393, %v3147, -inf
    %3150 = vmax.xlane.f32.xlu0 %v3149
    %v3151 = vpop.xlane.xlu0 %3150
    %v3152 = vsel %vm1397, %v3148, -inf
    %3153 = vmax.xlane.f32.xlu0 %v3152
    %v3154 = vpop.xlane.xlu0 %3153
    %v3155 = vmul.f32 %v3143, 0.1
    %v3156 = vmul.f32 %v3146, 0.1
    %v3157 = vsub.f32 %v3151, %v3155
    %v3158 = vsub.f32 %v3154, %v3156
    %v3159 = vmul.f32 %v207, %v3157
    %v3160 = vmul.f32 %v208, %v3158
    %v3161 = vsel %vm1393, %v3159, 0.0
    %v3162 = vsel %vm1397, %v3160, 0.0
    %v3163 = vadd.f32 %v3161, %v3162
    %v3164 = vrot.slane %v3163, 4
    %v3165 = vadd.f32 %v3163, %v3164
    %v3166 = vrot.slane %v3165, 2
    %v3167 = vadd.f32 %v3165, %v3166
    %v3168 = vrot.slane %v3167, 1
    %v3169 = vadd.f32 %v3167, %v3168
    %vm3170 = vcmp.gt.f32.partialorder %v3169, %v3157
    %vm3171 = vcmp.gt.f32.partialorder %v3169, %v3158
    %vm3172 = vmand %vm3170, %vm314
    %vm3173 = vmand %vm3171, %vm315
    %vm3174 = vcmp.eq.f32.partialorder %v3169, %v3157
    %vm3175 = vcmp.eq.f32.partialorder %v3169, %v3158
    %vm3176 = vmand %vm3174, %vm323
    %vm3177 = vmand %vm3175, %vm324
    %vm3178 = vmor %vm3172, %vm3176
    %vm3179 = vmor %vm3173, %vm3177
    %v3180 = vsel %vm3178, 1, 0
    %v3181 = vsel %vm3179, 1, 0
    %v3182 = vcvt.s32.f32 %v3180
    %v3183 = vcvt.s32.f32 %v3181
    %v3184 = vsel %vm1393, %v3182, 0.0
    %3185 = vadd.xlane.f32.xlu0 %v3184
    %v3186 = vpop.xlane.xlu0 %3185
    %v3187 = vsel %vm1397, %v3183, 0.0
    %3188 = vadd.xlane.f32.xlu0 %v3187
    %v3189 = vpop.xlane.xlu0 %3188
    %vm3190 = vcmp.lt.f32.partialorder %v3186, 6.0
    %vm3191 = vcmp.lt.f32.partialorder %v3189, 6.0
    %v3192 = vsel %vm350, %v3114, 0.0
    %v3193 = vsel %vm354, %v3112, 0.0
    %v3194 = vadd.f32 %v3192, %v3193
    %v3195 = vrot.slane %v3194, 4
    %v3196 = vadd.f32 %v3194, %v3195
    %v3197 = vrot.slane %v3196, 2
    %v3198 = vadd.f32 %v3196, %v3197
    %v3199 = vrot.slane %v3198, 1
    %v3200 = vadd.f32 %v3198, %v3199
    %v3201 = vmul.f32 %v3135, 0.35355338
    %v3202 = vmul.f32 %v3137, 0.35355338
    %v3203 = vsel %vm1393, %v3201, -inf
    %3204 = vmax.xlane.f32.xlu0 %v3203
    %v3205 = vpop.xlane.xlu0 %3204
    %v3206 = vsel %vm1397, %v3202, -inf
    %3207 = vmax.xlane.f32.xlu0 %v3206
    %v3208 = vpop.xlane.xlu0 %3207
    %v3209 = vsub.f32 %v3201, %v3205
    %v3210 = vsub.f32 %v3202, %v3208
    %v3211 = vmul.f32 %v3209, 1.442695
    %v3212 = vpow.pop %v3211
    %v3213 = vmul.f32 %v3210, 1.442695
    %v3214 = vpow.pop %v3213
    %v3215 = vsel %vm1393, %v3212, 0.0
    %3216 = vadd.xlane.f32.xlu0 %v3215
    %v3217 = vpop.xlane.xlu0 %3216
    %v3218 = vsel %vm1397, %v3214, 0.0
    %3219 = vadd.xlane.f32.xlu0 %v3218
    %v3220 = vpop.xlane.xlu0 %3219
    %v3221 = vrcp.pop %v3217
    %v3222 = vmul.f32 %v3217, %v3221
    %v3223 = vsub.f32 1.0, %v3222
    %v3224 = vmul.f32 %v3221, %v3223
    %v3225 = vadd.f32 %v3221, %v3224
    %vm3226 = vweird.f32 %v3217
    %vm3227 = vweird.f32 %v3221
    %vm3228 = vmor %vm3226, %vm3227
    %v3229 = vsel %vm3228, %v3221, %v3225
    %v3230 = vand.u32 2147483647, %v3217
    %vm3231 = vcmp.eq.f32.partialorder %v3230, 8.507059e+37
    %v3232 = vand.u32 %v3217, 2147483648
    %v3233 = vor.u32 1.1754944e-38, %v3232
    %v3234 = vsel %vm3231, %v3233, %v3229
    %v3235 = vmul.f32 %v3212, %v3234
    %v3236 = vrcp.pop %v3220
    %v3237 = vmul.f32 %v3220, %v3236
    %v3238 = vsub.f32 1.0, %v3237
    %v3239 = vmul.f32 %v3236, %v3238
    %v3240 = vadd.f32 %v3236, %v3239
    %vm3241 = vweird.f32 %v3220
    %vm3242 = vweird.f32 %v3236
    %vm3243 = vmor %vm3241, %vm3242
    %v3244 = vsel %vm3243, %v3236, %v3240
    %v3245 = vand.u32 2147483647, %v3220
    %vm3246 = vcmp.eq.f32.partialorder %v3245, 8.507059e+37
    %v3247 = vand.u32 %v3220, 2147483648
    %v3248 = vor.u32 1.1754944e-38, %v3247
    %v3249 = vsel %vm3246, %v3248, %v3244
    %v3250 = vmul.f32 %v3214, %v3249
    %v3251 = vpack.c.bf16 %v3250, %v3235
    %3252 = vrot.lane.b32.xlu0 %v3115, 96
    %v3253 = vpop.permute.xlu0 %3252
    %v3255 = vsel %vm1393, %v3251, 0
    %v3258 = vsel %vm1365, %v3253, 0
    %3260 = vmatpush.bf16.msra.mxu0 0
    %3261 = vmatpush.bf16.msra.mxu0 0
    %3262 = vmatpush.bf16.msra.mxu0 0
    %3263 = vmatpush.bf16.msra.mxu0 0
    %3264 = vmatpush.bf16.msra.mxu0 0
    %3265 = vmatpush.bf16.msra.mxu0 0
    %3266 = vmatpush.bf16.msra.mxu0 0
    %3267 = vmatpush.bf16.msra.mxu0 %v3258
    %3268 = vmatmul.bf16.gmra.mxu0 %v3255
    %v3269 = vpop.f32.mrf.mxu0
    %v3270 = vadd.f32 0.0, %v3269
    %v3271 = vpop.f32.mrf.mxu0
    %v3272 = vadd.f32 0.0, %v3271
    %3273 = vdwg.mxu0
    %v3274 = vsel %vm3190, 1, 0
    %v3275 = vsel %vm3191, 1, 0
    %vm3276 = vcmp.eq.s32.totalorder %v3274, 1
    %vm3277 = vcmp.eq.s32.totalorder %v3275, 1
    %3279 = vrot.lane.b32.xlu0 %v3200, 96
    %v3280 = vpop.permute.xlu0 %3279
    %v3282 = vsel %vm3276, %v3270, %v3280
    %v3283 = vsel %vm3277, %v3272, %v3280
    %v3286 = vrot.slane %v3282, 5
    %v3287 = vrot.slane %v3283, 5
    %v3288 = vsel %vm1280, %v3286, %v3287
    %3289 = vrot.lane.b32.xlu0 %v3288, 8
    %v3290 = vpop.permute.xlu0 %3289
    %v3292 = vsel %vm231, %v3282, %v3290
    %v3294 = vrot.slane %v3105, 5
    %v3295 = vrot.slane %v3107, 5
    %v3296 = vsel %vm1280, %v3294, %v3295
    %3298 = vrot.lane.b32.xlu0 %v3105, 120
    %v3299 = vpop.permute.xlu0 %3298
    %3300 = vrot.lane.b32.xlu0 %v3107, 120
    %v3301 = vpop.permute.xlu0 %3300
    %v3304 = vsel %vm1365, %v3296, %v3299
    %v3305 = vpack.c.bf16 %v3301, %v3304
    %3307 = vrot.lane.b32.xlu0 %v3305, 112
    %v3308 = vpop.permute.xlu0 %3307
    %v3310 = vsel %vm231, %v3305, 0
    %v3313 = vsel %vm231, %v3308, 0
    %3315 = vmatpush.bf16.xpose.msra.mxu0 0
    %3316 = vmatpush.bf16.xpose.msra.mxu0 0
    %3317 = vmatpush.bf16.xpose.msra.mxu0 0
    %3318 = vmatpush.bf16.xpose.msra.mxu0 0
    %3319 = vmatpush.bf16.xpose.msra.mxu0 0
    %3320 = vmatpush.bf16.xpose.msra.mxu0 0
    %3321 = vmatpush.bf16.xpose.msra.mxu0 0
    %3322 = vmatpush.bf16.xpose.msra.mxu0 %v3313
    %3323 = vmatmul.bf16.gmra.mxu0 %v3310
    %v3324 = vpop.f32.mrf.mxu0
    %v3325 = vadd.f32 0.0, %v3324
    %v3326 = vpop.f32.mrf.mxu0
    %v3327 = vadd.f32 0.0, %v3326
    %3328 = vdwg.mxu0
    %v3329 = vmul.f32 %v3325, %v1358
    %v3330 = vmul.f32 %v3327, %v1359
    %v3331 = vsel %vm1393, %v3329, 0.0
    %3332 = vadd.xlane.f32.xlu0 %v3331
    %v3333 = vpop.xlane.xlu0 %3332
    %v3334 = vsel %vm1397, %v3330, 0.0
    %3335 = vadd.xlane.f32.xlu0 %v3334
    %v3336 = vpop.xlane.xlu0 %3335
    %v3337 = vsel %vm1401, %v3325, -inf
    %v3338 = vsel %vm1402, %v3327, -inf
    %v3339 = vsel %vm1393, %v3337, -inf
    %3340 = vmax.xlane.f32.xlu0 %v3339
    %v3341 = vpop.xlane.xlu0 %3340
    %v3342 = vsel %vm1397, %v3338, -inf
    %3343 = vmax.xlane.f32.xlu0 %v3342
    %v3344 = vpop.xlane.xlu0 %3343
    %v3345 = vmul.f32 %v3333, 0.1
    %v3346 = vmul.f32 %v3336, 0.1
    %v3347 = vsub.f32 %v3341, %v3345
    %v3348 = vsub.f32 %v3344, %v3346
    %v3349 = vmul.f32 %v207, %v3347
    %v3350 = vmul.f32 %v208, %v3348
    %v3351 = vsel %vm1393, %v3349, 0.0
    %v3352 = vsel %vm1397, %v3350, 0.0
    %v3353 = vadd.f32 %v3351, %v3352
    %v3354 = vrot.slane %v3353, 4
    %v3355 = vadd.f32 %v3353, %v3354
    %v3356 = vrot.slane %v3355, 2
    %v3357 = vadd.f32 %v3355, %v3356
    %v3358 = vrot.slane %v3357, 1
    %v3359 = vadd.f32 %v3357, %v3358
    %vm3360 = vcmp.gt.f32.partialorder %v3359, %v3347
    %vm3361 = vcmp.gt.f32.partialorder %v3359, %v3348
    %vm3362 = vmand %vm3360, %vm314
    %vm3363 = vmand %vm3361, %vm315
    %vm3364 = vcmp.eq.f32.partialorder %v3359, %v3347
    %vm3365 = vcmp.eq.f32.partialorder %v3359, %v3348
    %vm3366 = vmand %vm3364, %vm323
    %vm3367 = vmand %vm3365, %vm324
    %vm3368 = vmor %vm3362, %vm3366
    %vm3369 = vmor %vm3363, %vm3367
    %v3370 = vsel %vm3368, 1, 0
    %v3371 = vsel %vm3369, 1, 0
    %v3372 = vcvt.s32.f32 %v3370
    %v3373 = vcvt.s32.f32 %v3371
    %v3374 = vsel %vm1393, %v3372, 0.0
    %3375 = vadd.xlane.f32.xlu0 %v3374
    %v3376 = vpop.xlane.xlu0 %3375
    %v3377 = vsel %vm1397, %v3373, 0.0
    %3378 = vadd.xlane.f32.xlu0 %v3377
    %v3379 = vpop.xlane.xlu0 %3378
    %vm3380 = vcmp.lt.f32.partialorder %v3376, 6.0
    %vm3381 = vcmp.lt.f32.partialorder %v3379, 6.0
    %v3382 = vsel %vm350, %v3304, 0.0
    %v3383 = vsel %vm354, %v3301, 0.0
    %v3384 = vadd.f32 %v3382, %v3383
    %v3385 = vrot.slane %v3384, 4
    %v3386 = vadd.f32 %v3384, %v3385
    %v3387 = vrot.slane %v3386, 2
    %v3388 = vadd.f32 %v3386, %v3387
    %v3389 = vrot.slane %v3388, 1
    %v3390 = vadd.f32 %v3388, %v3389
    %v3391 = vmul.f32 %v3325, 0.35355338
    %v3392 = vmul.f32 %v3327, 0.35355338
    %v3393 = vsel %vm1393, %v3391, -inf
    %3394 = vmax.xlane.f32.xlu0 %v3393
    %v3395 = vpop.xlane.xlu0 %3394
    %v3396 = vsel %vm1397, %v3392, -inf
    %3397 = vmax.xlane.f32.xlu0 %v3396
    %v3398 = vpop.xlane.xlu0 %3397
    %v3399 = vsub.f32 %v3391, %v3395
    %v3400 = vsub.f32 %v3392, %v3398
    %v3401 = vmul.f32 %v3399, 1.442695
    %v3402 = vpow.pop %v3401
    %v3403 = vmul.f32 %v3400, 1.442695
    %v3404 = vpow.pop %v3403
    %v3405 = vsel %vm1393, %v3402, 0.0
    %3406 = vadd.xlane.f32.xlu0 %v3405
    %v3407 = vpop.xlane.xlu0 %3406
    %v3408 = vsel %vm1397, %v3404, 0.0
    %3409 = vadd.xlane.f32.xlu0 %v3408
    %v3410 = vpop.xlane.xlu0 %3409
    %v3411 = vrcp.pop %v3407
    %v3412 = vmul.f32 %v3407, %v3411
    %v3413 = vsub.f32 1.0, %v3412
    %v3414 = vmul.f32 %v3411, %v3413
    %v3415 = vadd.f32 %v3411, %v3414
    %vm3416 = vweird.f32 %v3407
    %vm3417 = vweird.f32 %v3411
    %vm3418 = vmor %vm3416, %vm3417
    %v3419 = vsel %vm3418, %v3411, %v3415
    %v3420 = vand.u32 2147483647, %v3407
    %vm3421 = vcmp.eq.f32.partialorder %v3420, 8.507059e+37
    %v3422 = vand.u32 %v3407, 2147483648
    %v3423 = vor.u32 1.1754944e-38, %v3422
    %v3424 = vsel %vm3421, %v3423, %v3419
    %v3425 = vmul.f32 %v3402, %v3424
    %v3426 = vrcp.pop %v3410
    %v3427 = vmul.f32 %v3410, %v3426
    %v3428 = vsub.f32 1.0, %v3427
    %v3429 = vmul.f32 %v3426, %v3428
    %v3430 = vadd.f32 %v3426, %v3429
    %vm3431 = vweird.f32 %v3410
    %vm3432 = vweird.f32 %v3426
    %vm3433 = vmor %vm3431, %vm3432
    %v3434 = vsel %vm3433, %v3426, %v3430
    %v3435 = vand.u32 2147483647, %v3410
    %vm3436 = vcmp.eq.f32.partialorder %v3435, 8.507059e+37
    %v3437 = vand.u32 %v3410, 2147483648
    %v3438 = vor.u32 1.1754944e-38, %v3437
    %v3439 = vsel %vm3436, %v3438, %v3434
    %v3440 = vmul.f32 %v3404, %v3439
    %v3441 = vpack.c.bf16 %v3440, %v3425
    %3442 = vrot.lane.b32.xlu0 %v3305, 96
    %v3443 = vpop.permute.xlu0 %3442
    %v3445 = vsel %vm1393, %v3441, 0
    %v3448 = vsel %vm1365, %v3443, 0
    %3450 = vmatpush.bf16.msra.mxu0 0
    %3451 = vmatpush.bf16.msra.mxu0 0
    %3452 = vmatpush.bf16.msra.mxu0 0
    %3453 = vmatpush.bf16.msra.mxu0 0
    %3454 = vmatpush.bf16.msra.mxu0 0
    %3455 = vmatpush.bf16.msra.mxu0 0
    %3456 = vmatpush.bf16.msra.mxu0 0
    %3457 = vmatpush.bf16.msra.mxu0 %v3448
    %3458 = vmatmul.bf16.gmra.mxu0 %v3445
    %v3459 = vpop.f32.mrf.mxu0
    %v3460 = vadd.f32 0.0, %v3459
    %v3461 = vpop.f32.mrf.mxu0
    %v3462 = vadd.f32 0.0, %v3461
    %3463 = vdwg.mxu0
    %v3464 = vsel %vm3380, 1, 0
    %v3465 = vsel %vm3381, 1, 0
    %vm3466 = vcmp.eq.s32.totalorder %v3464, 1
    %vm3467 = vcmp.eq.s32.totalorder %v3465, 1
    %3469 = vrot.lane.b32.xlu0 %v3390, 96
    %v3470 = vpop.permute.xlu0 %3469
    %v3472 = vsel %vm3466, %v3460, %v3470
    %v3473 = vsel %vm3467, %v3462, %v3470
    %v3476 = vrot.slane %v3472, 5
    %v3477 = vrot.slane %v3473, 5
    %v3478 = vsel %vm1280, %v3476, %v3477
    %3479 = vrot.lane.b32.xlu0 %v3478, 8
    %v3480 = vpop.permute.xlu0 %3479
    %v3482 = vsel %vm231, %v3472, %v3480
    %v3484 = vrot.slane %v3482, 3
    %v3486 = vsel %vm1365, %v3292, %v3484
    %v3487 = vpack.c.bf16 %v3484, %v3486
    %v3489 = vsel %vm169, %v3487, 0
    %3491 = vmatpush.bf16.msra.mxu0 0
    %3492 = vmatpush.bf16.msra.mxu0 0
    %3493 = vmatpush.bf16.msra.mxu0 0
    %3494 = vmatpush.bf16.msra.mxu0 0
    %3495 = vmatpush.bf16.msra.mxu0 0
    %3496 = vmatpush.bf16.msra.mxu0 0
    %3497 = vmatpush.bf16.msra.mxu0 0
    %3498 = vmatpush.bf16.msra.mxu0 %v1750
    %3499 = vmatmul.bf16.gmra.mxu0 %v3489
    %v3500 = vpop.f32.mrf.mxu0
    %v3501 = vadd.f32 0.0, %v3500
    %v3502 = vpop.f32.mrf.mxu0
    %v3503 = vadd.f32 0.0, %v3502
    %3504 = vdwg.mxu0
    %v3505 = vadd.f32 %v3086, %v3501
    %v3506 = vadd.f32 %v3089, %v3503
    %v3507 = vadd.f32 %v3505, %v1772
    %v3508 = vadd.f32 %v3506, %v1772
    %v3509 = vsel %vm169, %v3507, 0.0
    %3510 = vadd.xlane.f32.xlu0 %v3509
    %v3511 = vpop.xlane.xlu0 %3510
    %v3512 = vsel %vm831, %v3508, 0.0
    %3513 = vadd.xlane.f32.xlu0 %v3512
    %v3514 = vpop.xlane.xlu0 %3513
    %v3515 = vmul.f32 %v3511, %v841
    %v3516 = vmul.f32 %v3514, %v841
    %v3517 = vsub.f32 %v3507, %v3515
    %v3518 = vsub.f32 %v3508, %v3516
    %v3519 = vmul.f32 %v3517, %v3517
    %v3520 = vmul.f32 %v3518, %v3518
    %v3521 = vsel %vm169, %v3519, 0.0
    %3522 = vadd.xlane.f32.xlu0 %v3521
    %v3523 = vpop.xlane.xlu0 %3522
    %v3524 = vsel %vm831, %v3520, 0.0
    %3525 = vadd.xlane.f32.xlu0 %v3524
    %v3526 = vpop.xlane.xlu0 %3525
    %v3527 = vmul.f32 %v3523, %v841
    %v3528 = vmul.f32 %v3526, %v841
    %v3529 = vadd.f32 %v3527, 1e-05
    %v3530 = vadd.f32 %v3528, 1e-05
    %v3531 = vrsqrt.pop %v3529
    %v3532 = vmul.f32 %v3531, %v3529
    %v3533 = vmul.f32 %v3532, %v3531
    %v3534 = vmul.f32 0.5, %v3533
    %v3535 = vsub.f32 1.5, %v3534
    %v3536 = vmul.f32 %v3531, %v3535
    %vm3537 = vweird.f32 %v3529
    %vm3538 = vweird.f32 %v3531
    %vm3539 = vmor %vm3537, %vm3538
    %v3540 = vsel %vm3539, %v3531, %v3536
    %v3541 = vrsqrt.pop %v3530
    %v3542 = vmul.f32 %v3541, %v3530
    %v3543 = vmul.f32 %v3542, %v3541
    %v3544 = vmul.f32 0.5, %v3543
    %v3545 = vsub.f32 1.5, %v3544
    %v3546 = vmul.f32 %v3541, %v3545
    %vm3547 = vweird.f32 %v3530
    %vm3548 = vweird.f32 %v3541
    %vm3549 = vmor %vm3547, %vm3548
    %v3550 = vsel %vm3549, %v3541, %v3546
    %v3551 = vmul.f32 %v3517, %v3540
    %v3552 = vmul.f32 %v3518, %v3550
    %v3553 = vmul.f32 %v3551, %v1821
    %v3554 = vmul.f32 %v3552, %v1821
    %v3555 = vadd.f32 %v3553, %v1824
    %v3556 = vadd.f32 %v3554, %v1824
    %v3557 = vpack.c.bf16 %v3556, %v3555
    %v3559 = vsel %vm169, %v3557, 0
    %3561 = vmatpush.bf16.msra.mxu0 0
    %3562 = vmatpush.bf16.msra.mxu0 0
    %3563 = vmatpush.bf16.msra.mxu0 0
    %3564 = vmatpush.bf16.msra.mxu0 0
    %3565 = vmatpush.bf16.msra.mxu0 0
    %3566 = vmatpush.bf16.msra.mxu0 0
    %3567 = vmatpush.bf16.msra.mxu0 0
    %3568 = vmatpush.bf16.msra.mxu0 %v1836
    %3569 = vmatmul.bf16.gmra.mxu0 %v3559
    %v3570 = vpop.f32.mrf.mxu0
    %v3571 = vadd.f32 %v1831, %v3570
    %v3572 = vpop.f32.mrf.mxu0
    %v3573 = vadd.f32 %v1831, %v3572
    %3574 = vdwg.mxu0
    %v3575 = vmul.f32 %v3571, 0.5
    %v3576 = vmul.f32 %v3573, 0.5
    %v3577 = vmul.f32 %v3571, 0.044715
    %v3578 = vmul.f32 %v3573, 0.044715
    %v3579 = vmul.f32 %v3577, %v3571
    %v3580 = vmul.f32 %v3578, %v3573
    %v3581 = vmul.f32 %v3579, %v3571
    %v3582 = vmul.f32 %v3580, %v3573
    %v3583 = vadd.f32 %v3571, %v3581
    %v3584 = vadd.f32 %v3573, %v3582
    %v3585 = vmul.f32 %v3583, 0.7978846
    %v3586 = vmul.f32 %v3584, 0.7978846
    %v3587 = vtanh.pop %v3585
    %v3588 = vtanh.pop %v3586
    %v3589 = vadd.f32 %v3587, 1.0
    %v3590 = vadd.f32 %v3588, 1.0
    %v3591 = vmul.f32 %v3575, %v3589
    %v3592 = vmul.f32 %v3576, %v3590
    %v3593 = vpack.c.bf16 %v3592, %v3591
    %v3595 = vsel %vm990, %v3593, 0
    %3597 = vmatpush.bf16.msra.mxu0 0
    %3598 = vmatpush.bf16.msra.mxu0 0
    %3599 = vmatpush.bf16.msra.mxu0 0
    %3600 = vmatpush.bf16.msra.mxu0 0
    %3601 = vmatpush.bf16.msra.mxu0 0
    %3602 = vmatpush.bf16.msra.mxu0 0
    %3603 = vmatpush.bf16.msra.mxu0 %v1889
    %3604 = vmatpush.bf16.msra.mxu0 %v1888
    %3605 = vmatmul.bf16.gmra.mxu0 %v3595
    %v3606 = vpop.f32.mrf.mxu0
    %v3607 = vadd.f32 %v1879, %v3606
    %v3608 = vpop.f32.mrf.mxu0
    %v3609 = vadd.f32 %v1879, %v3608
    %3610 = vdwg.mxu0
    %v3611 = vadd.f32 %v3555, %v3607
    %v3612 = vadd.f32 %v3556, %v3609
    %v3613 = vsel %vm169, %v3611, 0.0
    %3614 = vadd.xlane.f32.xlu0 %v3613
    %v3615 = vpop.xlane.xlu0 %3614
    %v3616 = vsel %vm831, %v3612, 0.0
    %3617 = vadd.xlane.f32.xlu0 %v3616
    %v3618 = vpop.xlane.xlu0 %3617
    %v3619 = vmul.f32 %v3615, %v841
    %v3620 = vmul.f32 %v3618, %v841
    %v3621 = vsub.f32 %v3611, %v3619
    %v3622 = vsub.f32 %v3612, %v3620
    %v3623 = vmul.f32 %v3621, %v3621
    %v3624 = vmul.f32 %v3622, %v3622
    %v3625 = vsel %vm169, %v3623, 0.0
    %3626 = vadd.xlane.f32.xlu0 %v3625
    %v3627 = vpop.xlane.xlu0 %3626
    %v3628 = vsel %vm831, %v3624, 0.0
    %3629 = vadd.xlane.f32.xlu0 %v3628
    %v3630 = vpop.xlane.xlu0 %3629
    %v3631 = vmul.f32 %v3627, %v841
    %v3632 = vmul.f32 %v3630, %v841
    %v3633 = vadd.f32 %v3631, 1e-05
    %v3634 = vadd.f32 %v3632, 1e-05
    %v3635 = vrsqrt.pop %v3633
    %v3636 = vmul.f32 %v3635, %v3633
    %v3637 = vmul.f32 %v3636, %v3635
    %v3638 = vmul.f32 0.5, %v3637
    %v3639 = vsub.f32 1.5, %v3638
    %v3640 = vmul.f32 %v3635, %v3639
    %vm3641 = vweird.f32 %v3633
    %vm3642 = vweird.f32 %v3635
    %vm3643 = vmor %vm3641, %vm3642
    %v3644 = vsel %vm3643, %v3635, %v3640
    %v3645 = vrsqrt.pop %v3634
    %v3646 = vmul.f32 %v3645, %v3634
    %v3647 = vmul.f32 %v3646, %v3645
    %v3648 = vmul.f32 0.5, %v3647
    %v3649 = vsub.f32 1.5, %v3648
    %v3650 = vmul.f32 %v3645, %v3649
    %vm3651 = vweird.f32 %v3634
    %vm3652 = vweird.f32 %v3645
    %vm3653 = vmor %vm3651, %vm3652
    %v3654 = vsel %vm3653, %v3645, %v3650
    %v3655 = vmul.f32 %v3621, %v3644
    %v3656 = vmul.f32 %v3622, %v3654
    %v3657 = vmul.f32 %v3655, %v1957
    %v3658 = vmul.f32 %v3656, %v1957
    %v3659 = vadd.f32 %v3657, %v1960
    %v3660 = vadd.f32 %v3658, %v1960
    %v3661 = vsel %vm169, %v3659, 0.0
    %3662 = vadd.xlane.f32.xlu0 %v3661
    %v3663 = vpop.xlane.xlu0 %3662
    %v3664 = vsel %vm831, %v3660, 0.0
    %3665 = vadd.xlane.f32.xlu0 %v3664
    %v3666 = vpop.xlane.xlu0 %3665
    %v3667 = vmul.f32 %v3663, %v841
    %v3668 = vmul.f32 %v3666, %v841
    %v3669 = vsub.f32 %v3659, %v3667
    %v3670 = vsub.f32 %v3660, %v3668
    %v3671 = vmul.f32 %v3669, %v3669
    %v3672 = vmul.f32 %v3670, %v3670
    %v3673 = vsel %vm169, %v3671, 0.0
    %3674 = vadd.xlane.f32.xlu0 %v3673
    %v3675 = vpop.xlane.xlu0 %3674
    %v3676 = vsel %vm831, %v3672, 0.0
    %3677 = vadd.xlane.f32.xlu0 %v3676
    %v3678 = vpop.xlane.xlu0 %3677
    %v3679 = vmul.f32 %v3675, %v841
    %v3680 = vmul.f32 %v3678, %v841
    %v3681 = vadd.f32 %v3679, 1e-05
    %v3682 = vadd.f32 %v3680, 1e-05
    %v3683 = vrsqrt.pop %v3681
    %v3684 = vmul.f32 %v3683, %v3681
    %v3685 = vmul.f32 %v3684, %v3683
    %v3686 = vmul.f32 0.5, %v3685
    %v3687 = vsub.f32 1.5, %v3686
    %v3688 = vmul.f32 %v3683, %v3687
    %vm3689 = vweird.f32 %v3681
    %vm3690 = vweird.f32 %v3683
    %vm3691 = vmor %vm3689, %vm3690
    %v3692 = vsel %vm3691, %v3683, %v3688
    %v3693 = vrsqrt.pop %v3682
    %v3694 = vmul.f32 %v3693, %v3682
    %v3695 = vmul.f32 %v3694, %v3693
    %v3696 = vmul.f32 0.5, %v3695
    %v3697 = vsub.f32 1.5, %v3696
    %v3698 = vmul.f32 %v3693, %v3697
    %vm3699 = vweird.f32 %v3682
    %vm3700 = vweird.f32 %v3693
    %vm3701 = vmor %vm3699, %vm3700
    %v3702 = vsel %vm3701, %v3693, %v3698
    %v3703 = vmul.f32 %v3669, %v3692
    %v3704 = vmul.f32 %v3670, %v3702
    %v3705 = vmul.f32 %v3703, %v2009
    %v3706 = vmul.f32 %v3704, %v2009
    %v3707 = vadd.f32 %v3705, %v2012
    %v3708 = vadd.f32 %v3706, %v2012
    %v3709 = vld [vmem:[#allocation2 + $0xa8] sm:$0xf]
    %v3710 = vld [vmem:[#allocation2 + $0xac] sm:$0xf]
    %v3711 = vld [vmem:[#allocation2 + $0xb0] sm:$0xf]
    %v3712 = vld [vmem:[#allocation2 + $0xb4] sm:$0xf]
    %v3713 = vld [vmem:[#allocation2 + $0xa0] sm:$0xf]
    %v3714 = vld [vmem:[#allocation2 + $0xa4] sm:$0xf]
    %v3715 = vpack.c.bf16 %v2014, %v2013
    %v3716 = vld [vmem:[#allocation5 + $0xd0] sm:$0x1]
    %v3717 = vperm.slane %v3716, 0
    %v3720 = vunpack.c.l.b16 %v3713
    %v3721 = vunpack.c.l.b16 %v3714
    %v3722 = vpack.c.b16 %v3721, %v3720
    %v3725 = vsel %vm169, %v3715, 0
    %3727 = vmatpush.bf16.msra.mxu0 0
    %3728 = vmatpush.bf16.msra.mxu0 0
    %3729 = vmatpush.bf16.msra.mxu0 0
    %3730 = vmatpush.bf16.msra.mxu0 0
    %3731 = vmatpush.bf16.msra.mxu0 0
    %3732 = vmatpush.bf16.msra.mxu0 0
    %3733 = vmatpush.bf16.msra.mxu0 0
    %3734 = vmatpush.bf16.msra.mxu0 %v3722
    %3735 = vmatmul.bf16.gmra.mxu0 %v3725
    %v3736 = vpop.f32.mrf.mxu0
    %v3737 = vadd.f32 %v3717, %v3736
    %v3738 = vpop.f32.mrf.mxu0
    %v3739 = vadd.f32 %v3717, %v3738
    %3740 = vdwg.mxu0
    %v3741 = vpack.c.bf16 %v3708, %v3707
    %v3743 = vsel %vm169, %v3741, 0
    %3745 = vmatpush.bf16.msra.mxu0 0
    %3746 = vmatpush.bf16.msra.mxu0 0
    %3747 = vmatpush.bf16.msra.mxu0 0
    %3748 = vmatpush.bf16.msra.mxu0 0
    %3749 = vmatpush.bf16.msra.mxu0 0
    %3750 = vmatpush.bf16.msra.mxu0 0
    %3751 = vmatpush.bf16.msra.mxu0 0
    %3752 = vmatpush.bf16.msra.mxu0 %v3722
    %3753 = vmatmul.bf16.gmra.mxu0 %v3743
    %v3754 = vpop.f32.mrf.mxu0
    %v3755 = vadd.f32 %v3717, %v3754
    %v3756 = vpop.f32.mrf.mxu0
    %v3757 = vadd.f32 %v3717, %v3756
    %3758 = vdwg.mxu0
    %v3759 = vld [vmem:[%s1] sm:$0x3]
    %v3761 = vrot.slane %v3755, 7
    %v3763 = vsel %vm212, %v3737, %v3761
    %v3764 = vpack.c.bf16 %v3759, %v3759
    %v3769 = vunpack.c.l.b16 %v3709
    %v3770 = vunpack.c.l.b16 %v3710
    %v3771 = vunpack.c.l.b16 %v3711
    %v3772 = vunpack.c.l.b16 %v3712
    %v3773 = vpack.c.b16 %v3770, %v3769
    %v3774 = vpack.c.b16 %v3772, %v3771
    %v3778 = vsel %vm990, %v3764, 0
    %3780 = vmatpush.bf16.msra.mxu0 0
    %3781 = vmatpush.bf16.msra.mxu0 0
    %3782 = vmatpush.bf16.msra.mxu0 0
    %3783 = vmatpush.bf16.msra.mxu0 0
    %3784 = vmatpush.bf16.msra.mxu0 0
    %3785 = vmatpush.bf16.msra.mxu0 0
    %3786 = vmatpush.bf16.msra.mxu0 %v3774
    %3787 = vmatpush.bf16.msra.mxu0 %v3773
    %3788 = vmatmul.bf16.gmra.mxu0 %v3778
    %v3789 = vpop.f32.mrf.mxu0
    %v3790 = vadd.f32 0.0, %v3789
    %v3791 = vpop.f32.mrf.mxu0
    %3792 = vdwg.mxu0
    %v3793 = vadd.f32 %v3763, %v3790
    %v3794 = vtanh.pop %v3793
    %v3796 = vrot.slane %v3737, 1
    %v3798 = vsel %vm212, %v3796, %v3755
    %v3799 = vpack.c.bf16 %v3794, %v3794
    %v3801 = vsel %vm990, %v3799, 0
    %3803 = vmatpush.bf16.msra.mxu0 0
    %3804 = vmatpush.bf16.msra.mxu0 0
    %3805 = vmatpush.bf16.msra.mxu0 0
    %3806 = vmatpush.bf16.msra.mxu0 0
    %3807 = vmatpush.bf16.msra.mxu0 0
    %3808 = vmatpush.bf16.msra.mxu0 0
    %3809 = vmatpush.bf16.msra.mxu0 %v3774
    %3810 = vmatpush.bf16.msra.mxu0 %v3773
    %3811 = vmatmul.bf16.gmra.mxu0 %v3801
    %v3812 = vpop.f32.mrf.mxu0
    %v3813 = vadd.f32 0.0, %v3812
    %v3814 = vpop.f32.mrf.mxu0
    %3815 = vdwg.mxu0
    %v3816 = vadd.f32 %v3798, %v3813
    %v3817 = vtanh.pop %v3816
    %v3818 = vrot.slane %v3737, 2
    %v3820 = vrot.slane %v3755, 1
    %v3822 = vsel %vm212, %v3818, %v3820
    %v3823 = vpack.c.bf16 %v3817, %v3817
    %v3825 = vsel %vm990, %v3823, 0
    %3827 = vmatpush.bf16.msra.mxu0 0
    %3828 = vmatpush.bf16.msra.mxu0 0
    %3829 = vmatpush.bf16.msra.mxu0 0
    %3830 = vmatpush.bf16.msra.mxu0 0
    %3831 = vmatpush.bf16.msra.mxu0 0
    %3832 = vmatpush.bf16.msra.mxu0 0
    %3833 = vmatpush.bf16.msra.mxu0 %v3774
    %3834 = vmatpush.bf16.msra.mxu0 %v3773
    %3835 = vmatmul.bf16.gmra.mxu0 %v3825
    %v3836 = vpop.f32.mrf.mxu0
    %v3837 = vadd.f32 0.0, %v3836
    %v3838 = vpop.f32.mrf.mxu0
    %3839 = vdwg.mxu0
    %v3840 = vadd.f32 %v3822, %v3837
    %v3841 = vtanh.pop %v3840
    %v3842 = vrot.slane %v3737, 3
    %v3844 = vrot.slane %v3755, 2
    %v3846 = vsel %vm212, %v3842, %v3844
    %v3847 = vpack.c.bf16 %v3841, %v3841
    %v3849 = vsel %vm990, %v3847, 0
    %3851 = vmatpush.bf16.msra.mxu0 0
    %3852 = vmatpush.bf16.msra.mxu0 0
    %3853 = vmatpush.bf16.msra.mxu0 0
    %3854 = vmatpush.bf16.msra.mxu0 0
    %3855 = vmatpush.bf16.msra.mxu0 0
    %3856 = vmatpush.bf16.msra.mxu0 0
    %3857 = vmatpush.bf16.msra.mxu0 %v3774
    %3858 = vmatpush.bf16.msra.mxu0 %v3773
    %3859 = vmatmul.bf16.gmra.mxu0 %v3849
    %v3860 = vpop.f32.mrf.mxu0
    %v3861 = vadd.f32 0.0, %v3860
    %v3862 = vpop.f32.mrf.mxu0
    %3863 = vdwg.mxu0
    %v3864 = vadd.f32 %v3846, %v3861
    %v3865 = vtanh.pop %v3864
    %v3866 = vrot.slane %v3737, 4
    %v3868 = vrot.slane %v3755, 3
    %v3870 = vsel %vm212, %v3866, %v3868
    %v3871 = vpack.c.bf16 %v3865, %v3865
    %v3873 = vsel %vm990, %v3871, 0
    %3875 = vmatpush.bf16.msra.mxu0 0
    %3876 = vmatpush.bf16.msra.mxu0 0
    %3877 = vmatpush.bf16.msra.mxu0 0
    %3878 = vmatpush.bf16.msra.mxu0 0
    %3879 = vmatpush.bf16.msra.mxu0 0
    %3880 = vmatpush.bf16.msra.mxu0 0
    %3881 = vmatpush.bf16.msra.mxu0 %v3774
    %3882 = vmatpush.bf16.msra.mxu0 %v3773
    %3883 = vmatmul.bf16.gmra.mxu0 %v3873
    %v3884 = vpop.f32.mrf.mxu0
    %v3885 = vadd.f32 0.0, %v3884
    %v3886 = vpop.f32.mrf.mxu0
    %3887 = vdwg.mxu0
    %v3888 = vadd.f32 %v3870, %v3885
    %v3889 = vtanh.pop %v3888
    %v3890 = vrot.slane %v3737, 5
    %v3892 = vrot.slane %v3755, 4
    %v3894 = vsel %vm212, %v3890, %v3892
    %v3895 = vpack.c.bf16 %v3889, %v3889
    %v3897 = vsel %vm990, %v3895, 0
    %3899 = vmatpush.bf16.msra.mxu0 0
    %3900 = vmatpush.bf16.msra.mxu0 0
    %3901 = vmatpush.bf16.msra.mxu0 0
    %3902 = vmatpush.bf16.msra.mxu0 0
    %3903 = vmatpush.bf16.msra.mxu0 0
    %3904 = vmatpush.bf16.msra.mxu0 0
    %3905 = vmatpush.bf16.msra.mxu0 %v3774
    %3906 = vmatpush.bf16.msra.mxu0 %v3773
    %3907 = vmatmul.bf16.gmra.mxu0 %v3897
    %v3908 = vpop.f32.mrf.mxu0
    %v3909 = vadd.f32 0.0, %v3908
    %v3910 = vpop.f32.mrf.mxu0
    %3911 = vdwg.mxu0
    %v3912 = vadd.f32 %v3894, %v3909
    %v3913 = vtanh.pop %v3912
    %v3914 = vrot.slane %v3737, 6
    %v3916 = vrot.slane %v3755, 5
    %v3918 = vsel %vm212, %v3914, %v3916
    %v3919 = vpack.c.bf16 %v3913, %v3913
    %v3921 = vsel %vm990, %v3919, 0
    %3923 = vmatpush.bf16.msra.mxu0 0
    %3924 = vmatpush.bf16.msra.mxu0 0
    %3925 = vmatpush.bf16.msra.mxu0 0
    %3926 = vmatpush.bf16.msra.mxu0 0
    %3927 = vmatpush.bf16.msra.mxu0 0
    %3928 = vmatpush.bf16.msra.mxu0 0
    %3929 = vmatpush.bf16.msra.mxu0 %v3774
    %3930 = vmatpush.bf16.msra.mxu0 %v3773
    %3931 = vmatmul.bf16.gmra.mxu0 %v3921
    %v3932 = vpop.f32.mrf.mxu0
    %v3933 = vadd.f32 0.0, %v3932
    %v3934 = vpop.f32.mrf.mxu0
    %3935 = vdwg.mxu0
    %v3936 = vadd.f32 %v3918, %v3933
    %v3937 = vtanh.pop %v3936
    %v3938 = vrot.slane %v3737, 7
    %v3940 = vrot.slane %v3755, 6
    %v3942 = vsel %vm212, %v3938, %v3940
    %v3943 = vpack.c.bf16 %v3937, %v3937
    %v3945 = vsel %vm990, %v3943, 0
    %3947 = vmatpush.bf16.msra.mxu0 0
    %3948 = vmatpush.bf16.msra.mxu0 0
    %3949 = vmatpush.bf16.msra.mxu0 0
    %3950 = vmatpush.bf16.msra.mxu0 0
    %3951 = vmatpush.bf16.msra.mxu0 0
    %3952 = vmatpush.bf16.msra.mxu0 0
    %3953 = vmatpush.bf16.msra.mxu0 %v3774
    %3954 = vmatpush.bf16.msra.mxu0 %v3773
    %3955 = vmatmul.bf16.gmra.mxu0 %v3945
    %v3956 = vpop.f32.mrf.mxu0
    %v3957 = vadd.f32 0.0, %v3956
    %v3958 = vpop.f32.mrf.mxu0
    %3959 = vdwg.mxu0
    %v3960 = vadd.f32 %v3942, %v3957
    %v3961 = vtanh.pop %v3960
    %v3963 = vrot.slane %v3757, 7
    %v3965 = vsel %vm212, %v3739, %v3963
    %v3966 = vpack.c.bf16 %v3961, %v3961
    %v3968 = vsel %vm990, %v3966, 0
    %3970 = vmatpush.bf16.msra.mxu0 0
    %3971 = vmatpush.bf16.msra.mxu0 0
    %3972 = vmatpush.bf16.msra.mxu0 0
    %3973 = vmatpush.bf16.msra.mxu0 0
    %3974 = vmatpush.bf16.msra.mxu0 0
    %3975 = vmatpush.bf16.msra.mxu0 0
    %3976 = vmatpush.bf16.msra.mxu0 %v3774
    %3977 = vmatpush.bf16.msra.mxu0 %v3773
    %3978 = vmatmul.bf16.gmra.mxu0 %v3968
    %v3979 = vpop.f32.mrf.mxu0
    %v3980 = vadd.f32 0.0, %v3979
    %v3981 = vpop.f32.mrf.mxu0
    %3982 = vdwg.mxu0
    %v3983 = vadd.f32 %v3965, %v3980
    %v3984 = vtanh.pop %v3983
    %v3986 = vrot.slane %v3739, 1
    %v3988 = vsel %vm212, %v3986, %v3757
    %v3989 = vpack.c.bf16 %v3984, %v3984
    %v3991 = vsel %vm990, %v3989, 0
    %3993 = vmatpush.bf16.msra.mxu0 0
    %3994 = vmatpush.bf16.msra.mxu0 0
    %3995 = vmatpush.bf16.msra.mxu0 0
    %3996 = vmatpush.bf16.msra.mxu0 0
    %3997 = vmatpush.bf16.msra.mxu0 0
    %3998 = vmatpush.bf16.msra.mxu0 0
    %3999 = vmatpush.bf16.msra.mxu0 %v3774
    %4000 = vmatpush.bf16.msra.mxu0 %v3773
    %4001 = vmatmul.bf16.gmra.mxu0 %v3991
    %v4002 = vpop.f32.mrf.mxu0
    %v4003 = vadd.f32 0.0, %v4002
    %v4004 = vpop.f32.mrf.mxu0
    %4005 = vdwg.mxu0
    %v4006 = vadd.f32 %v3988, %v4003
    %v4007 = vtanh.pop %v4006
    %v4008 = vld [vmem:[#allocation2 + $0xb8] sm:$0xf]
    %v4009 = vld [vmem:[#allocation2 + $0xbc] sm:$0xf]
    %v4010 = vld [vmem:[#allocation2 + $0xc0] sm:$0xf]
    %v4011 = vld [vmem:[#allocation2 + $0xc4] sm:$0xf]
    %v4012 = vpack.c.bf16 %v4007, %v4007
    %v4013 = vld [vmem:[#allocation5 + $0xd8] sm:$0x1]
    %v4014 = vperm.slane %v4013, 0
    %v4019 = vunpack.c.l.b16 %v4008
    %v4020 = vunpack.c.l.b16 %v4009
    %v4021 = vunpack.c.l.b16 %v4010
    %v4022 = vunpack.c.l.b16 %v4011
    %v4023 = vpack.c.b16 %v4020, %v4019
    %v4024 = vpack.c.b16 %v4022, %v4021
    %v4028 = vsel %vm990, %v4012, 0
    %4030 = vmatpush.bf16.msra.mxu0 0
    %4031 = vmatpush.bf16.msra.mxu0 0
    %4032 = vmatpush.bf16.msra.mxu0 0
    %4033 = vmatpush.bf16.msra.mxu0 0
    %4034 = vmatpush.bf16.msra.mxu0 0
    %4035 = vmatpush.bf16.msra.mxu0 0
    %4036 = vmatpush.bf16.msra.mxu0 %v4024
    %4037 = vmatpush.bf16.msra.mxu0 %v4023
    %4038 = vmatmul.bf16.gmra.mxu0 %v4028
    %v4039 = vpop.f32.mrf.mxu0
    %v4040 = vadd.f32 %v4014, %v4039
    %v4041 = vpop.f32.mrf.mxu0
    %4042 = vdwg.mxu0
    %vm4043 = vcmask 9216
    %v4044 = vsel %vm4043, %v4040, -inf
    %4045 = vmax.xlane.f32.xlu0 %v4044
    %v4046 = vpop.xlane.xlu0 %4045
    %v4047 = vsub.f32 %v4040, %v4046
    %v4048 = vmul.f32 %v4047, 1.442695
    %v4049 = vpow.pop %v4048
    %v4050 = vsel %vm4043, %v4049, 0.0
    %4051 = vadd.xlane.f32.xlu0 %v4050
    %v4052 = vpop.xlane.xlu0 %4051
    %v4053 = vlog2.pop %v4052
    %v4054 = vmul.f32 %v4053, 0.6931472
    %v4055 = vadd.f32 %v4046, %v4054
    %v4056 = vsub.f32 %v4040, %v4055
    %4057 = vst.msk [vmem:[#allocation7] sm:$0x3] %vm4043, %v4056
    // Predicated region
    $region26: #{tpu_custom_call.1} parent=1 // pred_check
      _
    $region27: #{tpu_custom_call.1} parent=1 // pred_check_branch
      %4059 = sbr.rel (0) target = $region29
    $region28: #{tpu_custom_call.1} parent=1 // pred_region
      %4061 = vsyncadd [#allocation4], 0
      %s4063 = sshll.u32 [#allocation7], 4
      %s4064 = int_to_ptr.vmem [resolvable:$true] %s4063
      %s4065 = sshll.u32 %s4, 4
      %s4066 = int_to_ptr.hbm [resolvable:$true] %s4065
      %4068 = dma.vmem_to_hbm [thread:$0]  %s4064, 32, %s4066, [#allocation4]
    $region29: #{tpu_custom_call.1} parent=1 // pred_fallthru
      _
    // Predicated region
    $region30: #{tpu_custom_call.1} parent=1 // pred_check
      _
    $region31: #{tpu_custom_call.1} parent=1 // pred_check_branch
      %4070 = sbr.rel (0) target = $region33
    $region32: #{tpu_custom_call.1} parent=1 // pred_region
      %4072 = dma.done [#allocation4], 32
    $region33: #{tpu_custom_call.1} parent=1 // pred_fallthru
      _
    %4073 = vsyncpa [#allocation3], 1
    %4074 = vsyncpa [#allocation6], 1
    %4075 = vsyncpa [#allocation4], 1

</llo_original>
